<compile_context>
chip_gen: v7x
topology: tpu7x:2x2x1
jax: 0.10.0
libtpu: 0.0.40
codegen_flags: <defaults>
</compile_context>

<pallas_src>
import numpy as np
import jax
import jax.numpy as jnp
from jax.experimental import pallas as pl
from jax.experimental.pallas import tpu as pltpu

# ----------------- synthetic SMPL configuration (small shapes) -----------------
B = 2              # batch
N_VERTS = 1000     # vertices (real SMPL: 6890) -- NOT a tile multiple on purpose
N_JOINTS = 24
N_BETAS = 10
N_POSE = (N_JOINTS - 1) * 9   # 207 pose-blend features
TILE_V = 512                  # vertex tile (lane-dense, mult. of 128)

PARENTS = (-1, 0, 0, 0, 1, 2, 3, 4, 5, 6, 7, 8, 9, 9, 9, 12, 13, 14,
           16, 17, 18, 19, 20, 21)
HIGH = jax.lax.Precision.HIGHEST


# ------------------------------- Pallas kernel ---------------------------------
def _smpl_lbs_kernel(feat_ref, g12_ref, vt_ref, bd_ref, w_ref, off_ref,
                     verts_ref, vshaped_ref, vsp_ref):
    """One vertex tile: fused blend shapes + LBS skinning.

    feat_ref : (2B, Kp)       VMEM bf16 -- rows 0..B-1: [betas, lrotmin],
                                           rows B..2B-1: [betas, 0]
    g12_ref  : (B*12, 24)     VMEM f32  -- joint transforms (trans folded in),
                                           row index = 12*b + 4*c + d
    vt_ref   : (3, TV)        VMEM f32  -- v_template tile
    bd_ref   : (3, Kp, TV)    VMEM bf16 -- fused [shapedirs|posedirs] tile
    w_ref    : (24, TV)       VMEM f32  -- skinning weights tile
    off_ref  : (3, B, TV)     VMEM f32  -- personal offsets tile
    outputs (3, B, TV) f32: vertices, v_shaped, v_shaped_personal
    """
    feat = feat_ref[...]                     # (2B, Kp) bf16
    g12 = g12_ref[...]                       # (B*12, 24) f32
    w = w_ref[...]                           # (24, TV) f32
    vt = vt_ref[...]                         # (3, TV) f32
    b_sz = off_ref.shape[1]

    # Per-vertex 3x4 skinning transforms for ALL batches in one MXU push.
    # Tiny K=24 dot -> keep HIGHEST so f32 weights stay exact.
    t_all = jnp.dot(g12, w, precision=HIGH,
                    preferred_element_type=jnp.float32)          # (B*12, TV)

    # One fused blend-shape matmul per coordinate (bf16 in, f32 accumulate).
    vposed = []                              # per coordinate c: (B, TV)
    for c in range(3):
        blend = jnp.dot(feat, bd_ref[c],
                        preferred_element_type=jnp.float32)      # (2B, TV)
        both = blend[:b_sz]                  # shape + pose blend
        shp = blend[b_sz:]                   # shape blend only
        off_c = off_ref[c]                   # (B, TV)
        vt_c = vt[c][None, :]                # (1, TV)

        v_shaped_c = shp + vt_c
        vshaped_ref[c] = v_shaped_c
        vsp_ref[c] = v_shaped_c + off_c
        vposed.append(both + vt_c + off_c)   # v_posed = v_sp + pose blend

    # Per-vertex affine transform (translation column already includes trans).
    for c in range(3):
        rows = []
        for b in range(b_sz):
            base = 12 * b + 4 * c
            r = (t_all[base + 0] * vposed[0][b]
                 + t_all[base + 1] * vposed[1][b]
                 + t_all[base + 2] * vposed[2][b]
                 + t_all[base + 3])
            rows.append(r)
        verts_ref[c] = jnp.stack(rows, axis=0)                   # (B, TV)


# ------------------------------- plain-JAX glue ---------------------------------
def _rodrigues(r):
    """Axis-angle (M, 3) -> rotation matrices (M, 3, 3)."""
    eps = 1e-8
    theta = jnp.sqrt(jnp.sum(r * r, axis=-1, keepdims=True) + eps)      # (M, 1)
    k = r / theta
    ct = jnp.cos(theta)[:, :, None]
    st = jnp.sin(theta)[:, :, None]
    kx, ky, kz = k[:, 0], k[:, 1], k[:, 2]
    z = jnp.zeros_like(kx)
    K = jnp.stack([z, -kz, ky, kz, z, -kx, -ky, kx, z], axis=-1).reshape(-1, 3, 3)
    eye = jnp.eye(3, dtype=r.dtype)[None]
    outer = k[:, :, None] * k[:, None, :]
    return ct * eye + (1.0 - ct) * outer + st * K


def _rigid_transforms(R, J):
    """Kinematic chain.  R: (B, 24, 3, 3), J: (B, 24, 3) -> G: (B, 24, 4, 4)."""
    b = R.shape[0]
    bottom = jnp.tile(jnp.array([[[0.0, 0.0, 0.0, 1.0]]], dtype=R.dtype), (b, 1, 1))

    def make(rot, t):
        top = jnp.concatenate([rot, t[:, :, None]], axis=2)             # (B, 3, 4)
        return jnp.concatenate([top, bottom], axis=1)                   # (B, 4, 4)

    results = [make(R[:, 0], J[:, 0])]
    for i in range(1, N_JOINTS):
        p = PARENTS[i]
        results.append(results[p] @ make(R[:, i], J[:, i] - J[:, p]))
    stacked = jnp.stack(results, axis=1)                                # (B, 24, 4, 4)
    jh = jnp.concatenate([J, jnp.zeros((b, N_JOINTS, 1), R.dtype)], axis=2)[..., None]
    corr = stacked @ jh                                                 # (B, 24, 4, 1)
    pack = jnp.concatenate([jnp.zeros((b, N_JOINTS, 4, 3), R.dtype), corr], axis=3)
    return stacked - pack


def prepare_smpl_constants(params, tile_v=TILE_V):
    """One-time (model-init) layout work: transposes, K/vertex padding, bf16 cast."""
    v_template = params["v_template"]       # (N, 3)
    shapedirs = params["shapedirs"]         # (N, 3, 10)
    posedirs = params["posedirs"]           # (N, 3, 207)
    j_regressor = params["J_regressor"]     # (24, N)
    skin_w = params["weights"]              # (N, 24)

    n = v_template.shape[0]
    n_pad = ((n + tile_v - 1) // tile_v) * tile_v
    vpad = n_pad - n

    # Fused blend-shape directions, coordinate-major, K padded to a sublane
    # multiple, vertices padded to the tile multiple, stored in bf16.
    blend = jnp.concatenate([shapedirs, posedirs], axis=2)              # (N, 3, 217)
    k = blend.shape[2]
    k_pad = ((k + 7) // 8) * 8                                          # 224
    bd_t = jnp.transpose(blend, (1, 2, 0))                              # (3, 217, N)
    bd_t = jnp.pad(bd_t, ((0, 0), (0, k_pad - k), (0, vpad)))
    bd_t = bd_t.astype(jnp.bfloat16)                                    # (3, 224, Np)

    vt_t = jnp.pad(jnp.transpose(v_template, (1, 0)), ((0, 0), (0, vpad)))   # (3, Np)
    w_t = jnp.pad(jnp.transpose(skin_w, (1, 0)), ((0, 0), (0, vpad)))        # (24, Np)

    # Joint regressor folded through the shape blend (exact refactor):
    # J = Jr @ v_shaped = Jr@v_template + (Jr@shapedirs) . betas
    j_template = jnp.einsum('jn,nc->jc', j_regressor, v_template, precision=HIGH)
    j_shape = jnp.einsum('jn,nck->jck', j_regressor, shapedirs, precision=HIGH)

    consts = dict(bd_t=bd_t, vt_t=vt_t, w_t=w_t,
                  j_template=j_template, j_shape=j_shape,
                  n=int(n), n_pad=int(n_pad), k=int(k), k_pad=int(k_pad))
    return jax.tree.map(lambda x: x if isinstance(x, int) else jax.block_until_ready(x),
                        consts)


def make_forward(consts, tile_v=TILE_V):
    """Build the jitted forward with layout constants baked in."""
    bd_t, vt_t, w_t = consts["bd_t"], consts["vt_t"], consts["w_t"]
    j_template, j_shape = consts["j_template"], consts["j_shape"]
    n, n_pad, k, k_pad = consts["n"], consts["n_pad"], consts["k"], consts["k_pad"]

    @jax.jit
    def forward(betas, pose, trans, offsets):
        """Equivalent of smpl_tpose_layer.forward.

        Returns (vertices, v_shaped, v_shaped_personal, v_offsets), each (B, N, 3).
        """
        b = betas.shape[0]

        # --- O(num_joints) glue: rotations, joint regression, kinematic chain ---
        R = _rodrigues(pose.reshape(-1, 3)).reshape(b, N_JOINTS, 3, 3)
        lrotmin = (R[:, 1:] - jnp.eye(3, dtype=R.dtype)[None, None]).reshape(b, -1)
        J = j_template[None] + jnp.einsum('bk,jck->bjc', betas, j_shape, precision=HIGH)
        G = _rigid_transforms(R, J)                                     # (B, 24, 4, 4)

        # Fold global translation into every joint transform (weights sum to 1),
        # then flatten to (B*12, 24) with row index 12*b + 4*c + d.
        g34 = G[:, :, :3, :]                                            # (B, 24, 3, 4)
        g34 = g34.at[:, :, :, 3].add(trans[:, None, :])
        g12 = g34.reshape(b, N_JOINTS, 12)                              # (c,d)->4c+d
        g12_flat = jnp.transpose(g12, (0, 2, 1)).reshape(b * 12, N_JOINTS)

        # Blend features: rows 0..B-1 -> shape+pose blend, rows B..2B-1 -> shape only.
        feat_full = jnp.concatenate([betas, lrotmin], axis=1)           # (B, 217)
        feat_shape = jnp.concatenate([betas, jnp.zeros_like(lrotmin)], axis=1)
        feat = jnp.concatenate([feat_full, feat_shape], axis=0)         # (2B, 217)
        feat = jnp.pad(feat, ((0, 0), (0, k_pad - k))).astype(jnp.bfloat16)

        # Per-call batched input: (B, N, 3) -> (3, B, N_pad)
        off_t = jnp.pad(jnp.transpose(offsets, (2, 0, 1)),
                        ((0, 0), (0, 0), (0, n_pad - n)))

        out3 = jax.ShapeDtypeStruct((3, b, n_pad), jnp.float32)
        verts_t, vshaped_t, vsp_t = pl.pallas_call(
            _smpl_lbs_kernel,
            out_shape=(out3, out3, out3),
            grid=(n_pad // tile_v,),
            in_specs=[
                pl.BlockSpec((2 * b, k_pad), lambda v: (0, 0)),          # feat
                pl.BlockSpec((b * 12, N_JOINTS), lambda v: (0, 0)),      # g12
                pl.BlockSpec((3, tile_v), lambda v: (0, v)),             # v_template
                pl.BlockSpec((3, k_pad, tile_v), lambda v: (0, 0, v)),   # blenddirs
                pl.BlockSpec((N_JOINTS, tile_v), lambda v: (0, v)),      # weights
                pl.BlockSpec((3, b, tile_v), lambda v: (0, 0, v)),       # offsets
            ],
            out_specs=(
                pl.BlockSpec((3, b, tile_v), lambda v: (0, 0, v)),
                pl.BlockSpec((3, b, tile_v), lambda v: (0, 0, v)),
                pl.BlockSpec((3, b, tile_v), lambda v: (0, 0, v)),
            ),
            compiler_params=pltpu.CompilerParams(
                dimension_semantics=("parallel",)),
        )(feat, g12_flat, vt_t, bd_t, w_t, off_t)

        vertices = jnp.transpose(verts_t[:, :, :n], (1, 2, 0))          # (B, N, 3)
        v_shaped = jnp.transpose(vshaped_t[:, :, :n], (1, 2, 0))
        v_shaped_personal = jnp.transpose(vsp_t[:, :, :n], (1, 2, 0))
        return vertices, v_shaped, v_shaped_personal, offsets

    return forward


# ----------------------------- pure-JAX reference ------------------------------
def smpl_reference(betas, pose, trans, offsets, params):
    v_template = params["v_template"]
    shapedirs = params["shapedirs"]
    posedirs = params["posedirs"]
    j_regressor = params["J_regressor"]
    skin_w = params["weights"]
    b = betas.shape[0]
    n = v_template.shape[0]

    v_shaped = jnp.einsum('bk,nck->bnc', betas, shapedirs, precision=HIGH) + v_template[None]
    v_shaped_personal = v_shaped + offsets
    J = jnp.einsum('jn,bnc->bjc', j_regressor, v_shaped, precision=HIGH)
    R = _rodrigues(pose.reshape(-1, 3)).reshape(b, N_JOINTS, 3, 3)
    lrotmin = (R[:, 1:] - jnp.eye(3, dtype=R.dtype)[None, None]).reshape(b, -1)
    v_posed = v_shaped_personal + jnp.einsum('bp,ncp->bnc', lrotmin, posedirs, precision=HIGH)
    G = _rigid_transforms(R, J)
    T = jnp.einsum('nj,bjxy->bnxy', skin_w, G, precision=HIGH)
    rest = jnp.concatenate([v_posed, jnp.ones((b, n, 1), v_posed.dtype)], axis=2)
    v = jnp.einsum('bnxy,bny->bnx', T, rest, precision=HIGH)[:, :, :3]
    return v + trans[:, None, :], v_shaped, v_shaped_personal, offsets


# ------------------------------------ main --------------------------------------
if __name__ == "__main__":
    key = jax.random.PRNGKey(0)
    ks = jax.random.split(key, 10)

    # deterministic synthetic SMPL parameters (shapes mirror neutral_smpl.pkl)
    v_template = 0.5 * jax.random.normal(ks[0], (N_VERTS, 3), jnp.float32)
    shapedirs = 0.03 * jax.random.normal(ks[1], (N_VERTS, 3, N_BETAS), jnp.float32)
    posedirs = 0.01 * jax.random.normal(ks[2], (N_VERTS, 3, N_POSE), jnp.float32)
    jr = jnp.abs(jax.random.normal(ks[3], (N_JOINTS, N_VERTS), jnp.float32))
    j_regressor = jr / jnp.sum(jr, axis=1, keepdims=True)
    sw = jnp.abs(jax.random.normal(ks[4], (N_VERTS, N_JOINTS), jnp.float32)) ** 4
    weights = sw / jnp.sum(sw, axis=1, keepdims=True)
    params = dict(v_template=v_template, shapedirs=shapedirs, posedirs=posedirs,
                  J_regressor=j_regressor, weights=weights)

    # forward inputs
    betas = 0.5 * jax.random.normal(ks[5], (B, N_BETAS), jnp.float32)
    pose = 0.3 * jax.random.normal(ks[6], (B, N_JOINTS * 3), jnp.float32)  # axis-angle
    trans = jax.random.normal(ks[7], (B, 3), jnp.float32)
    offsets = 0.01 * jax.random.normal(ks[8], (B, N_VERTS, 3), jnp.float32)

    # one-time layout / padding / bf16 prep (hoisted out of the per-call path)
    consts = prepare_smpl_constants(params)
    smpl_tpose_forward = make_forward(consts)

    outs = smpl_tpose_forward(betas, pose, trans, offsets)
    outs = jax.block_until_ready(outs)

    refs = smpl_reference(betas, pose, trans, offsets, params)
    for o, r in zip(outs, refs):
        np.testing.assert_allclose(np.asarray(o), np.asarray(r), rtol=2e-3, atol=2e-3)

    print("KERNEL_OK")
</pallas_src>

<mosaic_0001>
module attributes {stable_mosaic.version = 11 : i64} {
  func.func @_smpl_lbs_kernel(%arg0: i32, %arg1: memref<4x224xbf16, #tpu.memory_space<vmem>>, %arg2: memref<24x24xf32, #tpu.memory_space<vmem>>, %arg3: memref<3x512xf32, #tpu.memory_space<vmem>>, %arg4: memref<3x224x512xbf16, #tpu.memory_space<vmem>>, %arg5: memref<24x512xf32, #tpu.memory_space<vmem>>, %arg6: memref<3x2x512xf32, #tpu.memory_space<vmem>>, %arg7: memref<3x2x512xf32, #tpu.memory_space<vmem>>, %arg8: memref<3x2x512xf32, #tpu.memory_space<vmem>>, %arg9: memref<3x2x512xf32, #tpu.memory_space<vmem>>) attributes {dimension_semantics = [#tpu.dimension_semantics<parallel>], iteration_bounds = array<i64: 2>, scalar_prefetch = 0 : i64, scratch_operands = 0 : i64, tpu.core_type = #tpu.core_type<tc>, window_params = [{pipeline_mode = #tpu.pipeline_mode<synchronous>, transform_indices = @transform_0, window_bounds = array<i64: 4, 224>}, {pipeline_mode = #tpu.pipeline_mode<synchronous>, transform_indices = @transform_1, window_bounds = array<i64: 24, 24>}, {transform_indices = @transform_2, window_bounds = array<i64: 3, 512>}, {transform_indices = @transform_3, window_bounds = array<i64: 3, 224, 512>}, {transform_indices = @transform_4, window_bounds = array<i64: 24, 512>}, {transform_indices = @transform_5, window_bounds = array<i64: 3, 2, 512>}, {transform_indices = @transform_6, window_bounds = array<i64: 3, 2, 512>}, {transform_indices = @transform_7, window_bounds = array<i64: 3, 2, 512>}, {transform_indices = @transform_8, window_bounds = array<i64: 3, 2, 512>}]} {
    %c0 = arith.constant 0 : index
    %c0_0 = arith.constant 0 : index
    %0 = vector.load %arg1[%c0, %c0_0] : memref<4x224xbf16, #tpu.memory_space<vmem>>, vector<4x224xbf16>
    %c0_1 = arith.constant 0 : index
    %c0_2 = arith.constant 0 : index
    %1 = vector.load %arg2[%c0_1, %c0_2] : memref<24x24xf32, #tpu.memory_space<vmem>>, vector<24x24xf32>
    %c0_3 = arith.constant 0 : index
    %c0_4 = arith.constant 0 : index
    %2 = vector.load %arg5[%c0_3, %c0_4] : memref<24x512xf32, #tpu.memory_space<vmem>>, vector<24x512xf32>
    %c0_5 = arith.constant 0 : index
    %c0_6 = arith.constant 0 : index
    %3 = vector.load %arg3[%c0_5, %c0_6] : memref<3x512xf32, #tpu.memory_space<vmem>>, vector<3x512xf32>
    %cst = arith.constant dense<0.000000e+00> : vector<24x512xf32>
    %4 = tpu.matmul %1, %2, %cst {dimension_numbers = #tpu.dot_dimension_numbers<[1], [0], [0], [1], [0, 0, 1, 1], [], []>, precision = #tpu.contract_precision<fp32>} : vector<24x24xf32>, vector<24x512xf32>, vector<24x512xf32> -> vector<24x512xf32>
    %c0_7 = arith.constant 0 : index
    %c0_8 = arith.constant 0 : index
    %c0_9 = arith.constant 0 : index
    %5 = vector.load %arg4[%c0_7, %c0_8, %c0_9] : memref<3x224x512xbf16, #tpu.memory_space<vmem>>, vector<1x224x512xbf16>
    %6 = vector.shape_cast %5 : vector<1x224x512xbf16> to vector<224x512xbf16>
    %cst_10 = arith.constant dense<0.000000e+00> : vector<4x512xf32>
    %7 = tpu.matmul %0, %6, %cst_10 {dimension_numbers = #tpu.dot_dimension_numbers<[1], [0], [0], [1], [0, 0, 1, 1], [], []>} : vector<4x224xbf16>, vector<224x512xbf16>, vector<4x512xf32> -> vector<4x512xf32>
    %8 = vector.extract_strided_slice %7 {offsets = [0, 0], sizes = [2, 512], strides = [1, 1]} : vector<4x512xf32> to vector<2x512xf32>
    %9 = vector.extract_strided_slice %7 {offsets = [2, 0], sizes = [2, 512], strides = [1, 1]} : vector<4x512xf32> to vector<2x512xf32>
    %c0_11 = arith.constant 0 : index
    %c0_12 = arith.constant 0 : index
    %c0_13 = arith.constant 0 : index
    %10 = vector.load %arg6[%c0_11, %c0_12, %c0_13] : memref<3x2x512xf32, #tpu.memory_space<vmem>>, vector<1x2x512xf32>
    %11 = vector.shape_cast %10 : vector<1x2x512xf32> to vector<2x512xf32>
    %12 = vector.extract_strided_slice %3 {offsets = [0, 0], sizes = [1, 512], strides = [1, 1]} : vector<3x512xf32> to vector<1x512xf32>
    %13 = vector.shape_cast %12 : vector<1x512xf32> to vector<512xf32>
    %14 = vector.shape_cast %13 : vector<512xf32> to vector<1x512xf32>
    %15 = vector.broadcast %14 : vector<1x512xf32> to vector<2x512xf32>
    %16 = arith.addf %9, %15 : vector<2x512xf32>
    %c0_14 = arith.constant 0 : index
    %c0_15 = arith.constant 0 : index
    %c0_16 = arith.constant 0 : index
    %17 = vector.load %arg8[%c0_14, %c0_15, %c0_16] : memref<3x2x512xf32, #tpu.memory_space<vmem>>, vector<1x2x512xf32>
    %18 = vector.shape_cast %17 : vector<1x2x512xf32> to vector<2x512xf32>
    %19 = vector.shape_cast %16 : vector<2x512xf32> to vector<1x2x512xf32>
    tpu.vector_store %arg8[%c0_14, %c0_15, %c0_16], %19 {strides = array<i32>} : memref<3x2x512xf32, #tpu.memory_space<vmem>>, vector<1x2x512xf32>,
    %20 = arith.addf %16, %11 : vector<2x512xf32>
    %c0_17 = arith.constant 0 : index
    %c0_18 = arith.constant 0 : index
    %c0_19 = arith.constant 0 : index
    %21 = vector.load %arg9[%c0_17, %c0_18, %c0_19] : memref<3x2x512xf32, #tpu.memory_space<vmem>>, vector<1x2x512xf32>
    %22 = vector.shape_cast %21 : vector<1x2x512xf32> to vector<2x512xf32>
    %23 = vector.shape_cast %20 : vector<2x512xf32> to vector<1x2x512xf32>
    tpu.vector_store %arg9[%c0_17, %c0_18, %c0_19], %23 {strides = array<i32>} : memref<3x2x512xf32, #tpu.memory_space<vmem>>, vector<1x2x512xf32>,
    %24 = vector.broadcast %14 : vector<1x512xf32> to vector<2x512xf32>
    %25 = arith.addf %8, %24 : vector<2x512xf32>
    %26 = arith.addf %25, %11 : vector<2x512xf32>
    %c1 = arith.constant 1 : index
    %c0_20 = arith.constant 0 : index
    %c0_21 = arith.constant 0 : index
    %27 = vector.load %arg4[%c1, %c0_20, %c0_21] : memref<3x224x512xbf16, #tpu.memory_space<vmem>>, vector<1x224x512xbf16>
    %28 = vector.shape_cast %27 : vector<1x224x512xbf16> to vector<224x512xbf16>
    %cst_22 = arith.constant dense<0.000000e+00> : vector<4x512xf32>
    %29 = tpu.matmul %0, %28, %cst_22 {dimension_numbers = #tpu.dot_dimension_numbers<[1], [0], [0], [1], [0, 0, 1, 1], [], []>} : vector<4x224xbf16>, vector<224x512xbf16>, vector<4x512xf32> -> vector<4x512xf32>
    %30 = vector.extract_strided_slice %29 {offsets = [0, 0], sizes = [2, 512], strides = [1, 1]} : vector<4x512xf32> to vector<2x512xf32>
    %31 = vector.extract_strided_slice %29 {offsets = [2, 0], sizes = [2, 512], strides = [1, 1]} : vector<4x512xf32> to vector<2x512xf32>
    %c1_23 = arith.constant 1 : index
    %c0_24 = arith.constant 0 : index
    %c0_25 = arith.constant 0 : index
    %32 = vector.load %arg6[%c1_23, %c0_24, %c0_25] : memref<3x2x512xf32, #tpu.memory_space<vmem>>, vector<1x2x512xf32>
    %33 = vector.shape_cast %32 : vector<1x2x512xf32> to vector<2x512xf32>
    %34 = vector.extract_strided_slice %3 {offsets = [1, 0], sizes = [1, 512], strides = [1, 1]} : vector<3x512xf32> to vector<1x512xf32>
    %35 = vector.shape_cast %34 : vector<1x512xf32> to vector<512xf32>
    %36 = vector.shape_cast %35 : vector<512xf32> to vector<1x512xf32>
    %37 = vector.broadcast %36 : vector<1x512xf32> to vector<2x512xf32>
    %38 = arith.addf %31, %37 : vector<2x512xf32>
    %c1_26 = arith.constant 1 : index
    %c0_27 = arith.constant 0 : index
    %c0_28 = arith.constant 0 : index
    %39 = vector.load %arg8[%c1_26, %c0_27, %c0_28] : memref<3x2x512xf32, #tpu.memory_space<vmem>>, vector<1x2x512xf32>
    %40 = vector.shape_cast %39 : vector<1x2x512xf32> to vector<2x512xf32>
    %41 = vector.shape_cast %38 : vector<2x512xf32> to vector<1x2x512xf32>
    tpu.vector_store %arg8[%c1_26, %c0_27, %c0_28], %41 {strides = array<i32>} : memref<3x2x512xf32, #tpu.memory_space<vmem>>, vector<1x2x512xf32>,
    %42 = arith.addf %38, %33 : vector<2x512xf32>
    %c1_29 = arith.constant 1 : index
    %c0_30 = arith.constant 0 : index
    %c0_31 = arith.constant 0 : index
    %43 = vector.load %arg9[%c1_29, %c0_30, %c0_31] : memref<3x2x512xf32, #tpu.memory_space<vmem>>, vector<1x2x512xf32>
    %44 = vector.shape_cast %43 : vector<1x2x512xf32> to vector<2x512xf32>
    %45 = vector.shape_cast %42 : vector<2x512xf32> to vector<1x2x512xf32>
    tpu.vector_store %arg9[%c1_29, %c0_30, %c0_31], %45 {strides = array<i32>} : memref<3x2x512xf32, #tpu.memory_space<vmem>>, vector<1x2x512xf32>,
    %46 = vector.broadcast %36 : vector<1x512xf32> to vector<2x512xf32>
    %47 = arith.addf %30, %46 : vector<2x512xf32>
    %48 = arith.addf %47, %33 : vector<2x512xf32>
    %c2 = arith.constant 2 : index
    %c0_32 = arith.constant 0 : index
    %c0_33 = arith.constant 0 : index
    %49 = vector.load %arg4[%c2, %c0_32, %c0_33] : memref<3x224x512xbf16, #tpu.memory_space<vmem>>, vector<1x224x512xbf16>
    %50 = vector.shape_cast %49 : vector<1x224x512xbf16> to vector<224x512xbf16>
    %cst_34 = arith.constant dense<0.000000e+00> : vector<4x512xf32>
    %51 = tpu.matmul %0, %50, %cst_34 {dimension_numbers = #tpu.dot_dimension_numbers<[1], [0], [0], [1], [0, 0, 1, 1], [], []>} : vector<4x224xbf16>, vector<224x512xbf16>, vector<4x512xf32> -> vector<4x512xf32>
    %52 = vector.extract_strided_slice %51 {offsets = [0, 0], sizes = [2, 512], strides = [1, 1]} : vector<4x512xf32> to vector<2x512xf32>
    %53 = vector.extract_strided_slice %51 {offsets = [2, 0], sizes = [2, 512], strides = [1, 1]} : vector<4x512xf32> to vector<2x512xf32>
    %c2_35 = arith.constant 2 : index
    %c0_36 = arith.constant 0 : index
    %c0_37 = arith.constant 0 : index
    %54 = vector.load %arg6[%c2_35, %c0_36, %c0_37] : memref<3x2x512xf32, #tpu.memory_space<vmem>>, vector<1x2x512xf32>
    %55 = vector.shape_cast %54 : vector<1x2x512xf32> to vector<2x512xf32>
    %56 = vector.extract_strided_slice %3 {offsets = [2, 0], sizes = [1, 512], strides = [1, 1]} : vector<3x512xf32> to vector<1x512xf32>
    %57 = vector.shape_cast %56 : vector<1x512xf32> to vector<512xf32>
    %58 = vector.shape_cast %57 : vector<512xf32> to vector<1x512xf32>
    %59 = vector.broadcast %58 : vector<1x512xf32> to vector<2x512xf32>
    %60 = arith.addf %53, %59 : vector<2x512xf32>
    %c2_38 = arith.constant 2 : index
    %c0_39 = arith.constant 0 : index
    %c0_40 = arith.constant 0 : index
    %61 = vector.load %arg8[%c2_38, %c0_39, %c0_40] : memref<3x2x512xf32, #tpu.memory_space<vmem>>, vector<1x2x512xf32>
    %62 = vector.shape_cast %61 : vector<1x2x512xf32> to vector<2x512xf32>
    %63 = vector.shape_cast %60 : vector<2x512xf32> to vector<1x2x512xf32>
    tpu.vector_store %arg8[%c2_38, %c0_39, %c0_40], %63 {strides = array<i32>} : memref<3x2x512xf32, #tpu.memory_space<vmem>>, vector<1x2x512xf32>,
    %64 = arith.addf %60, %55 : vector<2x512xf32>
    %c2_41 = arith.constant 2 : index
    %c0_42 = arith.constant 0 : index
    %c0_43 = arith.constant 0 : index
    %65 = vector.load %arg9[%c2_41, %c0_42, %c0_43] : memref<3x2x512xf32, #tpu.memory_space<vmem>>, vector<1x2x512xf32>
    %66 = vector.shape_cast %65 : vector<1x2x512xf32> to vector<2x512xf32>
    %67 = vector.shape_cast %64 : vector<2x512xf32> to vector<1x2x512xf32>
    tpu.vector_store %arg9[%c2_41, %c0_42, %c0_43], %67 {strides = array<i32>} : memref<3x2x512xf32, #tpu.memory_space<vmem>>, vector<1x2x512xf32>,
    %68 = vector.broadcast %58 : vector<1x512xf32> to vector<2x512xf32>
    %69 = arith.addf %52, %68 : vector<2x512xf32>
    %70 = arith.addf %69, %55 : vector<2x512xf32>
    %71 = vector.extract_strided_slice %4 {offsets = [0, 0], sizes = [1, 512], strides = [1, 1]} : vector<24x512xf32> to vector<1x512xf32>
    %72 = vector.shape_cast %71 : vector<1x512xf32> to vector<512xf32>
    %73 = vector.extract_strided_slice %26 {offsets = [0, 0], sizes = [1, 512], strides = [1, 1]} : vector<2x512xf32> to vector<1x512xf32>
    %74 = vector.shape_cast %73 : vector<1x512xf32> to vector<512xf32>
    %75 = arith.mulf %72, %74 : vector<512xf32>
    %76 = vector.extract_strided_slice %4 {offsets = [1, 0], sizes = [1, 512], strides = [1, 1]} : vector<24x512xf32> to vector<1x512xf32>
    %77 = vector.shape_cast %76 : vector<1x512xf32> to vector<512xf32>
    %78 = vector.extract_strided_slice %48 {offsets = [0, 0], sizes = [1, 512], strides = [1, 1]} : vector<2x512xf32> to vector<1x512xf32>
    %79 = vector.shape_cast %78 : vector<1x512xf32> to vector<512xf32>
    %80 = arith.mulf %77, %79 : vector<512xf32>
    %81 = arith.addf %75, %80 : vector<512xf32>
    %82 = vector.extract_strided_slice %4 {offsets = [2, 0], sizes = [1, 512], strides = [1, 1]} : vector<24x512xf32> to vector<1x512xf32>
    %83 = vector.shape_cast %82 : vector<1x512xf32> to vector<512xf32>
    %84 = vector.extract_strided_slice %70 {offsets = [0, 0], sizes = [1, 512], strides = [1, 1]} : vector<2x512xf32> to vector<1x512xf32>
    %85 = vector.shape_cast %84 : vector<1x512xf32> to vector<512xf32>
    %86 = arith.mulf %83, %85 : vector<512xf32>
    %87 = arith.addf %81, %86 : vector<512xf32>
    %88 = vector.extract_strided_slice %4 {offsets = [3, 0], sizes = [1, 512], strides = [1, 1]} : vector<24x512xf32> to vector<1x512xf32>
    %89 = vector.shape_cast %88 : vector<1x512xf32> to vector<512xf32>
    %90 = arith.addf %87, %89 : vector<512xf32>
    %91 = vector.extract_strided_slice %4 {offsets = [12, 0], sizes = [1, 512], strides = [1, 1]} : vector<24x512xf32> to vector<1x512xf32>
    %92 = vector.shape_cast %91 : vector<1x512xf32> to vector<512xf32>
    %93 = vector.extract_strided_slice %26 {offsets = [1, 0], sizes = [1, 512], strides = [1, 1]} : vector<2x512xf32> to vector<1x512xf32>
    %94 = vector.shape_cast %93 : vector<1x512xf32> to vector<512xf32>
    %95 = arith.mulf %92, %94 : vector<512xf32>
    %96 = vector.extract_strided_slice %4 {offsets = [13, 0], sizes = [1, 512], strides = [1, 1]} : vector<24x512xf32> to vector<1x512xf32>
    %97 = vector.shape_cast %96 : vector<1x512xf32> to vector<512xf32>
    %98 = vector.extract_strided_slice %48 {offsets = [1, 0], sizes = [1, 512], strides = [1, 1]} : vector<2x512xf32> to vector<1x512xf32>
    %99 = vector.shape_cast %98 : vector<1x512xf32> to vector<512xf32>
    %100 = arith.mulf %97, %99 : vector<512xf32>
    %101 = arith.addf %95, %100 : vector<512xf32>
    %102 = vector.extract_strided_slice %4 {offsets = [14, 0], sizes = [1, 512], strides = [1, 1]} : vector<24x512xf32> to vector<1x512xf32>
    %103 = vector.shape_cast %102 : vector<1x512xf32> to vector<512xf32>
    %104 = vector.extract_strided_slice %70 {offsets = [1, 0], sizes = [1, 512], strides = [1, 1]} : vector<2x512xf32> to vector<1x512xf32>
    %105 = vector.shape_cast %104 : vector<1x512xf32> to vector<512xf32>
    %106 = arith.mulf %103, %105 : vector<512xf32>
    %107 = arith.addf %101, %106 : vector<512xf32>
    %108 = vector.extract_strided_slice %4 {offsets = [15, 0], sizes = [1, 512], strides = [1, 1]} : vector<24x512xf32> to vector<1x512xf32>
    %109 = vector.shape_cast %108 : vector<1x512xf32> to vector<512xf32>
    %110 = arith.addf %107, %109 : vector<512xf32>
    %111 = vector.shape_cast %90 : vector<512xf32> to vector<1x512xf32>
    %112 = vector.shape_cast %110 : vector<512xf32> to vector<1x512xf32>
    %113 = tpu.concatenate %111, %112 in 0 : vector<1x512xf32>, vector<1x512xf32> -> vector<2x512xf32>
    %c0_44 = arith.constant 0 : index
    %c0_45 = arith.constant 0 : index
    %c0_46 = arith.constant 0 : index
    %114 = vector.load %arg7[%c0_44, %c0_45, %c0_46] : memref<3x2x512xf32, #tpu.memory_space<vmem>>, vector<1x2x512xf32>
    %115 = vector.shape_cast %114 : vector<1x2x512xf32> to vector<2x512xf32>
    %116 = vector.shape_cast %113 : vector<2x512xf32> to vector<1x2x512xf32>
    tpu.vector_store %arg7[%c0_44, %c0_45, %c0_46], %116 {strides = array<i32>} : memref<3x2x512xf32, #tpu.memory_space<vmem>>, vector<1x2x512xf32>,
    %117 = vector.extract_strided_slice %4 {offsets = [4, 0], sizes = [1, 512], strides = [1, 1]} : vector<24x512xf32> to vector<1x512xf32>
    %118 = vector.shape_cast %117 : vector<1x512xf32> to vector<512xf32>
    %119 = vector.extract_strided_slice %26 {offsets = [0, 0], sizes = [1, 512], strides = [1, 1]} : vector<2x512xf32> to vector<1x512xf32>
    %120 = vector.shape_cast %119 : vector<1x512xf32> to vector<512xf32>
    %121 = arith.mulf %118, %120 : vector<512xf32>
    %122 = vector.extract_strided_slice %4 {offsets = [5, 0], sizes = [1, 512], strides = [1, 1]} : vector<24x512xf32> to vector<1x512xf32>
    %123 = vector.shape_cast %122 : vector<1x512xf32> to vector<512xf32>
    %124 = vector.extract_strided_slice %48 {offsets = [0, 0], sizes = [1, 512], strides = [1, 1]} : vector<2x512xf32> to vector<1x512xf32>
    %125 = vector.shape_cast %124 : vector<1x512xf32> to vector<512xf32>
    %126 = arith.mulf %123, %125 : vector<512xf32>
    %127 = arith.addf %121, %126 : vector<512xf32>
    %128 = vector.extract_strided_slice %4 {offsets = [6, 0], sizes = [1, 512], strides = [1, 1]} : vector<24x512xf32> to vector<1x512xf32>
    %129 = vector.shape_cast %128 : vector<1x512xf32> to vector<512xf32>
    %130 = vector.extract_strided_slice %70 {offsets = [0, 0], sizes = [1, 512], strides = [1, 1]} : vector<2x512xf32> to vector<1x512xf32>
    %131 = vector.shape_cast %130 : vector<1x512xf32> to vector<512xf32>
    %132 = arith.mulf %129, %131 : vector<512xf32>
    %133 = arith.addf %127, %132 : vector<512xf32>
    %134 = vector.extract_strided_slice %4 {offsets = [7, 0], sizes = [1, 512], strides = [1, 1]} : vector<24x512xf32> to vector<1x512xf32>
    %135 = vector.shape_cast %134 : vector<1x512xf32> to vector<512xf32>
    %136 = arith.addf %133, %135 : vector<512xf32>
    %137 = vector.extract_strided_slice %4 {offsets = [16, 0], sizes = [1, 512], strides = [1, 1]} : vector<24x512xf32> to vector<1x512xf32>
    %138 = vector.shape_cast %137 : vector<1x512xf32> to vector<512xf32>
    %139 = vector.extract_strided_slice %26 {offsets = [1, 0], sizes = [1, 512], strides = [1, 1]} : vector<2x512xf32> to vector<1x512xf32>
    %140 = vector.shape_cast %139 : vector<1x512xf32> to vector<512xf32>
    %141 = arith.mulf %138, %140 : vector<512xf32>
    %142 = vector.extract_strided_slice %4 {offsets = [17, 0], sizes = [1, 512], strides = [1, 1]} : vector<24x512xf32> to vector<1x512xf32>
    %143 = vector.shape_cast %142 : vector<1x512xf32> to vector<512xf32>
    %144 = vector.extract_strided_slice %48 {offsets = [1, 0], sizes = [1, 512], strides = [1, 1]} : vector<2x512xf32> to vector<1x512xf32>
    %145 = vector.shape_cast %144 : vector<1x512xf32> to vector<512xf32>
    %146 = arith.mulf %143, %145 : vector<512xf32>
    %147 = arith.addf %141, %146 : vector<512xf32>
    %148 = vector.extract_strided_slice %4 {offsets = [18, 0], sizes = [1, 512], strides = [1, 1]} : vector<24x512xf32> to vector<1x512xf32>
    %149 = vector.shape_cast %148 : vector<1x512xf32> to vector<512xf32>
    %150 = vector.extract_strided_slice %70 {offsets = [1, 0], sizes = [1, 512], strides = [1, 1]} : vector<2x512xf32> to vector<1x512xf32>
    %151 = vector.shape_cast %150 : vector<1x512xf32> to vector<512xf32>
    %152 = arith.mulf %149, %151 : vector<512xf32>
    %153 = arith.addf %147, %152 : vector<512xf32>
    %154 = vector.extract_strided_slice %4 {offsets = [19, 0], sizes = [1, 512], strides = [1, 1]} : vector<24x512xf32> to vector<1x512xf32>
    %155 = vector.shape_cast %154 : vector<1x512xf32> to vector<512xf32>
    %156 = arith.addf %153, %155 : vector<512xf32>
    %157 = vector.shape_cast %136 : vector<512xf32> to vector<1x512xf32>
    %158 = vector.shape_cast %156 : vector<512xf32> to vector<1x512xf32>
    %159 = tpu.concatenate %157, %158 in 0 : vector<1x512xf32>, vector<1x512xf32> -> vector<2x512xf32>
    %c1_47 = arith.constant 1 : index
    %c0_48 = arith.constant 0 : index
    %c0_49 = arith.constant 0 : index
    %160 = vector.load %arg7[%c1_47, %c0_48, %c0_49] : memref<3x2x512xf32, #tpu.memory_space<vmem>>, vector<1x2x512xf32>
    %161 = vector.shape_cast %160 : vector<1x2x512xf32> to vector<2x512xf32>
    %162 = vector.shape_cast %159 : vector<2x512xf32> to vector<1x2x512xf32>
    tpu.vector_store %arg7[%c1_47, %c0_48, %c0_49], %162 {strides = array<i32>} : memref<3x2x512xf32, #tpu.memory_space<vmem>>, vector<1x2x512xf32>,
    %163 = vector.extract_strided_slice %4 {offsets = [8, 0], sizes = [1, 512], strides = [1, 1]} : vector<24x512xf32> to vector<1x512xf32>
    %164 = vector.shape_cast %163 : vector<1x512xf32> to vector<512xf32>
    %165 = vector.extract_strided_slice %26 {offsets = [0, 0], sizes = [1, 512], strides = [1, 1]} : vector<2x512xf32> to vector<1x512xf32>
    %166 = vector.shape_cast %165 : vector<1x512xf32> to vector<512xf32>
    %167 = arith.mulf %164, %166 : vector<512xf32>
    %168 = vector.extract_strided_slice %4 {offsets = [9, 0], sizes = [1, 512], strides = [1, 1]} : vector<24x512xf32> to vector<1x512xf32>
    %169 = vector.shape_cast %168 : vector<1x512xf32> to vector<512xf32>
    %170 = vector.extract_strided_slice %48 {offsets = [0, 0], sizes = [1, 512], strides = [1, 1]} : vector<2x512xf32> to vector<1x512xf32>
    %171 = vector.shape_cast %170 : vector<1x512xf32> to vector<512xf32>
    %172 = arith.mulf %169, %171 : vector<512xf32>
    %173 = arith.addf %167, %172 : vector<512xf32>
    %174 = vector.extract_strided_slice %4 {offsets = [10, 0], sizes = [1, 512], strides = [1, 1]} : vector<24x512xf32> to vector<1x512xf32>
    %175 = vector.shape_cast %174 : vector<1x512xf32> to vector<512xf32>
    %176 = vector.extract_strided_slice %70 {offsets = [0, 0], sizes = [1, 512], strides = [1, 1]} : vector<2x512xf32> to vector<1x512xf32>
    %177 = vector.shape_cast %176 : vector<1x512xf32> to vector<512xf32>
    %178 = arith.mulf %175, %177 : vector<512xf32>
    %179 = arith.addf %173, %178 : vector<512xf32>
    %180 = vector.extract_strided_slice %4 {offsets = [11, 0], sizes = [1, 512], strides = [1, 1]} : vector<24x512xf32> to vector<1x512xf32>
    %181 = vector.shape_cast %180 : vector<1x512xf32> to vector<512xf32>
    %182 = arith.addf %179, %181 : vector<512xf32>
    %183 = vector.extract_strided_slice %4 {offsets = [20, 0], sizes = [1, 512], strides = [1, 1]} : vector<24x512xf32> to vector<1x512xf32>
    %184 = vector.shape_cast %183 : vector<1x512xf32> to vector<512xf32>
    %185 = vector.extract_strided_slice %26 {offsets = [1, 0], sizes = [1, 512], strides = [1, 1]} : vector<2x512xf32> to vector<1x512xf32>
    %186 = vector.shape_cast %185 : vector<1x512xf32> to vector<512xf32>
    %187 = arith.mulf %184, %186 : vector<512xf32>
    %188 = vector.extract_strided_slice %4 {offsets = [21, 0], sizes = [1, 512], strides = [1, 1]} : vector<24x512xf32> to vector<1x512xf32>
    %189 = vector.shape_cast %188 : vector<1x512xf32> to vector<512xf32>
    %190 = vector.extract_strided_slice %48 {offsets = [1, 0], sizes = [1, 512], strides = [1, 1]} : vector<2x512xf32> to vector<1x512xf32>
    %191 = vector.shape_cast %190 : vector<1x512xf32> to vector<512xf32>
    %192 = arith.mulf %189, %191 : vector<512xf32>
    %193 = arith.addf %187, %192 : vector<512xf32>
    %194 = vector.extract_strided_slice %4 {offsets = [22, 0], sizes = [1, 512], strides = [1, 1]} : vector<24x512xf32> to vector<1x512xf32>
    %195 = vector.shape_cast %194 : vector<1x512xf32> to vector<512xf32>
    %196 = vector.extract_strided_slice %70 {offsets = [1, 0], sizes = [1, 512], strides = [1, 1]} : vector<2x512xf32> to vector<1x512xf32>
    %197 = vector.shape_cast %196 : vector<1x512xf32> to vector<512xf32>
    %198 = arith.mulf %195, %197 : vector<512xf32>
    %199 = arith.addf %193, %198 : vector<512xf32>
    %200 = vector.extract_strided_slice %4 {offsets = [23, 0], sizes = [1, 512], strides = [1, 1]} : vector<24x512xf32> to vector<1x512xf32>
    %201 = vector.shape_cast %200 : vector<1x512xf32> to vector<512xf32>
    %202 = arith.addf %199, %201 : vector<512xf32>
    %203 = vector.shape_cast %182 : vector<512xf32> to vector<1x512xf32>
    %204 = vector.shape_cast %202 : vector<512xf32> to vector<1x512xf32>
    %205 = tpu.concatenate %203, %204 in 0 : vector<1x512xf32>, vector<1x512xf32> -> vector<2x512xf32>
    %c2_50 = arith.constant 2 : index
    %c0_51 = arith.constant 0 : index
    %c0_52 = arith.constant 0 : index
    %206 = vector.load %arg7[%c2_50, %c0_51, %c0_52] : memref<3x2x512xf32, #tpu.memory_space<vmem>>, vector<1x2x512xf32>
    %207 = vector.shape_cast %206 : vector<1x2x512xf32> to vector<2x512xf32>
    %208 = vector.shape_cast %205 : vector<2x512xf32> to vector<1x2x512xf32>
    tpu.vector_store %arg7[%c2_50, %c0_51, %c0_52], %208 {strides = array<i32>} : memref<3x2x512xf32, #tpu.memory_space<vmem>>, vector<1x2x512xf32>,
    return
  }
  func.func @transform_0(%arg0: i32) -> (i32, i32) {
    %c0_i32 = arith.constant 0 : i32
    %c0_i32_0 = arith.constant 0 : i32
    %c0_i32_1 = arith.constant 0 : i32
    return %c0_i32, %c0_i32_0 : i32, i32
  }
  func.func @transform_1(%arg0: i32) -> (i32, i32) {
    %c0_i32 = arith.constant 0 : i32
    %c0_i32_0 = arith.constant 0 : i32
    %c0_i32_1 = arith.constant 0 : i32
    return %c0_i32, %c0_i32_0 : i32, i32
  }
  func.func @transform_2(%arg0: i32) -> (i32, i32) {
    %c0_i32 = arith.constant 0 : i32
    %c0_i32_0 = arith.constant 0 : i32
    return %c0_i32, %arg0 : i32, i32
  }
  func.func @transform_3(%arg0: i32) -> (i32, i32, i32) {
    %c0_i32 = arith.constant 0 : i32
    %c0_i32_0 = arith.constant 0 : i32
    %c0_i32_1 = arith.constant 0 : i32
    return %c0_i32, %c0_i32_0, %arg0 : i32, i32, i32
  }
  func.func @transform_4(%arg0: i32) -> (i32, i32) {
    %c0_i32 = arith.constant 0 : i32
    %c0_i32_0 = arith.constant 0 : i32
    return %c0_i32, %arg0 : i32, i32
  }
  func.func @transform_5(%arg0: i32) -> (i32, i32, i32) {
    %c0_i32 = arith.constant 0 : i32
    %c0_i32_0 = arith.constant 0 : i32
    %c0_i32_1 = arith.constant 0 : i32
    return %c0_i32, %c0_i32_0, %arg0 : i32, i32, i32
  }
  func.func @transform_6(%arg0: i32) -> (i32, i32, i32) {
    %c0_i32 = arith.constant 0 : i32
    %c0_i32_0 = arith.constant 0 : i32
    %c0_i32_1 = arith.constant 0 : i32
    return %c0_i32, %c0_i32_0, %arg0 : i32, i32, i32
  }
  func.func @transform_7(%arg0: i32) -> (i32, i32, i32) {
    %c0_i32 = arith.constant 0 : i32
    %c0_i32_0 = arith.constant 0 : i32
    %c0_i32_1 = arith.constant 0 : i32
    return %c0_i32, %c0_i32_0, %arg0 : i32, i32, i32
  }
  func.func @transform_8(%arg0: i32) -> (i32, i32, i32) {
    %c0_i32 = arith.constant 0 : i32
    %c0_i32_0 = arith.constant 0 : i32
    %c0_i32_1 = arith.constant 0 : i32
    return %c0_i32, %c0_i32_0, %arg0 : i32, i32, i32
  }
}

</mosaic_0001>

<llo_original>
// kernel: forward.1
$region0: #{forward.1}
  #allocation0 [shape = 'u32[]', space=smem, size = 0x4, offset = 0x4, fixed_abs, tag = 'smem constant byte address 0x4 - core index']
  #allocation1 [shape = 'u32[144,128]{1,0:T(1,128)}', space=vmem, size = 0x12000, scoped, tag = 'internal scratch']
  %s0 = inlined_call_operand.vmem [shape: bf16[4,224], index: 0, kind: input, shape index: {}]
  %s1 = inlined_call_operand.vmem [shape: f32[24,24], index: 1, kind: input, shape index: {}]
  %s2 = inlined_call_operand.vmem [shape: f32[3,1024], index: 2, kind: input, shape index: {}]
  %s3 = inlined_call_operand.vmem [shape: bf16[3,224,1024], index: 3, kind: input, shape index: {}]
  %s4 = inlined_call_operand.vmem [shape: f32[24,1024], index: 4, kind: input, shape index: {}]
  %s5 = inlined_call_operand.vmem [shape: f32[3,2,1024], index: 5, kind: input, shape index: {}]
  %s6 = inlined_call_operand.vmem [shape: f32[3,2,1024], index: 6, kind: output, shape index: {0}]
  %s7 = inlined_call_operand.vmem [shape: f32[3,2,1024], index: 7, kind: output, shape index: {1}]
  %s8 = inlined_call_operand.vmem [shape: f32[3,2,1024], index: 8, kind: output, shape index: {2}]
  %9 = xla_tuple %s6, %s7, %s8
  %s10 = sld [smem:[#allocation0]]
  $region259: #{forward.1} parent=0
    _
  %s12 = ssub.s32 1, %s10
  %s13 = scalar_select 0, %s12, %s10
  $region1: #{forward.1} parent=0
    #allocation2 [shape = 'u8[1376256]{0}', space=vmem, size = 0x150000, scoped, tag = 'input window, operand 3']
    #allocation3 [shape = 'u8[98304]{0}', space=vmem, size = 0x18000, scoped, tag = 'input window, operand 4']
    #allocation4 [shape = 'u8[24576]{0}', space=vmem, size = 0x6000, scoped, tag = 'input window, operand 5']
    #allocation5 [shape = 'u8[24576]{0}', space=vmem, size = 0x6000, scoped, tag = 'output window, operand 0']
    #allocation6 [shape = 'u8[24576]{0}', space=vmem, size = 0x6000, scoped, tag = 'output window, operand 1']
    #allocation7 [shape = 'u8[24576]{0}', space=vmem, size = 0x6000, scoped, tag = 'output window, operand 2']
    loop: start=0, step=1, limit=4
    $region2: #{forward.1} parent=1 // loop_pre_header
      _
    $region3: #{forward.1} parent=1 // loop_header
      %s15 = sphi 0, %s19
      %p16 = scmp.ge.s32.totalorder %s15, 4
      %s23 = sphi 0, %s23
      %s25 = sphi 0, %s23
      %s26 = sphi 0, %s25
      %s40 = sphi 0, %s26
      %s44 = sphi 0, %s44
      %s46 = sphi 0, %s44
      %s47 = sphi 0, %s46
      %s61 = sphi 0, %s47
      %s67 = sphi 0, %s69
      %s70 = sphi 0, %s67
      %s71 = sphi 0, %s70
      %s87 = sphi 0, %s71
      %s93 = sphi 0, %s95
      %s96 = sphi 0, %s93
      %s97 = sphi 0, %s96
      %s113 = sphi 0, %s97
      %s119 = sphi 0, %s121
      %s122 = sphi 0, %s119
      %s123 = sphi 0, %s122
      %s139 = sphi 0, %s123
      %s145 = sphi 0, %s147
      %s148 = sphi 0, %s145
      %s149 = sphi 0, %s148
      %s165 = sphi 0, %s149
      %s171 = sphi 0, %s173
      %s174 = sphi 0, %s171
      %s175 = sphi 0, %s174
      %s191 = sphi 0, %s175
      %s197 = sphi 0, %s199
      %s200 = sphi 0, %s197
      %s201 = sphi 0, %s200
      %s217 = sphi 0, %s201
      %s223 = sphi 0, %s225
      %s226 = sphi 0, %s223
      %s227 = sphi 0, %s226
      %s243 = sphi 0, %s227
    $region4: #{forward.1} parent=1 // loop_header_branch
      %18 = sbr.rel (%p16) target = $region8
    $region5: #{forward.1} parent=1 // loop_body
      %s20 = ssub.s32 %s15, 1
      %s21 = ssub.s32 %s15, 2
      %s22 = sadd.s32 %s15, 1
      %s24 = sadd.s32 %s23, 1
      %p27 = scmp.eq.s32.totalorder %s15, 1
      %p28 = scmp.ne.s32.totalorder %s23, %s25
      %p29 = scmp.eq.s32.totalorder %s15, 0
      %p30 = por %p28, %p29
      %p31 = scmp.ne.s32.totalorder %s23, %s25
      %p32 = scmp.eq.s32.totalorder %s20, 1
      %p33 = por %p31, %p32
      %p34 = scmp.ne.s32.totalorder %s25, %s26
      %p35 = scmp.eq.s32.totalorder %s20, 0
      %p36 = por %p34, %p35
      %p37 = scmp.ne.s32.totalorder %s25, %s26
      %p38 = scmp.eq.s32.totalorder %s21, 1
      %p39 = por %p37, %p38
      %p41 = scmp.ne.s32.totalorder %s26, %s40
      %p42 = scmp.eq.s32.totalorder %s21, 0
      %p43 = por %p41, %p42
      %s45 = sadd.s32 %s44, 1
      %p48 = scmp.eq.s32.totalorder %s15, 1
      %p49 = scmp.ne.s32.totalorder %s44, %s46
      %p50 = scmp.eq.s32.totalorder %s15, 0
      %p51 = por %p49, %p50
      %p52 = scmp.ne.s32.totalorder %s44, %s46
      %p53 = scmp.eq.s32.totalorder %s20, 1
      %p54 = por %p52, %p53
      %p55 = scmp.ne.s32.totalorder %s46, %s47
      %p56 = scmp.eq.s32.totalorder %s20, 0
      %p57 = por %p55, %p56
      %p58 = scmp.ne.s32.totalorder %s46, %s47
      %p59 = scmp.eq.s32.totalorder %s21, 1
      %p60 = por %p58, %p59
      %p62 = scmp.ne.s32.totalorder %s47, %s61
      %p63 = scmp.eq.s32.totalorder %s21, 0
      %p64 = por %p62, %p63
      %s65 = ssub.s32 %s15, %s22
      %p66 = scmp.eq.s32.totalorder %s65, 0
      %s68 = sadd.s32 %s67, 1
      %s69 = scalar_select %p66, %s67, %s68
      %p72 = pneg %p66
      %p73 = scmp.eq.s32.totalorder %s15, 1
      %p74 = por %p72, %p73
      %p75 = scmp.ne.s32.totalorder %s67, %s70
      %p76 = scmp.eq.s32.totalorder %s15, 0
      %p77 = por %p75, %p76
      %p78 = scmp.ne.s32.totalorder %s67, %s70
      %p79 = scmp.eq.s32.totalorder %s20, 1
      %p80 = por %p78, %p79
      %p81 = scmp.ne.s32.totalorder %s70, %s71
      %p82 = scmp.eq.s32.totalorder %s20, 0
      %p83 = por %p81, %p82
      %p84 = scmp.ne.s32.totalorder %s70, %s71
      %p85 = scmp.eq.s32.totalorder %s21, 1
      %p86 = por %p84, %p85
      %p88 = scmp.ne.s32.totalorder %s71, %s87
      %p89 = scmp.eq.s32.totalorder %s21, 0
      %p90 = por %p88, %p89
      %s91 = ssub.s32 %s15, %s22
      %p92 = scmp.eq.s32.totalorder %s91, 0
      %s94 = sadd.s32 %s93, 1
      %s95 = scalar_select %p92, %s93, %s94
      %p98 = pneg %p92
      %p99 = scmp.eq.s32.totalorder %s15, 1
      %p100 = por %p98, %p99
      %p101 = scmp.ne.s32.totalorder %s93, %s96
      %p102 = scmp.eq.s32.totalorder %s15, 0
      %p103 = por %p101, %p102
      %p104 = scmp.ne.s32.totalorder %s93, %s96
      %p105 = scmp.eq.s32.totalorder %s20, 1
      %p106 = por %p104, %p105
      %p107 = scmp.ne.s32.totalorder %s96, %s97
      %p108 = scmp.eq.s32.totalorder %s20, 0
      %p109 = por %p107, %p108
      %p110 = scmp.ne.s32.totalorder %s96, %s97
      %p111 = scmp.eq.s32.totalorder %s21, 1
      %p112 = por %p110, %p111
      %p114 = scmp.ne.s32.totalorder %s97, %s113
      %p115 = scmp.eq.s32.totalorder %s21, 0
      %p116 = por %p114, %p115
      %s117 = ssub.s32 %s15, %s22
      %p118 = scmp.eq.s32.totalorder %s117, 0
      %s120 = sadd.s32 %s119, 1
      %s121 = scalar_select %p118, %s119, %s120
      %p124 = pneg %p118
      %p125 = scmp.eq.s32.totalorder %s15, 1
      %p126 = por %p124, %p125
      %p127 = scmp.ne.s32.totalorder %s119, %s122
      %p128 = scmp.eq.s32.totalorder %s15, 0
      %p129 = por %p127, %p128
      %p130 = scmp.ne.s32.totalorder %s119, %s122
      %p131 = scmp.eq.s32.totalorder %s20, 1
      %p132 = por %p130, %p131
      %p133 = scmp.ne.s32.totalorder %s122, %s123
      %p134 = scmp.eq.s32.totalorder %s20, 0
      %p135 = por %p133, %p134
      %p136 = scmp.ne.s32.totalorder %s122, %s123
      %p137 = scmp.eq.s32.totalorder %s21, 1
      %p138 = por %p136, %p137
      %p140 = scmp.ne.s32.totalorder %s123, %s139
      %p141 = scmp.eq.s32.totalorder %s21, 0
      %p142 = por %p140, %p141
      %s143 = ssub.s32 %s15, %s22
      %p144 = scmp.eq.s32.totalorder %s143, 0
      %s146 = sadd.s32 %s145, 1
      %s147 = scalar_select %p144, %s145, %s146
      %p150 = pneg %p144
      %p151 = scmp.eq.s32.totalorder %s15, 1
      %p152 = por %p150, %p151
      %p153 = scmp.ne.s32.totalorder %s145, %s148
      %p154 = scmp.eq.s32.totalorder %s15, 0
      %p155 = por %p153, %p154
      %p156 = scmp.ne.s32.totalorder %s145, %s148
      %p157 = scmp.eq.s32.totalorder %s20, 1
      %p158 = por %p156, %p157
      %p159 = scmp.ne.s32.totalorder %s148, %s149
      %p160 = scmp.eq.s32.totalorder %s20, 0
      %p161 = por %p159, %p160
      %p162 = scmp.ne.s32.totalorder %s148, %s149
      %p163 = scmp.eq.s32.totalorder %s21, 1
      %p164 = por %p162, %p163
      %p166 = scmp.ne.s32.totalorder %s149, %s165
      %p167 = scmp.eq.s32.totalorder %s21, 0
      %p168 = por %p166, %p167
      %s169 = ssub.s32 %s15, %s22
      %p170 = scmp.eq.s32.totalorder %s169, 0
      %s172 = sadd.s32 %s171, 1
      %s173 = scalar_select %p170, %s171, %s172
      %p176 = pneg %p170
      %p177 = scmp.eq.s32.totalorder %s15, 1
      %p178 = por %p176, %p177
      %p179 = scmp.ne.s32.totalorder %s171, %s174
      %p180 = scmp.eq.s32.totalorder %s15, 0
      %p181 = por %p179, %p180
      %p182 = scmp.ne.s32.totalorder %s171, %s174
      %p183 = scmp.eq.s32.totalorder %s20, 1
      %p184 = por %p182, %p183
      %p185 = scmp.ne.s32.totalorder %s174, %s175
      %p186 = scmp.eq.s32.totalorder %s20, 0
      %p187 = por %p185, %p186
      %p188 = scmp.ne.s32.totalorder %s174, %s175
      %p189 = scmp.eq.s32.totalorder %s21, 1
      %p190 = por %p188, %p189
      %p192 = scmp.ne.s32.totalorder %s175, %s191
      %p193 = scmp.eq.s32.totalorder %s21, 0
      %p194 = por %p192, %p193
      %s195 = ssub.s32 %s15, %s22
      %p196 = scmp.eq.s32.totalorder %s195, 0
      %s198 = sadd.s32 %s197, 1
      %s199 = scalar_select %p196, %s197, %s198
      %p202 = pneg %p196
      %p203 = scmp.eq.s32.totalorder %s15, 1
      %p204 = por %p202, %p203
      %p205 = scmp.ne.s32.totalorder %s197, %s200
      %p206 = scmp.eq.s32.totalorder %s15, 0
      %p207 = por %p205, %p206
      %p208 = scmp.ne.s32.totalorder %s197, %s200
      %p209 = scmp.eq.s32.totalorder %s20, 1
      %p210 = por %p208, %p209
      %p211 = scmp.ne.s32.totalorder %s200, %s201
      %p212 = scmp.eq.s32.totalorder %s20, 0
      %p213 = por %p211, %p212
      %p214 = scmp.ne.s32.totalorder %s200, %s201
      %p215 = scmp.eq.s32.totalorder %s21, 1
      %p216 = por %p214, %p215
      %p218 = scmp.ne.s32.totalorder %s201, %s217
      %p219 = scmp.eq.s32.totalorder %s21, 0
      %p220 = por %p218, %p219
      %s221 = ssub.s32 %s15, %s22
      %p222 = scmp.eq.s32.totalorder %s221, 0
      %s224 = sadd.s32 %s223, 1
      %s225 = scalar_select %p222, %s223, %s224
      %p228 = pneg %p222
      %p229 = scmp.eq.s32.totalorder %s15, 1
      %p230 = por %p228, %p229
      %p231 = scmp.ne.s32.totalorder %s223, %s226
      %p232 = scmp.eq.s32.totalorder %s15, 0
      %p233 = por %p231, %p232
      %p234 = scmp.ne.s32.totalorder %s223, %s226
      %p235 = scmp.eq.s32.totalorder %s20, 1
      %p236 = por %p234, %p235
      %p237 = scmp.ne.s32.totalorder %s226, %s227
      %p238 = scmp.eq.s32.totalorder %s20, 0
      %p239 = por %p237, %p238
      %p240 = scmp.ne.s32.totalorder %s226, %s227
      %p241 = scmp.eq.s32.totalorder %s21, 1
      %p242 = por %p240, %p241
      %p244 = scmp.ne.s32.totalorder %s227, %s243
      %p245 = scmp.eq.s32.totalorder %s21, 0
      %p246 = por %p244, %p245
      %p247 = scmp.le.s32.totalorder 1, %s15
      %p248 = scmp.lt.s32.totalorder %s15, 3
      %p249 = pnand %p247, %p248
      %p250 = pneg %p249
      // Predicated region
      $region9: #{forward.1} parent=5 // pred_check
        _
      $region10: #{forward.1} parent=5 // pred_check_branch
        %252 = sbr.rel (%p249) target = $region12
      $region11: #{forward.1} parent=5 // pred_region
        %s253 = ssub.s32 %s15, 1
        // Predicated region
        $region13: #{forward.1} parent=11 // pred_check
          %p254 = pneg %p36
        $region14: #{forward.1} parent=11 // pred_check_branch
          %256 = sbr.rel (%p254) target = $region16
        $region15: #{forward.1} parent=11 // pred_region
          _
        $region16: #{forward.1} parent=11 // pred_fallthru
          _
        // Predicated region
        $region17: #{forward.1} parent=11 // pred_check
          %p257 = pneg %p57
        $region18: #{forward.1} parent=11 // pred_check_branch
          %259 = sbr.rel (%p257) target = $region20
        $region19: #{forward.1} parent=11 // pred_region
          _
        $region20: #{forward.1} parent=11 // pred_fallthru
          _
      $region12: #{forward.1} parent=5 // pred_fallthru
        _
      %p260 = scmp.lt.s32.totalorder %s15, 2
      // Predicated region
      $region21: #{forward.1} parent=5 // pred_check
        %p261 = pneg %p260
      $region22: #{forward.1} parent=5 // pred_check_branch
        %263 = sbr.rel (%p261) target = $region24
      $region23: #{forward.1} parent=5 // pred_region
        // Predicated region
        $region25: #{forward.1} parent=23 // pred_check
          %p264 = pneg %p77
        $region26: #{forward.1} parent=23 // pred_check_branch
          %266 = sbr.rel (%p264) target = $region28
        $region27: #{forward.1} parent=23 // pred_region
          %s267 = smul.u32 4, %s15
          %p268 = scmp.lt.s32.totalorder %s267, 7
          %s269 = scalar_select %p268, %s267, 7
          %s270 = smul.addr %s269, 4
          %s271 = scalar_lea.vmem %s2, %s270
          %s272 = smul.u32 4, %s15
        $region28: #{forward.1} parent=23 // pred_fallthru
          _
        // Predicated region
        $region29: #{forward.1} parent=23 // pred_check
          %p273 = pneg %p103
        $region30: #{forward.1} parent=23 // pred_check_branch
          %275 = sbr.rel (%p273) target = $region32
        $region31: #{forward.1} parent=23 // pred_region
          %s276 = sand.u32 %s93, 1
          %s277 = sand.u32 %s93, 1
          %s278 = smul.addr %s277, 1344
          %s279 = scalar_lea.vmem [#allocation2], %s278
          %s280 = smul.u32 4, %s15
          %s281 = smul.addr %s280, 4
          %s282 = scalar_lea.vmem %s3, %s281
          // Predicated region
          $region33: #{forward.1} parent=31 // pred_check
            _
          $region34: #{forward.1} parent=31 // pred_check_branch
            %284 = sbr.rel (0) target = $region36
          $region35: #{forward.1} parent=31 // pred_region
            // Predicated region
            $region37: #{forward.1} parent=35 // pred_check
              _
            $region38: #{forward.1} parent=35 // pred_check_branch
              %286 = sbr.rel (0) target = $region40
            $region39: #{forward.1} parent=35 // pred_region
              loop: start=0, step=1, limit=1
              $region41: #{forward.1} parent=39 // loop_pre_header
                _
              $region42: #{forward.1} parent=39 // loop_header
                %s288 = sphi 0, %s292
                %p289 = scmp.ge.s32.totalorder %s288, 1
                %s293 = sphi %s282, %s282
                %s294 = sphi %s279, %s279
              $region43: #{forward.1} parent=39 // loop_header_branch
                %291 = sbr.rel (%p289) target = $region47
              $region44: #{forward.1} parent=39 // loop_body
                %v295 = vld [vmem:[%s293] sm:$0xff]
                %296 = vst [vmem:[%s294] sm:$0xff] %v295
                %v297 = vld [vmem:[%s293 + $0x8] sm:$0xff]
                %298 = vst [vmem:[%s294 + $0x8] sm:$0xff] %v297
                %v299 = vld [vmem:[%s293 + $0x20] sm:$0xff]
                %300 = vst [vmem:[%s294 + $0x10] sm:$0xff] %v299
                %v301 = vld [vmem:[%s293 + $0x28] sm:$0xff]
                %302 = vst [vmem:[%s294 + $0x18] sm:$0xff] %v301
                %v303 = vld [vmem:[%s293 + $0x40] sm:$0xff]
                %304 = vst [vmem:[%s294 + $0x20] sm:$0xff] %v303
                %v305 = vld [vmem:[%s293 + $0x48] sm:$0xff]
                %306 = vst [vmem:[%s294 + $0x28] sm:$0xff] %v305
                %v307 = vld [vmem:[%s293 + $0x60] sm:$0xff]
                %308 = vst [vmem:[%s294 + $0x30] sm:$0xff] %v307
                %v309 = vld [vmem:[%s293 + $0x68] sm:$0xff]
                %310 = vst [vmem:[%s294 + $0x38] sm:$0xff] %v309
                %v311 = vld [vmem:[%s293 + $0x80] sm:$0xff]
                %312 = vst [vmem:[%s294 + $0x40] sm:$0xff] %v311
                %v313 = vld [vmem:[%s293 + $0x88] sm:$0xff]
                %314 = vst [vmem:[%s294 + $0x48] sm:$0xff] %v313
                %v315 = vld [vmem:[%s293 + $0xa0] sm:$0xff]
                %316 = vst [vmem:[%s294 + $0x50] sm:$0xff] %v315
                %v317 = vld [vmem:[%s293 + $0xa8] sm:$0xff]
                %318 = vst [vmem:[%s294 + $0x58] sm:$0xff] %v317
                %v319 = vld [vmem:[%s293 + $0xc0] sm:$0xff]
                %320 = vst [vmem:[%s294 + $0x60] sm:$0xff] %v319
                %v321 = vld [vmem:[%s293 + $0xc8] sm:$0xff]
                %322 = vst [vmem:[%s294 + $0x68] sm:$0xff] %v321
                %v323 = vld [vmem:[%s293 + $0xe0] sm:$0xff]
                %324 = vst [vmem:[%s294 + $0x70] sm:$0xff] %v323
                %v325 = vld [vmem:[%s293 + $0xe8] sm:$0xff]
                %326 = vst [vmem:[%s294 + $0x78] sm:$0xff] %v325
                %v327 = vld [vmem:[%s293 + $0x100] sm:$0xff]
                %328 = vst [vmem:[%s294 + $0x80] sm:$0xff] %v327
                %v329 = vld [vmem:[%s293 + $0x108] sm:$0xff]
                %330 = vst [vmem:[%s294 + $0x88] sm:$0xff] %v329
                %v331 = vld [vmem:[%s293 + $0x120] sm:$0xff]
                %332 = vst [vmem:[%s294 + $0x90] sm:$0xff] %v331
                %v333 = vld [vmem:[%s293 + $0x128] sm:$0xff]
                %334 = vst [vmem:[%s294 + $0x98] sm:$0xff] %v333
                %v335 = vld [vmem:[%s293 + $0x140] sm:$0xff]
                %336 = vst [vmem:[%s294 + $0xa0] sm:$0xff] %v335
                %v337 = vld [vmem:[%s293 + $0x148] sm:$0xff]
                %338 = vst [vmem:[%s294 + $0xa8] sm:$0xff] %v337
                %v339 = vld [vmem:[%s293 + $0x160] sm:$0xff]
                %340 = vst [vmem:[%s294 + $0xb0] sm:$0xff] %v339
                %v341 = vld [vmem:[%s293 + $0x168] sm:$0xff]
                %342 = vst [vmem:[%s294 + $0xb8] sm:$0xff] %v341
                %v343 = vld [vmem:[%s293 + $0x180] sm:$0xff]
                %344 = vst [vmem:[%s294 + $0xc0] sm:$0xff] %v343
                %v345 = vld [vmem:[%s293 + $0x188] sm:$0xff]
                %346 = vst [vmem:[%s294 + $0xc8] sm:$0xff] %v345
                %v347 = vld [vmem:[%s293 + $0x1a0] sm:$0xff]
                %348 = vst [vmem:[%s294 + $0xd0] sm:$0xff] %v347
                %v349 = vld [vmem:[%s293 + $0x1a8] sm:$0xff]
                %350 = vst [vmem:[%s294 + $0xd8] sm:$0xff] %v349
                %v351 = vld [vmem:[%s293 + $0x1c0] sm:$0xff]
                %352 = vst [vmem:[%s294 + $0xe0] sm:$0xff] %v351
                %v353 = vld [vmem:[%s293 + $0x1c8] sm:$0xff]
                %354 = vst [vmem:[%s294 + $0xe8] sm:$0xff] %v353
                %v355 = vld [vmem:[%s293 + $0x1e0] sm:$0xff]
                %356 = vst [vmem:[%s294 + $0xf0] sm:$0xff] %v355
                %v357 = vld [vmem:[%s293 + $0x1e8] sm:$0xff]
                %358 = vst [vmem:[%s294 + $0xf8] sm:$0xff] %v357
                %v359 = vld [vmem:[%s293 + $0x200] sm:$0xff]
                %360 = vst [vmem:[%s294 + $0x100] sm:$0xff] %v359
                %v361 = vld [vmem:[%s293 + $0x208] sm:$0xff]
                %362 = vst [vmem:[%s294 + $0x108] sm:$0xff] %v361
                %v363 = vld [vmem:[%s293 + $0x220] sm:$0xff]
                %364 = vst [vmem:[%s294 + $0x110] sm:$0xff] %v363
                %v365 = vld [vmem:[%s293 + $0x228] sm:$0xff]
                %366 = vst [vmem:[%s294 + $0x118] sm:$0xff] %v365
                %v367 = vld [vmem:[%s293 + $0x240] sm:$0xff]
                %368 = vst [vmem:[%s294 + $0x120] sm:$0xff] %v367
                %v369 = vld [vmem:[%s293 + $0x248] sm:$0xff]
                %370 = vst [vmem:[%s294 + $0x128] sm:$0xff] %v369
                %v371 = vld [vmem:[%s293 + $0x260] sm:$0xff]
                %372 = vst [vmem:[%s294 + $0x130] sm:$0xff] %v371
                %v373 = vld [vmem:[%s293 + $0x268] sm:$0xff]
                %374 = vst [vmem:[%s294 + $0x138] sm:$0xff] %v373
                %v375 = vld [vmem:[%s293 + $0x280] sm:$0xff]
                %376 = vst [vmem:[%s294 + $0x140] sm:$0xff] %v375
                %v377 = vld [vmem:[%s293 + $0x288] sm:$0xff]
                %378 = vst [vmem:[%s294 + $0x148] sm:$0xff] %v377
                %v379 = vld [vmem:[%s293 + $0x2a0] sm:$0xff]
                %380 = vst [vmem:[%s294 + $0x150] sm:$0xff] %v379
                %v381 = vld [vmem:[%s293 + $0x2a8] sm:$0xff]
                %382 = vst [vmem:[%s294 + $0x158] sm:$0xff] %v381
                %v383 = vld [vmem:[%s293 + $0x2c0] sm:$0xff]
                %384 = vst [vmem:[%s294 + $0x160] sm:$0xff] %v383
                %v385 = vld [vmem:[%s293 + $0x2c8] sm:$0xff]
                %386 = vst [vmem:[%s294 + $0x168] sm:$0xff] %v385
                %v387 = vld [vmem:[%s293 + $0x2e0] sm:$0xff]
                %388 = vst [vmem:[%s294 + $0x170] sm:$0xff] %v387
                %v389 = vld [vmem:[%s293 + $0x2e8] sm:$0xff]
                %390 = vst [vmem:[%s294 + $0x178] sm:$0xff] %v389
                %v391 = vld [vmem:[%s293 + $0x300] sm:$0xff]
                %392 = vst [vmem:[%s294 + $0x180] sm:$0xff] %v391
                %v393 = vld [vmem:[%s293 + $0x308] sm:$0xff]
                %394 = vst [vmem:[%s294 + $0x188] sm:$0xff] %v393
                %v395 = vld [vmem:[%s293 + $0x320] sm:$0xff]
                %396 = vst [vmem:[%s294 + $0x190] sm:$0xff] %v395
                %v397 = vld [vmem:[%s293 + $0x328] sm:$0xff]
                %398 = vst [vmem:[%s294 + $0x198] sm:$0xff] %v397
                %v399 = vld [vmem:[%s293 + $0x340] sm:$0xff]
                %400 = vst [vmem:[%s294 + $0x1a0] sm:$0xff] %v399
                %v401 = vld [vmem:[%s293 + $0x348] sm:$0xff]
                %402 = vst [vmem:[%s294 + $0x1a8] sm:$0xff] %v401
                %v403 = vld [vmem:[%s293 + $0x360] sm:$0xff]
                %404 = vst [vmem:[%s294 + $0x1b0] sm:$0xff] %v403
                %v405 = vld [vmem:[%s293 + $0x368] sm:$0xff]
                %406 = vst [vmem:[%s294 + $0x1b8] sm:$0xff] %v405
                %v407 = vld [vmem:[%s293 + $0x380] sm:$0xff]
                %408 = vst [vmem:[%s294 + $0x1c0] sm:$0xff] %v407
                %v409 = vld [vmem:[%s293 + $0x388] sm:$0xff]
                %410 = vst [vmem:[%s294 + $0x1c8] sm:$0xff] %v409
                %v411 = vld [vmem:[%s293 + $0x3a0] sm:$0xff]
                %412 = vst [vmem:[%s294 + $0x1d0] sm:$0xff] %v411
                %v413 = vld [vmem:[%s293 + $0x3a8] sm:$0xff]
                %414 = vst [vmem:[%s294 + $0x1d8] sm:$0xff] %v413
                %v415 = vld [vmem:[%s293 + $0x3c0] sm:$0xff]
                %416 = vst [vmem:[%s294 + $0x1e0] sm:$0xff] %v415
                %v417 = vld [vmem:[%s293 + $0x3c8] sm:$0xff]
                %418 = vst [vmem:[%s294 + $0x1e8] sm:$0xff] %v417
                %v419 = vld [vmem:[%s293 + $0x3e0] sm:$0xff]
                %420 = vst [vmem:[%s294 + $0x1f0] sm:$0xff] %v419
                %v421 = vld [vmem:[%s293 + $0x3e8] sm:$0xff]
                %422 = vst [vmem:[%s294 + $0x1f8] sm:$0xff] %v421
                %v423 = vld [vmem:[%s293 + $0x400] sm:$0xff]
                %424 = vst [vmem:[%s294 + $0x200] sm:$0xff] %v423
                %v425 = vld [vmem:[%s293 + $0x408] sm:$0xff]
                %426 = vst [vmem:[%s294 + $0x208] sm:$0xff] %v425
                %v427 = vld [vmem:[%s293 + $0x420] sm:$0xff]
                %428 = vst [vmem:[%s294 + $0x210] sm:$0xff] %v427
                %v429 = vld [vmem:[%s293 + $0x428] sm:$0xff]
                %430 = vst [vmem:[%s294 + $0x218] sm:$0xff] %v429
                %v431 = vld [vmem:[%s293 + $0x440] sm:$0xff]
                %432 = vst [vmem:[%s294 + $0x220] sm:$0xff] %v431
                %v433 = vld [vmem:[%s293 + $0x448] sm:$0xff]
                %434 = vst [vmem:[%s294 + $0x228] sm:$0xff] %v433
                %v435 = vld [vmem:[%s293 + $0x460] sm:$0xff]
                %436 = vst [vmem:[%s294 + $0x230] sm:$0xff] %v435
                %v437 = vld [vmem:[%s293 + $0x468] sm:$0xff]
                %438 = vst [vmem:[%s294 + $0x238] sm:$0xff] %v437
                %v439 = vld [vmem:[%s293 + $0x480] sm:$0xff]
                %440 = vst [vmem:[%s294 + $0x240] sm:$0xff] %v439
                %v441 = vld [vmem:[%s293 + $0x488] sm:$0xff]
                %442 = vst [vmem:[%s294 + $0x248] sm:$0xff] %v441
                %v443 = vld [vmem:[%s293 + $0x4a0] sm:$0xff]
                %444 = vst [vmem:[%s294 + $0x250] sm:$0xff] %v443
                %v445 = vld [vmem:[%s293 + $0x4a8] sm:$0xff]
                %446 = vst [vmem:[%s294 + $0x258] sm:$0xff] %v445
                %v447 = vld [vmem:[%s293 + $0x4c0] sm:$0xff]
                %448 = vst [vmem:[%s294 + $0x260] sm:$0xff] %v447
                %v449 = vld [vmem:[%s293 + $0x4c8] sm:$0xff]
                %450 = vst [vmem:[%s294 + $0x268] sm:$0xff] %v449
                %v451 = vld [vmem:[%s293 + $0x4e0] sm:$0xff]
                %452 = vst [vmem:[%s294 + $0x270] sm:$0xff] %v451
                %v453 = vld [vmem:[%s293 + $0x4e8] sm:$0xff]
                %454 = vst [vmem:[%s294 + $0x278] sm:$0xff] %v453
                %v455 = vld [vmem:[%s293 + $0x500] sm:$0xff]
                %456 = vst [vmem:[%s294 + $0x280] sm:$0xff] %v455
                %v457 = vld [vmem:[%s293 + $0x508] sm:$0xff]
                %458 = vst [vmem:[%s294 + $0x288] sm:$0xff] %v457
                %v459 = vld [vmem:[%s293 + $0x520] sm:$0xff]
                %460 = vst [vmem:[%s294 + $0x290] sm:$0xff] %v459
                %v461 = vld [vmem:[%s293 + $0x528] sm:$0xff]
                %462 = vst [vmem:[%s294 + $0x298] sm:$0xff] %v461
                %v463 = vld [vmem:[%s293 + $0x540] sm:$0xff]
                %464 = vst [vmem:[%s294 + $0x2a0] sm:$0xff] %v463
                %v465 = vld [vmem:[%s293 + $0x548] sm:$0xff]
                %466 = vst [vmem:[%s294 + $0x2a8] sm:$0xff] %v465
                %v467 = vld [vmem:[%s293 + $0x560] sm:$0xff]
                %468 = vst [vmem:[%s294 + $0x2b0] sm:$0xff] %v467
                %v469 = vld [vmem:[%s293 + $0x568] sm:$0xff]
                %470 = vst [vmem:[%s294 + $0x2b8] sm:$0xff] %v469
                %v471 = vld [vmem:[%s293 + $0x580] sm:$0xff]
                %472 = vst [vmem:[%s294 + $0x2c0] sm:$0xff] %v471
                %v473 = vld [vmem:[%s293 + $0x588] sm:$0xff]
                %474 = vst [vmem:[%s294 + $0x2c8] sm:$0xff] %v473
                %v475 = vld [vmem:[%s293 + $0x5a0] sm:$0xff]
                %476 = vst [vmem:[%s294 + $0x2d0] sm:$0xff] %v475
                %v477 = vld [vmem:[%s293 + $0x5a8] sm:$0xff]
                %478 = vst [vmem:[%s294 + $0x2d8] sm:$0xff] %v477
                %v479 = vld [vmem:[%s293 + $0x5c0] sm:$0xff]
                %480 = vst [vmem:[%s294 + $0x2e0] sm:$0xff] %v479
                %v481 = vld [vmem:[%s293 + $0x5c8] sm:$0xff]
                %482 = vst [vmem:[%s294 + $0x2e8] sm:$0xff] %v481
                %v483 = vld [vmem:[%s293 + $0x5e0] sm:$0xff]
                %484 = vst [vmem:[%s294 + $0x2f0] sm:$0xff] %v483
                %v485 = vld [vmem:[%s293 + $0x5e8] sm:$0xff]
                %486 = vst [vmem:[%s294 + $0x2f8] sm:$0xff] %v485
                %v487 = vld [vmem:[%s293 + $0x600] sm:$0xff]
                %488 = vst [vmem:[%s294 + $0x300] sm:$0xff] %v487
                %v489 = vld [vmem:[%s293 + $0x608] sm:$0xff]
                %490 = vst [vmem:[%s294 + $0x308] sm:$0xff] %v489
                %v491 = vld [vmem:[%s293 + $0x620] sm:$0xff]
                %492 = vst [vmem:[%s294 + $0x310] sm:$0xff] %v491
                %v493 = vld [vmem:[%s293 + $0x628] sm:$0xff]
                %494 = vst [vmem:[%s294 + $0x318] sm:$0xff] %v493
                %v495 = vld [vmem:[%s293 + $0x640] sm:$0xff]
                %496 = vst [vmem:[%s294 + $0x320] sm:$0xff] %v495
                %v497 = vld [vmem:[%s293 + $0x648] sm:$0xff]
                %498 = vst [vmem:[%s294 + $0x328] sm:$0xff] %v497
                %v499 = vld [vmem:[%s293 + $0x660] sm:$0xff]
                %500 = vst [vmem:[%s294 + $0x330] sm:$0xff] %v499
                %v501 = vld [vmem:[%s293 + $0x668] sm:$0xff]
                %502 = vst [vmem:[%s294 + $0x338] sm:$0xff] %v501
                %v503 = vld [vmem:[%s293 + $0x680] sm:$0xff]
                %504 = vst [vmem:[%s294 + $0x340] sm:$0xff] %v503
                %v505 = vld [vmem:[%s293 + $0x688] sm:$0xff]
                %506 = vst [vmem:[%s294 + $0x348] sm:$0xff] %v505
                %v507 = vld [vmem:[%s293 + $0x6a0] sm:$0xff]
                %508 = vst [vmem:[%s294 + $0x350] sm:$0xff] %v507
                %v509 = vld [vmem:[%s293 + $0x6a8] sm:$0xff]
                %510 = vst [vmem:[%s294 + $0x358] sm:$0xff] %v509
                %v511 = vld [vmem:[%s293 + $0x6c0] sm:$0xff]
                %512 = vst [vmem:[%s294 + $0x360] sm:$0xff] %v511
                %v513 = vld [vmem:[%s293 + $0x6c8] sm:$0xff]
                %514 = vst [vmem:[%s294 + $0x368] sm:$0xff] %v513
                %v515 = vld [vmem:[%s293 + $0x6e0] sm:$0xff]
                %516 = vst [vmem:[%s294 + $0x370] sm:$0xff] %v515
                %v517 = vld [vmem:[%s293 + $0x6e8] sm:$0xff]
                %518 = vst [vmem:[%s294 + $0x378] sm:$0xff] %v517
                %v519 = vld [vmem:[%s293 + $0x700] sm:$0xff]
                %520 = vst [vmem:[%s294 + $0x380] sm:$0xff] %v519
                %v521 = vld [vmem:[%s293 + $0x708] sm:$0xff]
                %522 = vst [vmem:[%s294 + $0x388] sm:$0xff] %v521
                %v523 = vld [vmem:[%s293 + $0x720] sm:$0xff]
                %524 = vst [vmem:[%s294 + $0x390] sm:$0xff] %v523
                %v525 = vld [vmem:[%s293 + $0x728] sm:$0xff]
                %526 = vst [vmem:[%s294 + $0x398] sm:$0xff] %v525
                %v527 = vld [vmem:[%s293 + $0x740] sm:$0xff]
                %528 = vst [vmem:[%s294 + $0x3a0] sm:$0xff] %v527
                %v529 = vld [vmem:[%s293 + $0x748] sm:$0xff]
                %530 = vst [vmem:[%s294 + $0x3a8] sm:$0xff] %v529
                %v531 = vld [vmem:[%s293 + $0x760] sm:$0xff]
                %532 = vst [vmem:[%s294 + $0x3b0] sm:$0xff] %v531
                %v533 = vld [vmem:[%s293 + $0x768] sm:$0xff]
                %534 = vst [vmem:[%s294 + $0x3b8] sm:$0xff] %v533
                %v535 = vld [vmem:[%s293 + $0x780] sm:$0xff]
                %536 = vst [vmem:[%s294 + $0x3c0] sm:$0xff] %v535
                %v537 = vld [vmem:[%s293 + $0x788] sm:$0xff]
                %538 = vst [vmem:[%s294 + $0x3c8] sm:$0xff] %v537
                %v539 = vld [vmem:[%s293 + $0x7a0] sm:$0xff]
                %540 = vst [vmem:[%s294 + $0x3d0] sm:$0xff] %v539
                %v541 = vld [vmem:[%s293 + $0x7a8] sm:$0xff]
                %542 = vst [vmem:[%s294 + $0x3d8] sm:$0xff] %v541
                %v543 = vld [vmem:[%s293 + $0x7c0] sm:$0xff]
                %544 = vst [vmem:[%s294 + $0x3e0] sm:$0xff] %v543
                %v545 = vld [vmem:[%s293 + $0x7c8] sm:$0xff]
                %546 = vst [vmem:[%s294 + $0x3e8] sm:$0xff] %v545
                %v547 = vld [vmem:[%s293 + $0x7e0] sm:$0xff]
                %548 = vst [vmem:[%s294 + $0x3f0] sm:$0xff] %v547
                %v549 = vld [vmem:[%s293 + $0x7e8] sm:$0xff]
                %550 = vst [vmem:[%s294 + $0x3f8] sm:$0xff] %v549
                %v551 = vld [vmem:[%s293 + $0x800] sm:$0xff]
                %552 = vst [vmem:[%s294 + $0x400] sm:$0xff] %v551
                %v553 = vld [vmem:[%s293 + $0x808] sm:$0xff]
                %554 = vst [vmem:[%s294 + $0x408] sm:$0xff] %v553
                %v555 = vld [vmem:[%s293 + $0x820] sm:$0xff]
                %556 = vst [vmem:[%s294 + $0x410] sm:$0xff] %v555
                %v557 = vld [vmem:[%s293 + $0x828] sm:$0xff]
                %558 = vst [vmem:[%s294 + $0x418] sm:$0xff] %v557
                %v559 = vld [vmem:[%s293 + $0x840] sm:$0xff]
                %560 = vst [vmem:[%s294 + $0x420] sm:$0xff] %v559
                %v561 = vld [vmem:[%s293 + $0x848] sm:$0xff]
                %562 = vst [vmem:[%s294 + $0x428] sm:$0xff] %v561
                %v563 = vld [vmem:[%s293 + $0x860] sm:$0xff]
                %564 = vst [vmem:[%s294 + $0x430] sm:$0xff] %v563
                %v565 = vld [vmem:[%s293 + $0x868] sm:$0xff]
                %566 = vst [vmem:[%s294 + $0x438] sm:$0xff] %v565
                %v567 = vld [vmem:[%s293 + $0x880] sm:$0xff]
                %568 = vst [vmem:[%s294 + $0x440] sm:$0xff] %v567
                %v569 = vld [vmem:[%s293 + $0x888] sm:$0xff]
                %570 = vst [vmem:[%s294 + $0x448] sm:$0xff] %v569
                %v571 = vld [vmem:[%s293 + $0x8a0] sm:$0xff]
                %572 = vst [vmem:[%s294 + $0x450] sm:$0xff] %v571
                %v573 = vld [vmem:[%s293 + $0x8a8] sm:$0xff]
                %574 = vst [vmem:[%s294 + $0x458] sm:$0xff] %v573
                %v575 = vld [vmem:[%s293 + $0x8c0] sm:$0xff]
                %576 = vst [vmem:[%s294 + $0x460] sm:$0xff] %v575
                %v577 = vld [vmem:[%s293 + $0x8c8] sm:$0xff]
                %578 = vst [vmem:[%s294 + $0x468] sm:$0xff] %v577
                %v579 = vld [vmem:[%s293 + $0x8e0] sm:$0xff]
                %580 = vst [vmem:[%s294 + $0x470] sm:$0xff] %v579
                %v581 = vld [vmem:[%s293 + $0x8e8] sm:$0xff]
                %582 = vst [vmem:[%s294 + $0x478] sm:$0xff] %v581
                %v583 = vld [vmem:[%s293 + $0x900] sm:$0xff]
                %584 = vst [vmem:[%s294 + $0x480] sm:$0xff] %v583
                %v585 = vld [vmem:[%s293 + $0x908] sm:$0xff]
                %586 = vst [vmem:[%s294 + $0x488] sm:$0xff] %v585
                %v587 = vld [vmem:[%s293 + $0x920] sm:$0xff]
                %588 = vst [vmem:[%s294 + $0x490] sm:$0xff] %v587
                %v589 = vld [vmem:[%s293 + $0x928] sm:$0xff]
                %590 = vst [vmem:[%s294 + $0x498] sm:$0xff] %v589
                %v591 = vld [vmem:[%s293 + $0x940] sm:$0xff]
                %592 = vst [vmem:[%s294 + $0x4a0] sm:$0xff] %v591
                %v593 = vld [vmem:[%s293 + $0x948] sm:$0xff]
                %594 = vst [vmem:[%s294 + $0x4a8] sm:$0xff] %v593
                %v595 = vld [vmem:[%s293 + $0x960] sm:$0xff]
                %596 = vst [vmem:[%s294 + $0x4b0] sm:$0xff] %v595
                %v597 = vld [vmem:[%s293 + $0x968] sm:$0xff]
                %598 = vst [vmem:[%s294 + $0x4b8] sm:$0xff] %v597
                %v599 = vld [vmem:[%s293 + $0x980] sm:$0xff]
                %600 = vst [vmem:[%s294 + $0x4c0] sm:$0xff] %v599
                %v601 = vld [vmem:[%s293 + $0x988] sm:$0xff]
                %602 = vst [vmem:[%s294 + $0x4c8] sm:$0xff] %v601
                %v603 = vld [vmem:[%s293 + $0x9a0] sm:$0xff]
                %604 = vst [vmem:[%s294 + $0x4d0] sm:$0xff] %v603
                %v605 = vld [vmem:[%s293 + $0x9a8] sm:$0xff]
                %606 = vst [vmem:[%s294 + $0x4d8] sm:$0xff] %v605
                %v607 = vld [vmem:[%s293 + $0x9c0] sm:$0xff]
                %608 = vst [vmem:[%s294 + $0x4e0] sm:$0xff] %v607
                %v609 = vld [vmem:[%s293 + $0x9c8] sm:$0xff]
                %610 = vst [vmem:[%s294 + $0x4e8] sm:$0xff] %v609
                %v611 = vld [vmem:[%s293 + $0x9e0] sm:$0xff]
                %612 = vst [vmem:[%s294 + $0x4f0] sm:$0xff] %v611
                %v613 = vld [vmem:[%s293 + $0x9e8] sm:$0xff]
                %614 = vst [vmem:[%s294 + $0x4f8] sm:$0xff] %v613
                %v615 = vld [vmem:[%s293 + $0xa00] sm:$0xff]
                %616 = vst [vmem:[%s294 + $0x500] sm:$0xff] %v615
                %v617 = vld [vmem:[%s293 + $0xa08] sm:$0xff]
                %618 = vst [vmem:[%s294 + $0x508] sm:$0xff] %v617
                %v619 = vld [vmem:[%s293 + $0xa20] sm:$0xff]
                %620 = vst [vmem:[%s294 + $0x510] sm:$0xff] %v619
                %v621 = vld [vmem:[%s293 + $0xa28] sm:$0xff]
                %622 = vst [vmem:[%s294 + $0x518] sm:$0xff] %v621
                %v623 = vld [vmem:[%s293 + $0xa40] sm:$0xff]
                %624 = vst [vmem:[%s294 + $0x520] sm:$0xff] %v623
                %v625 = vld [vmem:[%s293 + $0xa48] sm:$0xff]
                %626 = vst [vmem:[%s294 + $0x528] sm:$0xff] %v625
                %v627 = vld [vmem:[%s293 + $0xa60] sm:$0xff]
                %628 = vst [vmem:[%s294 + $0x530] sm:$0xff] %v627
                %v629 = vld [vmem:[%s293 + $0xa68] sm:$0xff]
                %630 = vst [vmem:[%s294 + $0x538] sm:$0xff] %v629
              $region45: #{forward.1} parent=39 // loop_footer
                %s292 = sadd.s32 1, %s288
              $region46: #{forward.1} parent=39 // loop_footer_branch
                %287 = sbr.rel target = $region42
              $region47: #{forward.1} parent=39 // loop_exit
                _
            $region40: #{forward.1} parent=35 // pred_fallthru
              _
            // Predicated region
            $region48: #{forward.1} parent=35 // pred_check
              _
            $region49: #{forward.1} parent=35 // pred_check_branch
              %632 = sbr.rel target = $region51
            $region50: #{forward.1} parent=35 // pred_region
              _
            $region51: #{forward.1} parent=35 // pred_fallthru
              _
          $region36: #{forward.1} parent=31 // pred_fallthru
            _
          %633 = vnop
        $region32: #{forward.1} parent=23 // pred_fallthru
          _
        // Predicated region
        $region52: #{forward.1} parent=23 // pred_check
          %p634 = pneg %p129
        $region53: #{forward.1} parent=23 // pred_check_branch
          %636 = sbr.rel (%p634) target = $region55
        $region54: #{forward.1} parent=23 // pred_region
          %s637 = sand.u32 %s119, 1
          %s638 = sand.u32 %s119, 1
          %s639 = smul.addr %s638, 96
          %s640 = scalar_lea.vmem [#allocation3], %s639
          %s641 = smul.u32 4, %s15
          %s642 = smul.addr %s641, 8
          %s643 = scalar_lea.vmem %s4, %s642
          // Predicated region
          $region56: #{forward.1} parent=54 // pred_check
            _
          $region57: #{forward.1} parent=54 // pred_check_branch
            %645 = sbr.rel (0) target = $region59
          $region58: #{forward.1} parent=54 // pred_region
            // Predicated region
            $region60: #{forward.1} parent=58 // pred_check
              _
            $region61: #{forward.1} parent=58 // pred_check_branch
              %647 = sbr.rel (0) target = $region63
            $region62: #{forward.1} parent=58 // pred_region
              loop: start=0, step=1, limit=1
              $region64: #{forward.1} parent=62 // loop_pre_header
                _
              $region65: #{forward.1} parent=62 // loop_header
                %s649 = sphi 0, %s653
                %p650 = scmp.ge.s32.totalorder %s649, 1
                %s654 = sphi %s643, %s643
                %s655 = sphi %s640, %s640
              $region66: #{forward.1} parent=62 // loop_header_branch
                %652 = sbr.rel (%p650) target = $region70
              $region67: #{forward.1} parent=62 // loop_body
                %v656 = vld [vmem:[%s654] sm:$0xff]
                %657 = vst [vmem:[%s655] sm:$0xff] %v656
                %v658 = vld [vmem:[%s654 + $0x8] sm:$0xff]
                %659 = vst [vmem:[%s655 + $0x8] sm:$0xff] %v658
                %v660 = vld [vmem:[%s654 + $0x10] sm:$0xff]
                %661 = vst [vmem:[%s655 + $0x10] sm:$0xff] %v660
                %v662 = vld [vmem:[%s654 + $0x18] sm:$0xff]
                %663 = vst [vmem:[%s655 + $0x18] sm:$0xff] %v662
                %v664 = vld [vmem:[%s654 + $0x40] sm:$0xff]
                %665 = vst [vmem:[%s655 + $0x20] sm:$0xff] %v664
                %v666 = vld [vmem:[%s654 + $0x48] sm:$0xff]
                %667 = vst [vmem:[%s655 + $0x28] sm:$0xff] %v666
                %v668 = vld [vmem:[%s654 + $0x50] sm:$0xff]
                %669 = vst [vmem:[%s655 + $0x30] sm:$0xff] %v668
                %v670 = vld [vmem:[%s654 + $0x58] sm:$0xff]
                %671 = vst [vmem:[%s655 + $0x38] sm:$0xff] %v670
                %v672 = vld [vmem:[%s654 + $0x80] sm:$0xff]
                %673 = vst [vmem:[%s655 + $0x40] sm:$0xff] %v672
                %v674 = vld [vmem:[%s654 + $0x88] sm:$0xff]
                %675 = vst [vmem:[%s655 + $0x48] sm:$0xff] %v674
                %v676 = vld [vmem:[%s654 + $0x90] sm:$0xff]
                %677 = vst [vmem:[%s655 + $0x50] sm:$0xff] %v676
                %v678 = vld [vmem:[%s654 + $0x98] sm:$0xff]
                %679 = vst [vmem:[%s655 + $0x58] sm:$0xff] %v678
              $region68: #{forward.1} parent=62 // loop_footer
                %s653 = sadd.s32 1, %s649
              $region69: #{forward.1} parent=62 // loop_footer_branch
                %648 = sbr.rel target = $region65
              $region70: #{forward.1} parent=62 // loop_exit
                _
            $region63: #{forward.1} parent=58 // pred_fallthru
              _
            // Predicated region
            $region71: #{forward.1} parent=58 // pred_check
              _
            $region72: #{forward.1} parent=58 // pred_check_branch
              %681 = sbr.rel target = $region74
            $region73: #{forward.1} parent=58 // pred_region
              _
            $region74: #{forward.1} parent=58 // pred_fallthru
              _
          $region59: #{forward.1} parent=54 // pred_fallthru
            _
          %682 = vnop
        $region55: #{forward.1} parent=23 // pred_fallthru
          _
        // Predicated region
        $region75: #{forward.1} parent=23 // pred_check
          %p683 = pneg %p155
        $region76: #{forward.1} parent=23 // pred_check_branch
          %685 = sbr.rel (%p683) target = $region78
        $region77: #{forward.1} parent=23 // pred_region
          %s686 = sand.u32 %s145, 1
          %s687 = sand.u32 %s145, 1
          %s688 = smul.addr %s687, 24
          %s689 = scalar_lea.vmem [#allocation4], %s688
          %s690 = smul.u32 4, %s15
          %s691 = smul.addr %s690, 2
          %s692 = scalar_lea.vmem %s5, %s691
          // Predicated region
          $region79: #{forward.1} parent=77 // pred_check
            _
          $region80: #{forward.1} parent=77 // pred_check_branch
            %694 = sbr.rel (0) target = $region82
          $region81: #{forward.1} parent=77 // pred_region
            // Predicated region
            $region83: #{forward.1} parent=81 // pred_check
              _
            $region84: #{forward.1} parent=81 // pred_check_branch
              %696 = sbr.rel (0) target = $region86
            $region85: #{forward.1} parent=81 // pred_region
              // Predicated region
              $region98: #{forward.1} parent=85 // pred_check
                _
              $region99: #{forward.1} parent=85 // pred_check_branch
                %715 = sbr.rel (0) target = $region101
              $region100: #{forward.1} parent=85 // pred_region
                loop: start=0, step=1, limit=1
                $region102: #{forward.1} parent=100 // loop_pre_header
                  _
                $region103: #{forward.1} parent=100 // loop_header
                  %s717 = sphi 0, %s721
                  %p718 = scmp.ge.s32.totalorder %s717, 1
                  %s722 = sphi %s692, %s692
                  %s723 = sphi %s689, %s689
                $region104: #{forward.1} parent=100 // loop_header_branch
                  %720 = sbr.rel (%p718) target = $region108
                $region105: #{forward.1} parent=100 // loop_body
                  %v724 = vld [vmem:[%s722] sm:$0xff]
                  %725 = vst [vmem:[%s723] sm:$0xff] %v724
                  %v726 = vld [vmem:[%s722 + $0x10] sm:$0xff]
                  %727 = vst [vmem:[%s723 + $0x8] sm:$0xff] %v726
                  %v728 = vld [vmem:[%s722 + $0x20] sm:$0xff]
                  %729 = vst [vmem:[%s723 + $0x10] sm:$0xff] %v728
                $region106: #{forward.1} parent=100 // loop_footer
                  %s721 = sadd.s32 1, %s717
                $region107: #{forward.1} parent=100 // loop_footer_branch
                  %716 = sbr.rel target = $region103
                $region108: #{forward.1} parent=100 // loop_exit
                  _
              $region101: #{forward.1} parent=85 // pred_fallthru
                _
              // Predicated region
              $region109: #{forward.1} parent=85 // pred_check
                _
              $region110: #{forward.1} parent=85 // pred_check_branch
                %731 = sbr.rel target = $region112
              $region111: #{forward.1} parent=85 // pred_region
                _
              $region112: #{forward.1} parent=85 // pred_fallthru
                _
            $region86: #{forward.1} parent=81 // pred_fallthru
              _
            // Predicated region
            $region87: #{forward.1} parent=81 // pred_check
              _
            $region88: #{forward.1} parent=81 // pred_check_branch
              %698 = sbr.rel target = $region90
            $region89: #{forward.1} parent=81 // pred_region
              loop: start=0, step=1, limit=1
              $region91: #{forward.1} parent=89 // loop_pre_header
                _
              $region92: #{forward.1} parent=89 // loop_header
                %s701 = sphi 0, %s705
                %p702 = scmp.ge.s32.totalorder %s701, 1
                %s706 = sphi %s692, %s692
                %s707 = sphi %s689, %s689
              $region93: #{forward.1} parent=89 // loop_header_branch
                %704 = sbr.rel (%p702) target = $region97
              $region94: #{forward.1} parent=89 // loop_body
                %v708 = vld [vmem:[%s706] sm:$0xff]
                %709 = vst [vmem:[%s707] sm:$0xff] %v708
                %v710 = vld [vmem:[%s706 + $0x10] sm:$0xff]
                %711 = vst [vmem:[%s707 + $0x8] sm:$0xff] %v710
                %v712 = vld [vmem:[%s706 + $0x20] sm:$0xff]
                %713 = vst [vmem:[%s707 + $0x10] sm:$0xff] %v712
              $region95: #{forward.1} parent=89 // loop_footer
                %s705 = sadd.s32 1, %s701
              $region96: #{forward.1} parent=89 // loop_footer_branch
                %700 = sbr.rel target = $region92
              $region97: #{forward.1} parent=89 // loop_exit
                _
            $region90: #{forward.1} parent=81 // pred_fallthru
              _
          $region82: #{forward.1} parent=77 // pred_fallthru
            _
          %732 = vnop
        $region78: #{forward.1} parent=23 // pred_fallthru
          _
      $region24: #{forward.1} parent=5 // pred_fallthru
        _
      %p733 = scmp.le.s32.totalorder 1, %s15
      %p734 = scmp.lt.s32.totalorder %s15, 3
      %p735 = pnand %p733, %p734
      %p736 = pneg %p735
      // Predicated region
      $region113: #{forward.1} parent=5 // pred_check
        _
      $region114: #{forward.1} parent=5 // pred_check_branch
        %738 = sbr.rel (%p735) target = $region116
      $region115: #{forward.1} parent=5 // pred_region
        %s739 = ssub.s32 %s15, 1
        %s740 = sand.u32 %s96, 1
        %s741 = sand.u32 %s96, 1
        %s742 = smul.addr %s741, 1344
        %s743 = scalar_lea.vmem [#allocation2], %s742
        // Predicated region
        $region117: #{forward.1} parent=115 // pred_check
          %p744 = pneg %p109
        $region118: #{forward.1} parent=115 // pred_check_branch
          %746 = sbr.rel (%p744) target = $region120
        $region119: #{forward.1} parent=115 // pred_region
          _
        $region120: #{forward.1} parent=115 // pred_fallthru
          _
        %s747 = sand.u32 %s122, 1
        %s748 = sand.u32 %s122, 1
        %s749 = smul.addr %s748, 96
        %s750 = scalar_lea.vmem [#allocation3], %s749
        // Predicated region
        $region121: #{forward.1} parent=115 // pred_check
          %p751 = pneg %p135
        $region122: #{forward.1} parent=115 // pred_check_branch
          %753 = sbr.rel (%p751) target = $region124
        $region123: #{forward.1} parent=115 // pred_region
          _
        $region124: #{forward.1} parent=115 // pred_fallthru
          _
        %s754 = sand.u32 %s148, 1
        %s755 = sand.u32 %s148, 1
        %s756 = smul.addr %s755, 24
        %s757 = scalar_lea.vmem [#allocation4], %s756
        // Predicated region
        $region125: #{forward.1} parent=115 // pred_check
          %p758 = pneg %p161
        $region126: #{forward.1} parent=115 // pred_check_branch
          %760 = sbr.rel (%p758) target = $region128
        $region127: #{forward.1} parent=115 // pred_region
          _
        $region128: #{forward.1} parent=115 // pred_fallthru
          _
        %p761 = pneg %p36
        %p762 = pneg %p33
        %p763 = pneg %p57
        %p764 = pneg %p54
        %s765 = smul.u32 4, %s20
        %p766 = scmp.lt.s32.totalorder %s765, 7
        %s767 = scalar_select %p766, %s765, 7
        %s768 = smul.addr %s767, 4
        %s769 = scalar_lea.vmem %s2, %s768
        %p770 = pneg %p83
        %p771 = pneg %p80
        %s772 = sand.u32 %s96, 1
        %s773 = sand.u32 %s96, 1
        %s774 = smul.addr %s773, 1344
        %s775 = scalar_lea.vmem [#allocation2], %s774
        %p776 = pneg %p109
        %p777 = pneg %p106
        %s778 = sand.u32 %s122, 1
        %s779 = sand.u32 %s122, 1
        %s780 = smul.addr %s779, 96
        %s781 = scalar_lea.vmem [#allocation3], %s780
        %p782 = pneg %p135
        %p783 = pneg %p132
        %s784 = sand.u32 %s148, 1
        %s785 = sand.u32 %s148, 1
        %s786 = smul.addr %s785, 24
        %s787 = scalar_lea.vmem [#allocation4], %s786
        %p788 = pneg %p161
        %p789 = pneg %p158
        %p790 = pneg %p187
        %p791 = pneg %p184
        %s792 = sand.u32 %s174, 1
        %s793 = sand.u32 %s174, 1
        %s794 = smul.addr %s793, 24
        %s795 = scalar_lea.vmem [#allocation5], %s794
        %p796 = pneg %p213
        %p797 = pneg %p210
        %s798 = sand.u32 %s200, 1
        %s799 = sand.u32 %s200, 1
        %s800 = smul.addr %s799, 24
        %s801 = scalar_lea.vmem [#allocation6], %s800
        %p802 = pneg %p239
        %p803 = pneg %p236
        %s804 = sand.u32 %s226, 1
        %s805 = sand.u32 %s226, 1
        %s806 = smul.addr %s805, 24
        %s807 = scalar_lea.vmem [#allocation7], %s806
        %s808 = smul.u32 4, %s20
        %p809 = scmp.lt.s32.totalorder %s808, 7
        %s810 = scalar_select %p809, %s808, 7
        %s811 = smul.addr %s810, 4
        %s812 = scalar_lea.vmem %s2, %s811
        %s813 = smul.u32 4, %s20
        %s814 = smul.u32 4, %s20
        %s815 = smul.u32 4, %s20
        %s816 = smul.u32 4, %s20
        %s817 = smul.u32 4, %s20
        %s818 = smul.u32 4, %s20
        %s819 = smul.u32 4, %s20
        %v821 = vld [vmem:[%s0] sm:$0xf]
        %v822 = vld [vmem:[%s1] sm:$0xff]
        %v823 = vld [vmem:[%s1 + $0x8] sm:$0xff]
        %v824 = vld [vmem:[%s1 + $0x10] sm:$0xff]
        %v825 = vld [vmem:[%s750] sm:$0xff]
        %v826 = vld [vmem:[%s750 + $0x8] sm:$0xff]
        %v827 = vld [vmem:[%s750 + $0x10] sm:$0xff]
        %v828 = vld [vmem:[%s750 + $0x18] sm:$0xff]
        %v829 = vld [vmem:[%s750 + $0x20] sm:$0xff]
        %v830 = vld [vmem:[%s750 + $0x28] sm:$0xff]
        %v831 = vld [vmem:[%s750 + $0x30] sm:$0xff]
        %v832 = vld [vmem:[%s750 + $0x38] sm:$0xff]
        %v833 = vld [vmem:[%s750 + $0x40] sm:$0xff]
        %v834 = vld [vmem:[%s750 + $0x48] sm:$0xff]
        %v835 = vld [vmem:[%s750 + $0x50] sm:$0xff]
        %v836 = vld [vmem:[%s750 + $0x58] sm:$0xff]
        %v837 = vld [vmem:[%s812] sm:$0x77]
        %v838 = vld [vmem:[%s812 + $0x8] sm:$0x77]
        %vm839 = vcmask 195584
        %v841 = vsel %vm839, %v822, 0
        %v844 = vsel %vm839, %v823, 0
        %v847 = vsel %vm839, %v824, 0
        %v849 = vand.u32 %v826, 4294901760
        %850 = vmatprep.subr.mxu0 %v849
        %v851 = vand.u32 %v825, 4294901760
        %852 = vmatpush1.msra.mxu0 %v851
        %v853 = vand.u32 %v830, 4294901760
        %854 = vmatprep.subr.mxu0 %v853
        %v855 = vand.u32 %v829, 4294901760
        %856 = vmatpush1.msra.mxu0 %v855
        %v857 = vand.u32 %v834, 4294901760
        %858 = vmatprep.subr.mxu0 %v857
        %v859 = vand.u32 %v833, 4294901760
        %860 = vmatpush1.msra.mxu0 %v859
        %861 = vmatprep.subr.mxu0 0.0
        %862 = vmatpush1.msra.mxu0 0.0
        %863 = vmatprep.subr.mxu0 0.0
        %864 = vmatpush1.msra.mxu0 0.0
        %865 = vmatprep.subr.mxu0 0.0
        %866 = vmatpush1.msra.mxu0 0.0
        %867 = vmatprep.subr.mxu0 0.0
        %868 = vmatpush1.msra.mxu0 0.0
        %869 = vmatprep.subr.mxu0 0.0
        %870 = vmatpush1.msra.mxu0 0.0
        %871 = vmatprep.subr.mxu0 0.0
        %872 = vmatpush1.msra.mxu0 0.0
        %873 = vmatprep.subr.mxu0 0.0
        %874 = vmatpush1.msra.mxu0 0.0
        %875 = vmatprep.subr.mxu0 0.0
        %876 = vmatpush1.msra.mxu0 0.0
        %877 = vmatprep.subr.mxu0 0.0
        %878 = vmatpush1.msra.mxu0 0.0
        %879 = vmatprep.subr.mxu0 0.0
        %880 = vmatpush1.msra.mxu0 0.0
        %881 = vmatprep.subr.mxu0 0.0
        %882 = vmatpush1.msra.mxu0 0.0
        %883 = vmatprep.subr.mxu0 0.0
        %884 = vmatpush1.msra.mxu0 0.0
        %885 = vmatprep.subr.mxu0 0.0
        %886 = vmatpush1.msra.mxu0 0.0
        %887 = vmatprep.subr.mxu0 0.0
        %888 = vmatpush1.msra.mxu0 0.0
        %889 = vmatprep.subr.mxu0 0.0
        %890 = vmatpush1.msra.mxu0 0.0
        %891 = vmatprep.subr.mxu0 0.0
        %892 = vmatpush1.msra.mxu0 0.0
        %893 = vmatprep.subr.mxu0 0.0
        %894 = vmatpush1.msra.mxu0 0.0
        %895 = vmatprep.subr.mxu0 0.0
        %896 = vmatpush1.msra.mxu0 0.0
        %897 = vmatprep.subr.mxu0 0.0
        %898 = vmatpush1.msra.mxu0 0.0
        %899 = vmatprep.subr.mxu0 0.0
        %900 = vmatpush1.msra.mxu0 0.0
        %901 = vmatprep.subr.mxu0 0.0
        %902 = vmatpush1.msra.mxu0 0.0
        %903 = vmatprep.subr.mxu0 0.0
        %904 = vmatpush1.msra.mxu0 0.0
        %905 = vmatprep.subr.mxu0 0.0
        %906 = vmatpush1.msra.mxu0 0.0
        %907 = vmatprep.subr.mxu0 0.0
        %908 = vmatpush1.msra.mxu0 0.0
        %909 = vmatprep.subr.mxu0 0.0
        %910 = vmatpush1.msra.mxu0 0.0
        %911 = vmatprep.subr.mxu0 0.0
        %912 = vmatpush1.msra.mxu0 0.0
        %913 = vmatprep.subr.mxu0 0.0
        %914 = vmatpush1.msra.mxu0 0.0
        %915 = vmatprep.subr.mxu0 0.0
        %916 = vmatpush1.msra.mxu0 0.0
        %917 = vmatprep.subr.mxu0 0.0
        %918 = vmatpush1.msra.mxu0 0.0
        %919 = vmatprep.mubr.f32.mxu0 0.0
        %v920 = vand.u32 %v841, 4294901760
        %v921 = vsub.f32 %v841, %v920
        %v922 = vand.u32 %v921, 4294901760
        %v923 = vsub.f32 %v921, %v922
        %v924 = vand.u32 %v923, 4294901760
        %925 = vmatmul.mubr.f32.gmra.mrb[0].mxu0 %v924
        %v926 = vpop.f32.mrb[0].mxu0
        %v927 = vadd.f32 0.0, %v926
        %v928 = vpop.f32.mrb[0].mxu0
        %v929 = vadd.f32 0.0, %v928
        %930 = vmatprep.mubr.f32.mxu0 0.0
        %v931 = vand.u32 %v844, 4294901760
        %v932 = vsub.f32 %v844, %v931
        %v933 = vand.u32 %v932, 4294901760
        %v934 = vsub.f32 %v932, %v933
        %v935 = vand.u32 %v934, 4294901760
        %936 = vmatmul.mubr.f32.gmra.mrb[0].mxu0 %v935
        %v937 = vpop.f32.mrb[0].mxu0
        %v938 = vadd.f32 0.0, %v937
        %v939 = vpop.f32.mrb[0].mxu0
        %v940 = vadd.f32 0.0, %v939
        %941 = vmatprep.mubr.f32.mxu0 0.0
        %v942 = vand.u32 %v847, 4294901760
        %v943 = vsub.f32 %v847, %v942
        %v944 = vand.u32 %v943, 4294901760
        %v945 = vsub.f32 %v943, %v944
        %v946 = vand.u32 %v945, 4294901760
        %947 = vmatmul.mubr.f32.gmra.mrb[0].mxu0 %v946
        %v948 = vpop.f32.mrb[0].mxu0
        %v949 = vadd.f32 0.0, %v948
        %v950 = vpop.f32.mrb[0].mxu0
        %v951 = vadd.f32 0.0, %v950
        %952 = vdwg.mxu0
        %v953 = vand.u32 %v826, 4294901760
        %v954 = vsub.f32 %v826, %v953
        %v955 = vand.u32 %v954, 4294901760
        %v956 = vsub.f32 %v954, %v955
        %v957 = vand.u32 %v956, 4294901760
        %958 = vmatprep.subr.mxu0 %v957
        %v959 = vand.u32 %v825, 4294901760
        %v960 = vsub.f32 %v825, %v959
        %v961 = vand.u32 %v960, 4294901760
        %v962 = vsub.f32 %v960, %v961
        %v963 = vand.u32 %v962, 4294901760
        %964 = vmatpush1.msra.mxu0 %v963
        %v965 = vand.u32 %v830, 4294901760
        %v966 = vsub.f32 %v830, %v965
        %v967 = vand.u32 %v966, 4294901760
        %v968 = vsub.f32 %v966, %v967
        %v969 = vand.u32 %v968, 4294901760
        %970 = vmatprep.subr.mxu0 %v969
        %v971 = vand.u32 %v829, 4294901760
        %v972 = vsub.f32 %v829, %v971
        %v973 = vand.u32 %v972, 4294901760
        %v974 = vsub.f32 %v972, %v973
        %v975 = vand.u32 %v974, 4294901760
        %976 = vmatpush1.msra.mxu0 %v975
        %v977 = vand.u32 %v834, 4294901760
        %v978 = vsub.f32 %v834, %v977
        %v979 = vand.u32 %v978, 4294901760
        %v980 = vsub.f32 %v978, %v979
        %v981 = vand.u32 %v980, 4294901760
        %982 = vmatprep.subr.mxu0 %v981
        %v983 = vand.u32 %v833, 4294901760
        %v984 = vsub.f32 %v833, %v983
        %v985 = vand.u32 %v984, 4294901760
        %v986 = vsub.f32 %v984, %v985
        %v987 = vand.u32 %v986, 4294901760
        %988 = vmatpush1.msra.mxu0 %v987
        %989 = vmatprep.subr.mxu0 0.0
        %990 = vmatpush1.msra.mxu0 0.0
        %991 = vmatprep.subr.mxu0 0.0
        %992 = vmatpush1.msra.mxu0 0.0
        %993 = vmatprep.subr.mxu0 0.0
        %994 = vmatpush1.msra.mxu0 0.0
        %995 = vmatprep.subr.mxu0 0.0
        %996 = vmatpush1.msra.mxu0 0.0
        %997 = vmatprep.subr.mxu0 0.0
        %998 = vmatpush1.msra.mxu0 0.0
        %999 = vmatprep.subr.mxu0 0.0
        %1000 = vmatpush1.msra.mxu0 0.0
        %1001 = vmatprep.subr.mxu0 0.0
        %1002 = vmatpush1.msra.mxu0 0.0
        %1003 = vmatprep.subr.mxu0 0.0
        %1004 = vmatpush1.msra.mxu0 0.0
        %1005 = vmatprep.subr.mxu0 0.0
        %1006 = vmatpush1.msra.mxu0 0.0
        %1007 = vmatprep.subr.mxu0 0.0
        %1008 = vmatpush1.msra.mxu0 0.0
        %1009 = vmatprep.subr.mxu0 0.0
        %1010 = vmatpush1.msra.mxu0 0.0
        %1011 = vmatprep.subr.mxu0 0.0
        %1012 = vmatpush1.msra.mxu0 0.0
        %1013 = vmatprep.subr.mxu0 0.0
        %1014 = vmatpush1.msra.mxu0 0.0
        %1015 = vmatprep.subr.mxu0 0.0
        %1016 = vmatpush1.msra.mxu0 0.0
        %1017 = vmatprep.subr.mxu0 0.0
        %1018 = vmatpush1.msra.mxu0 0.0
        %1019 = vmatprep.subr.mxu0 0.0
        %1020 = vmatpush1.msra.mxu0 0.0
        %1021 = vmatprep.subr.mxu0 0.0
        %1022 = vmatpush1.msra.mxu0 0.0
        %1023 = vmatprep.subr.mxu0 0.0
        %1024 = vmatpush1.msra.mxu0 0.0
        %1025 = vmatprep.subr.mxu0 0.0
        %1026 = vmatpush1.msra.mxu0 0.0
        %1027 = vmatprep.subr.mxu0 0.0
        %1028 = vmatpush1.msra.mxu0 0.0
        %1029 = vmatprep.subr.mxu0 0.0
        %1030 = vmatpush1.msra.mxu0 0.0
        %1031 = vmatprep.subr.mxu0 0.0
        %1032 = vmatpush1.msra.mxu0 0.0
        %1033 = vmatprep.subr.mxu0 0.0
        %1034 = vmatpush1.msra.mxu0 0.0
        %1035 = vmatprep.subr.mxu0 0.0
        %1036 = vmatpush1.msra.mxu0 0.0
        %1037 = vmatprep.subr.mxu0 0.0
        %1038 = vmatpush1.msra.mxu0 0.0
        %1039 = vmatprep.subr.mxu0 0.0
        %1040 = vmatpush1.msra.mxu0 0.0
        %1041 = vmatprep.subr.mxu0 0.0
        %1042 = vmatpush1.msra.mxu0 0.0
        %1043 = vmatprep.subr.mxu0 0.0
        %1044 = vmatpush1.msra.mxu0 0.0
        %1045 = vmatprep.subr.mxu0 0.0
        %1046 = vmatpush1.msra.mxu0 0.0
        %1047 = vmatprep.mubr.f32.mxu0 0.0
        %v1048 = vand.u32 %v841, 4294901760
        %1049 = vmatmul.mubr.f32.gmra.mrb[0].mxu0 %v1048
        %v1050 = vpop.f32.mrb[0].mxu0
        %v1051 = vadd.f32 %v927, %v1050
        %v1052 = vpop.f32.mrb[0].mxu0
        %v1053 = vadd.f32 %v929, %v1052
        %1054 = vmatprep.mubr.f32.mxu0 0.0
        %v1055 = vand.u32 %v844, 4294901760
        %1056 = vmatmul.mubr.f32.gmra.mrb[0].mxu0 %v1055
        %v1057 = vpop.f32.mrb[0].mxu0
        %v1058 = vadd.f32 %v938, %v1057
        %v1059 = vpop.f32.mrb[0].mxu0
        %v1060 = vadd.f32 %v940, %v1059
        %1061 = vmatprep.mubr.f32.mxu0 0.0
        %v1062 = vand.u32 %v847, 4294901760
        %1063 = vmatmul.mubr.f32.gmra.mrb[0].mxu0 %v1062
        %v1064 = vpop.f32.mrb[0].mxu0
        %v1065 = vadd.f32 %v949, %v1064
        %v1066 = vpop.f32.mrb[0].mxu0
        %v1067 = vadd.f32 %v951, %v1066
        %1068 = vdwg.mxu0
        %v1069 = vand.u32 %v826, 4294901760
        %v1070 = vsub.f32 %v826, %v1069
        %1071 = vmatprep.subr.mxu0 %v1070
        %v1072 = vand.u32 %v825, 4294901760
        %v1073 = vsub.f32 %v825, %v1072
        %1074 = vmatpush1.msra.mxu0 %v1073
        %v1075 = vand.u32 %v830, 4294901760
        %v1076 = vsub.f32 %v830, %v1075
        %1077 = vmatprep.subr.mxu0 %v1076
        %v1078 = vand.u32 %v829, 4294901760
        %v1079 = vsub.f32 %v829, %v1078
        %1080 = vmatpush1.msra.mxu0 %v1079
        %v1081 = vand.u32 %v834, 4294901760
        %v1082 = vsub.f32 %v834, %v1081
        %1083 = vmatprep.subr.mxu0 %v1082
        %v1084 = vand.u32 %v833, 4294901760
        %v1085 = vsub.f32 %v833, %v1084
        %1086 = vmatpush1.msra.mxu0 %v1085
        %1087 = vmatprep.subr.mxu0 0.0
        %1088 = vmatpush1.msra.mxu0 0.0
        %1089 = vmatprep.subr.mxu0 0.0
        %1090 = vmatpush1.msra.mxu0 0.0
        %1091 = vmatprep.subr.mxu0 0.0
        %1092 = vmatpush1.msra.mxu0 0.0
        %1093 = vmatprep.subr.mxu0 0.0
        %1094 = vmatpush1.msra.mxu0 0.0
        %1095 = vmatprep.subr.mxu0 0.0
        %1096 = vmatpush1.msra.mxu0 0.0
        %1097 = vmatprep.subr.mxu0 0.0
        %1098 = vmatpush1.msra.mxu0 0.0
        %1099 = vmatprep.subr.mxu0 0.0
        %1100 = vmatpush1.msra.mxu0 0.0
        %1101 = vmatprep.subr.mxu0 0.0
        %1102 = vmatpush1.msra.mxu0 0.0
        %1103 = vmatprep.subr.mxu0 0.0
        %1104 = vmatpush1.msra.mxu0 0.0
        %1105 = vmatprep.subr.mxu0 0.0
        %1106 = vmatpush1.msra.mxu0 0.0
        %1107 = vmatprep.subr.mxu0 0.0
        %1108 = vmatpush1.msra.mxu0 0.0
        %1109 = vmatprep.subr.mxu0 0.0
        %1110 = vmatpush1.msra.mxu0 0.0
        %1111 = vmatprep.subr.mxu0 0.0
        %1112 = vmatpush1.msra.mxu0 0.0
        %1113 = vmatprep.subr.mxu0 0.0
        %1114 = vmatpush1.msra.mxu0 0.0
        %1115 = vmatprep.subr.mxu0 0.0
        %1116 = vmatpush1.msra.mxu0 0.0
        %1117 = vmatprep.subr.mxu0 0.0
        %1118 = vmatpush1.msra.mxu0 0.0
        %1119 = vmatprep.subr.mxu0 0.0
        %1120 = vmatpush1.msra.mxu0 0.0
        %1121 = vmatprep.subr.mxu0 0.0
        %1122 = vmatpush1.msra.mxu0 0.0
        %1123 = vmatprep.subr.mxu0 0.0
        %1124 = vmatpush1.msra.mxu0 0.0
        %1125 = vmatprep.subr.mxu0 0.0
        %1126 = vmatpush1.msra.mxu0 0.0
        %1127 = vmatprep.subr.mxu0 0.0
        %1128 = vmatpush1.msra.mxu0 0.0
        %1129 = vmatprep.subr.mxu0 0.0
        %1130 = vmatpush1.msra.mxu0 0.0
        %1131 = vmatprep.subr.mxu0 0.0
        %1132 = vmatpush1.msra.mxu0 0.0
        %1133 = vmatprep.subr.mxu0 0.0
        %1134 = vmatpush1.msra.mxu0 0.0
        %1135 = vmatprep.subr.mxu0 0.0
        %1136 = vmatpush1.msra.mxu0 0.0
        %1137 = vmatprep.subr.mxu0 0.0
        %1138 = vmatpush1.msra.mxu0 0.0
        %1139 = vmatprep.subr.mxu0 0.0
        %1140 = vmatpush1.msra.mxu0 0.0
        %1141 = vmatprep.subr.mxu0 0.0
        %1142 = vmatpush1.msra.mxu0 0.0
        %1143 = vmatprep.subr.mxu0 0.0
        %1144 = vmatpush1.msra.mxu0 0.0
        %1145 = vmatprep.mubr.f32.mxu0 0.0
        %v1146 = vand.u32 %v841, 4294901760
        %v1147 = vsub.f32 %v841, %v1146
        %1148 = vmatmul.mubr.f32.gmra.mrb[0].mxu0 %v1147
        %v1149 = vpop.f32.mrb[0].mxu0
        %v1150 = vadd.f32 %v1051, %v1149
        %v1151 = vpop.f32.mrb[0].mxu0
        %v1152 = vadd.f32 %v1053, %v1151
        %1153 = vmatprep.mubr.f32.mxu0 0.0
        %v1154 = vand.u32 %v844, 4294901760
        %v1155 = vsub.f32 %v844, %v1154
        %1156 = vmatmul.mubr.f32.gmra.mrb[0].mxu0 %v1155
        %v1157 = vpop.f32.mrb[0].mxu0
        %v1158 = vadd.f32 %v1058, %v1157
        %v1159 = vpop.f32.mrb[0].mxu0
        %v1160 = vadd.f32 %v1060, %v1159
        %1161 = vmatprep.mubr.f32.mxu0 0.0
        %v1162 = vand.u32 %v847, 4294901760
        %v1163 = vsub.f32 %v847, %v1162
        %1164 = vmatmul.mubr.f32.gmra.mrb[0].mxu0 %v1163
        %v1165 = vpop.f32.mrb[0].mxu0
        %v1166 = vadd.f32 %v1065, %v1165
        %v1167 = vpop.f32.mrb[0].mxu0
        %v1168 = vadd.f32 %v1067, %v1167
        %1169 = vdwg.mxu0
        %v1170 = vand.u32 %v826, 4294901760
        %1171 = vmatprep.subr.mxu0 %v1170
        %v1172 = vand.u32 %v825, 4294901760
        %1173 = vmatpush1.msra.mxu0 %v1172
        %v1174 = vand.u32 %v830, 4294901760
        %1175 = vmatprep.subr.mxu0 %v1174
        %v1176 = vand.u32 %v829, 4294901760
        %1177 = vmatpush1.msra.mxu0 %v1176
        %v1178 = vand.u32 %v834, 4294901760
        %1179 = vmatprep.subr.mxu0 %v1178
        %v1180 = vand.u32 %v833, 4294901760
        %1181 = vmatpush1.msra.mxu0 %v1180
        %1182 = vmatprep.subr.mxu0 0.0
        %1183 = vmatpush1.msra.mxu0 0.0
        %1184 = vmatprep.subr.mxu0 0.0
        %1185 = vmatpush1.msra.mxu0 0.0
        %1186 = vmatprep.subr.mxu0 0.0
        %1187 = vmatpush1.msra.mxu0 0.0
        %1188 = vmatprep.subr.mxu0 0.0
        %1189 = vmatpush1.msra.mxu0 0.0
        %1190 = vmatprep.subr.mxu0 0.0
        %1191 = vmatpush1.msra.mxu0 0.0
        %1192 = vmatprep.subr.mxu0 0.0
        %1193 = vmatpush1.msra.mxu0 0.0
        %1194 = vmatprep.subr.mxu0 0.0
        %1195 = vmatpush1.msra.mxu0 0.0
        %1196 = vmatprep.subr.mxu0 0.0
        %1197 = vmatpush1.msra.mxu0 0.0
        %1198 = vmatprep.subr.mxu0 0.0
        %1199 = vmatpush1.msra.mxu0 0.0
        %1200 = vmatprep.subr.mxu0 0.0
        %1201 = vmatpush1.msra.mxu0 0.0
        %1202 = vmatprep.subr.mxu0 0.0
        %1203 = vmatpush1.msra.mxu0 0.0
        %1204 = vmatprep.subr.mxu0 0.0
        %1205 = vmatpush1.msra.mxu0 0.0
        %1206 = vmatprep.subr.mxu0 0.0
        %1207 = vmatpush1.msra.mxu0 0.0
        %1208 = vmatprep.subr.mxu0 0.0
        %1209 = vmatpush1.msra.mxu0 0.0
        %1210 = vmatprep.subr.mxu0 0.0
        %1211 = vmatpush1.msra.mxu0 0.0
        %1212 = vmatprep.subr.mxu0 0.0
        %1213 = vmatpush1.msra.mxu0 0.0
        %1214 = vmatprep.subr.mxu0 0.0
        %1215 = vmatpush1.msra.mxu0 0.0
        %1216 = vmatprep.subr.mxu0 0.0
        %1217 = vmatpush1.msra.mxu0 0.0
        %1218 = vmatprep.subr.mxu0 0.0
        %1219 = vmatpush1.msra.mxu0 0.0
        %1220 = vmatprep.subr.mxu0 0.0
        %1221 = vmatpush1.msra.mxu0 0.0
        %1222 = vmatprep.subr.mxu0 0.0
        %1223 = vmatpush1.msra.mxu0 0.0
        %1224 = vmatprep.subr.mxu0 0.0
        %1225 = vmatpush1.msra.mxu0 0.0
        %1226 = vmatprep.subr.mxu0 0.0
        %1227 = vmatpush1.msra.mxu0 0.0
        %1228 = vmatprep.subr.mxu0 0.0
        %1229 = vmatpush1.msra.mxu0 0.0
        %1230 = vmatprep.subr.mxu0 0.0
        %1231 = vmatpush1.msra.mxu0 0.0
        %1232 = vmatprep.subr.mxu0 0.0
        %1233 = vmatpush1.msra.mxu0 0.0
        %1234 = vmatprep.subr.mxu0 0.0
        %1235 = vmatpush1.msra.mxu0 0.0
        %1236 = vmatprep.subr.mxu0 0.0
        %1237 = vmatpush1.msra.mxu0 0.0
        %1238 = vmatprep.subr.mxu0 0.0
        %1239 = vmatpush1.msra.mxu0 0.0
        %1240 = vmatprep.mubr.f32.mxu0 0.0
        %v1241 = vand.u32 %v841, 4294901760
        %v1242 = vsub.f32 %v841, %v1241
        %v1243 = vand.u32 %v1242, 4294901760
        %1244 = vmatmul.mubr.f32.gmra.mrb[0].mxu0 %v1243
        %v1245 = vpop.f32.mrb[0].mxu0
        %v1246 = vadd.f32 %v1150, %v1245
        %v1247 = vpop.f32.mrb[0].mxu0
        %v1248 = vadd.f32 %v1152, %v1247
        %1249 = vmatprep.mubr.f32.mxu0 0.0
        %v1250 = vand.u32 %v844, 4294901760
        %v1251 = vsub.f32 %v844, %v1250
        %v1252 = vand.u32 %v1251, 4294901760
        %1253 = vmatmul.mubr.f32.gmra.mrb[0].mxu0 %v1252
        %v1254 = vpop.f32.mrb[0].mxu0
        %v1255 = vadd.f32 %v1158, %v1254
        %v1256 = vpop.f32.mrb[0].mxu0
        %v1257 = vadd.f32 %v1160, %v1256
        %1258 = vmatprep.mubr.f32.mxu0 0.0
        %v1259 = vand.u32 %v847, 4294901760
        %v1260 = vsub.f32 %v847, %v1259
        %v1261 = vand.u32 %v1260, 4294901760
        %1262 = vmatmul.mubr.f32.gmra.mrb[0].mxu0 %v1261
        %v1263 = vpop.f32.mrb[0].mxu0
        %v1264 = vadd.f32 %v1166, %v1263
        %v1265 = vpop.f32.mrb[0].mxu0
        %v1266 = vadd.f32 %v1168, %v1265
        %1267 = vdwg.mxu0
        %v1268 = vand.u32 %v826, 4294901760
        %v1269 = vsub.f32 %v826, %v1268
        %v1270 = vand.u32 %v1269, 4294901760
        %1271 = vmatprep.subr.mxu0 %v1270
        %v1272 = vand.u32 %v825, 4294901760
        %v1273 = vsub.f32 %v825, %v1272
        %v1274 = vand.u32 %v1273, 4294901760
        %1275 = vmatpush1.msra.mxu0 %v1274
        %v1276 = vand.u32 %v830, 4294901760
        %v1277 = vsub.f32 %v830, %v1276
        %v1278 = vand.u32 %v1277, 4294901760
        %1279 = vmatprep.subr.mxu0 %v1278
        %v1280 = vand.u32 %v829, 4294901760
        %v1281 = vsub.f32 %v829, %v1280
        %v1282 = vand.u32 %v1281, 4294901760
        %1283 = vmatpush1.msra.mxu0 %v1282
        %v1284 = vand.u32 %v834, 4294901760
        %v1285 = vsub.f32 %v834, %v1284
        %v1286 = vand.u32 %v1285, 4294901760
        %1287 = vmatprep.subr.mxu0 %v1286
        %v1288 = vand.u32 %v833, 4294901760
        %v1289 = vsub.f32 %v833, %v1288
        %v1290 = vand.u32 %v1289, 4294901760
        %1291 = vmatpush1.msra.mxu0 %v1290
        %1292 = vmatprep.subr.mxu0 0.0
        %1293 = vmatpush1.msra.mxu0 0.0
        %1294 = vmatprep.subr.mxu0 0.0
        %1295 = vmatpush1.msra.mxu0 0.0
        %1296 = vmatprep.subr.mxu0 0.0
        %1297 = vmatpush1.msra.mxu0 0.0
        %1298 = vmatprep.subr.mxu0 0.0
        %1299 = vmatpush1.msra.mxu0 0.0
        %1300 = vmatprep.subr.mxu0 0.0
        %1301 = vmatpush1.msra.mxu0 0.0
        %1302 = vmatprep.subr.mxu0 0.0
        %1303 = vmatpush1.msra.mxu0 0.0
        %1304 = vmatprep.subr.mxu0 0.0
        %1305 = vmatpush1.msra.mxu0 0.0
        %1306 = vmatprep.subr.mxu0 0.0
        %1307 = vmatpush1.msra.mxu0 0.0
        %1308 = vmatprep.subr.mxu0 0.0
        %1309 = vmatpush1.msra.mxu0 0.0
        %1310 = vmatprep.subr.mxu0 0.0
        %1311 = vmatpush1.msra.mxu0 0.0
        %1312 = vmatprep.subr.mxu0 0.0
        %1313 = vmatpush1.msra.mxu0 0.0
        %1314 = vmatprep.subr.mxu0 0.0
        %1315 = vmatpush1.msra.mxu0 0.0
        %1316 = vmatprep.subr.mxu0 0.0
        %1317 = vmatpush1.msra.mxu0 0.0
        %1318 = vmatprep.subr.mxu0 0.0
        %1319 = vmatpush1.msra.mxu0 0.0
        %1320 = vmatprep.subr.mxu0 0.0
        %1321 = vmatpush1.msra.mxu0 0.0
        %1322 = vmatprep.subr.mxu0 0.0
        %1323 = vmatpush1.msra.mxu0 0.0
        %1324 = vmatprep.subr.mxu0 0.0
        %1325 = vmatpush1.msra.mxu0 0.0
        %1326 = vmatprep.subr.mxu0 0.0
        %1327 = vmatpush1.msra.mxu0 0.0
        %1328 = vmatprep.subr.mxu0 0.0
        %1329 = vmatpush1.msra.mxu0 0.0
        %1330 = vmatprep.subr.mxu0 0.0
        %1331 = vmatpush1.msra.mxu0 0.0
        %1332 = vmatprep.subr.mxu0 0.0
        %1333 = vmatpush1.msra.mxu0 0.0
        %1334 = vmatprep.subr.mxu0 0.0
        %1335 = vmatpush1.msra.mxu0 0.0
        %1336 = vmatprep.subr.mxu0 0.0
        %1337 = vmatpush1.msra.mxu0 0.0
        %1338 = vmatprep.subr.mxu0 0.0
        %1339 = vmatpush1.msra.mxu0 0.0
        %1340 = vmatprep.subr.mxu0 0.0
        %1341 = vmatpush1.msra.mxu0 0.0
        %1342 = vmatprep.subr.mxu0 0.0
        %1343 = vmatpush1.msra.mxu0 0.0
        %1344 = vmatprep.subr.mxu0 0.0
        %1345 = vmatpush1.msra.mxu0 0.0
        %1346 = vmatprep.subr.mxu0 0.0
        %1347 = vmatpush1.msra.mxu0 0.0
        %1348 = vmatprep.subr.mxu0 0.0
        %1349 = vmatpush1.msra.mxu0 0.0
        %1350 = vmatprep.mubr.f32.mxu0 0.0
        %v1351 = vand.u32 %v841, 4294901760
        %1352 = vmatmul.mubr.f32.gmra.mrb[0].mxu0 %v1351
        %v1353 = vpop.f32.mrb[0].mxu0
        %v1354 = vadd.f32 %v1246, %v1353
        %v1355 = vpop.f32.mrb[0].mxu0
        %v1356 = vadd.f32 %v1248, %v1355
        %1357 = vmatprep.mubr.f32.mxu0 0.0
        %v1358 = vand.u32 %v844, 4294901760
        %1359 = vmatmul.mubr.f32.gmra.mrb[0].mxu0 %v1358
        %v1360 = vpop.f32.mrb[0].mxu0
        %v1361 = vadd.f32 %v1255, %v1360
        %v1362 = vpop.f32.mrb[0].mxu0
        %v1363 = vadd.f32 %v1257, %v1362
        %1364 = vmatprep.mubr.f32.mxu0 0.0
        %v1365 = vand.u32 %v847, 4294901760
        %1366 = vmatmul.mubr.f32.gmra.mrb[0].mxu0 %v1365
        %v1367 = vpop.f32.mrb[0].mxu0
        %v1368 = vadd.f32 %v1264, %v1367
        %v1369 = vpop.f32.mrb[0].mxu0
        %v1370 = vadd.f32 %v1266, %v1369
        %1371 = vdwg.mxu0
        %v1372 = vand.u32 %v826, 4294901760
        %1373 = vmatprep.subr.mxu0 %v1372
        %v1374 = vand.u32 %v825, 4294901760
        %1375 = vmatpush1.msra.mxu0 %v1374
        %v1376 = vand.u32 %v830, 4294901760
        %1377 = vmatprep.subr.mxu0 %v1376
        %v1378 = vand.u32 %v829, 4294901760
        %1379 = vmatpush1.msra.mxu0 %v1378
        %v1380 = vand.u32 %v834, 4294901760
        %1381 = vmatprep.subr.mxu0 %v1380
        %v1382 = vand.u32 %v833, 4294901760
        %1383 = vmatpush1.msra.mxu0 %v1382
        %1384 = vmatprep.subr.mxu0 0.0
        %1385 = vmatpush1.msra.mxu0 0.0
        %1386 = vmatprep.subr.mxu0 0.0
        %1387 = vmatpush1.msra.mxu0 0.0
        %1388 = vmatprep.subr.mxu0 0.0
        %1389 = vmatpush1.msra.mxu0 0.0
        %1390 = vmatprep.subr.mxu0 0.0
        %1391 = vmatpush1.msra.mxu0 0.0
        %1392 = vmatprep.subr.mxu0 0.0
        %1393 = vmatpush1.msra.mxu0 0.0
        %1394 = vmatprep.subr.mxu0 0.0
        %1395 = vmatpush1.msra.mxu0 0.0
        %1396 = vmatprep.subr.mxu0 0.0
        %1397 = vmatpush1.msra.mxu0 0.0
        %1398 = vmatprep.subr.mxu0 0.0
        %1399 = vmatpush1.msra.mxu0 0.0
        %1400 = vmatprep.subr.mxu0 0.0
        %1401 = vmatpush1.msra.mxu0 0.0
        %1402 = vmatprep.subr.mxu0 0.0
        %1403 = vmatpush1.msra.mxu0 0.0
        %1404 = vmatprep.subr.mxu0 0.0
        %1405 = vmatpush1.msra.mxu0 0.0
        %1406 = vmatprep.subr.mxu0 0.0
        %1407 = vmatpush1.msra.mxu0 0.0
        %1408 = vmatprep.subr.mxu0 0.0
        %1409 = vmatpush1.msra.mxu0 0.0
        %1410 = vmatprep.subr.mxu0 0.0
        %1411 = vmatpush1.msra.mxu0 0.0
        %1412 = vmatprep.subr.mxu0 0.0
        %1413 = vmatpush1.msra.mxu0 0.0
        %1414 = vmatprep.subr.mxu0 0.0
        %1415 = vmatpush1.msra.mxu0 0.0
        %1416 = vmatprep.subr.mxu0 0.0
        %1417 = vmatpush1.msra.mxu0 0.0
        %1418 = vmatprep.subr.mxu0 0.0
        %1419 = vmatpush1.msra.mxu0 0.0
        %1420 = vmatprep.subr.mxu0 0.0
        %1421 = vmatpush1.msra.mxu0 0.0
        %1422 = vmatprep.subr.mxu0 0.0
        %1423 = vmatpush1.msra.mxu0 0.0
        %1424 = vmatprep.subr.mxu0 0.0
        %1425 = vmatpush1.msra.mxu0 0.0
        %1426 = vmatprep.subr.mxu0 0.0
        %1427 = vmatpush1.msra.mxu0 0.0
        %1428 = vmatprep.subr.mxu0 0.0
        %1429 = vmatpush1.msra.mxu0 0.0
        %1430 = vmatprep.subr.mxu0 0.0
        %1431 = vmatpush1.msra.mxu0 0.0
        %1432 = vmatprep.subr.mxu0 0.0
        %1433 = vmatpush1.msra.mxu0 0.0
        %1434 = vmatprep.subr.mxu0 0.0
        %1435 = vmatpush1.msra.mxu0 0.0
        %1436 = vmatprep.subr.mxu0 0.0
        %1437 = vmatpush1.msra.mxu0 0.0
        %1438 = vmatprep.subr.mxu0 0.0
        %1439 = vmatpush1.msra.mxu0 0.0
        %1440 = vmatprep.subr.mxu0 0.0
        %1441 = vmatpush1.msra.mxu0 0.0
        %1442 = vmatprep.mubr.f32.mxu0 0.0
        %v1443 = vand.u32 %v841, 4294901760
        %1444 = vmatmul.mubr.f32.gmra.mrb[0].mxu0 %v1443
        %v1445 = vpop.f32.mrb[0].mxu0
        %v1446 = vadd.f32 %v1354, %v1445
        %v1447 = vpop.f32.mrb[0].mxu0
        %v1448 = vadd.f32 %v1356, %v1447
        %1449 = vmatprep.mubr.f32.mxu0 0.0
        %v1450 = vand.u32 %v844, 4294901760
        %1451 = vmatmul.mubr.f32.gmra.mrb[0].mxu0 %v1450
        %v1452 = vpop.f32.mrb[0].mxu0
        %v1453 = vadd.f32 %v1361, %v1452
        %v1454 = vpop.f32.mrb[0].mxu0
        %v1455 = vadd.f32 %v1363, %v1454
        %1456 = vmatprep.mubr.f32.mxu0 0.0
        %v1457 = vand.u32 %v847, 4294901760
        %1458 = vmatmul.mubr.f32.gmra.mrb[0].mxu0 %v1457
        %v1459 = vpop.f32.mrb[0].mxu0
        %v1460 = vadd.f32 %v1368, %v1459
        %v1461 = vpop.f32.mrb[0].mxu0
        %v1462 = vadd.f32 %v1370, %v1461
        %1463 = vdwg.mxu0
        %v1464 = vand.u32 %v828, 4294901760
        %1465 = vmatprep.subr.mxu0 %v1464
        %v1466 = vand.u32 %v827, 4294901760
        %1467 = vmatpush1.msra.mxu0 %v1466
        %v1468 = vand.u32 %v832, 4294901760
        %1469 = vmatprep.subr.mxu0 %v1468
        %v1470 = vand.u32 %v831, 4294901760
        %1471 = vmatpush1.msra.mxu0 %v1470
        %v1472 = vand.u32 %v836, 4294901760
        %1473 = vmatprep.subr.mxu0 %v1472
        %v1474 = vand.u32 %v835, 4294901760
        %1475 = vmatpush1.msra.mxu0 %v1474
        %1476 = vmatprep.subr.mxu0 0.0
        %1477 = vmatpush1.msra.mxu0 0.0
        %1478 = vmatprep.subr.mxu0 0.0
        %1479 = vmatpush1.msra.mxu0 0.0
        %1480 = vmatprep.subr.mxu0 0.0
        %1481 = vmatpush1.msra.mxu0 0.0
        %1482 = vmatprep.subr.mxu0 0.0
        %1483 = vmatpush1.msra.mxu0 0.0
        %1484 = vmatprep.subr.mxu0 0.0
        %1485 = vmatpush1.msra.mxu0 0.0
        %1486 = vmatprep.subr.mxu0 0.0
        %1487 = vmatpush1.msra.mxu0 0.0
        %1488 = vmatprep.subr.mxu0 0.0
        %1489 = vmatpush1.msra.mxu0 0.0
        %1490 = vmatprep.subr.mxu0 0.0
        %1491 = vmatpush1.msra.mxu0 0.0
        %1492 = vmatprep.subr.mxu0 0.0
        %1493 = vmatpush1.msra.mxu0 0.0
        %1494 = vmatprep.subr.mxu0 0.0
        %1495 = vmatpush1.msra.mxu0 0.0
        %1496 = vmatprep.subr.mxu0 0.0
        %1497 = vmatpush1.msra.mxu0 0.0
        %1498 = vmatprep.subr.mxu0 0.0
        %1499 = vmatpush1.msra.mxu0 0.0
        %1500 = vmatprep.subr.mxu0 0.0
        %1501 = vmatpush1.msra.mxu0 0.0
        %1502 = vmatprep.subr.mxu0 0.0
        %1503 = vmatpush1.msra.mxu0 0.0
        %1504 = vmatprep.subr.mxu0 0.0
        %1505 = vmatpush1.msra.mxu0 0.0
        %1506 = vmatprep.subr.mxu0 0.0
        %1507 = vmatpush1.msra.mxu0 0.0
        %1508 = vmatprep.subr.mxu0 0.0
        %1509 = vmatpush1.msra.mxu0 0.0
        %1510 = vmatprep.subr.mxu0 0.0
        %1511 = vmatpush1.msra.mxu0 0.0
        %1512 = vmatprep.subr.mxu0 0.0
        %1513 = vmatpush1.msra.mxu0 0.0
        %1514 = vmatprep.subr.mxu0 0.0
        %1515 = vmatpush1.msra.mxu0 0.0
        %1516 = vmatprep.subr.mxu0 0.0
        %1517 = vmatpush1.msra.mxu0 0.0
        %1518 = vmatprep.subr.mxu0 0.0
        %1519 = vmatpush1.msra.mxu0 0.0
        %1520 = vmatprep.subr.mxu0 0.0
        %1521 = vmatpush1.msra.mxu0 0.0
        %1522 = vmatprep.subr.mxu0 0.0
        %1523 = vmatpush1.msra.mxu0 0.0
        %1524 = vmatprep.subr.mxu0 0.0
        %1525 = vmatpush1.msra.mxu0 0.0
        %1526 = vmatprep.subr.mxu0 0.0
        %1527 = vmatpush1.msra.mxu0 0.0
        %1528 = vmatprep.subr.mxu0 0.0
        %1529 = vmatpush1.msra.mxu0 0.0
        %1530 = vmatprep.subr.mxu0 0.0
        %1531 = vmatpush1.msra.mxu0 0.0
        %1532 = vmatprep.subr.mxu0 0.0
        %1533 = vmatpush1.msra.mxu0 0.0
        %1534 = vmatprep.mubr.f32.mxu0 0.0
        %v1535 = vand.u32 %v841, 4294901760
        %v1536 = vsub.f32 %v841, %v1535
        %v1537 = vand.u32 %v1536, 4294901760
        %v1538 = vsub.f32 %v1536, %v1537
        %v1539 = vand.u32 %v1538, 4294901760
        %1540 = vmatmul.mubr.f32.gmra.mrb[0].mxu0 %v1539
        %v1541 = vpop.f32.mrb[0].mxu0
        %v1542 = vadd.f32 0.0, %v1541
        %v1543 = vpop.f32.mrb[0].mxu0
        %v1544 = vadd.f32 0.0, %v1543
        %1545 = vmatprep.mubr.f32.mxu0 0.0
        %v1546 = vand.u32 %v844, 4294901760
        %v1547 = vsub.f32 %v844, %v1546
        %v1548 = vand.u32 %v1547, 4294901760
        %v1549 = vsub.f32 %v1547, %v1548
        %v1550 = vand.u32 %v1549, 4294901760
        %1551 = vmatmul.mubr.f32.gmra.mrb[0].mxu0 %v1550
        %v1552 = vpop.f32.mrb[0].mxu0
        %v1553 = vadd.f32 0.0, %v1552
        %v1554 = vpop.f32.mrb[0].mxu0
        %v1555 = vadd.f32 0.0, %v1554
        %1556 = vmatprep.mubr.f32.mxu0 0.0
        %v1557 = vand.u32 %v847, 4294901760
        %v1558 = vsub.f32 %v847, %v1557
        %v1559 = vand.u32 %v1558, 4294901760
        %v1560 = vsub.f32 %v1558, %v1559
        %v1561 = vand.u32 %v1560, 4294901760
        %1562 = vmatmul.mubr.f32.gmra.mrb[0].mxu0 %v1561
        %v1563 = vpop.f32.mrb[0].mxu0
        %v1564 = vadd.f32 0.0, %v1563
        %v1565 = vpop.f32.mrb[0].mxu0
        %v1566 = vadd.f32 0.0, %v1565
        %1567 = vdwg.mxu0
        %v1568 = vand.u32 %v828, 4294901760
        %v1569 = vsub.f32 %v828, %v1568
        %v1570 = vand.u32 %v1569, 4294901760
        %v1571 = vsub.f32 %v1569, %v1570
        %v1572 = vand.u32 %v1571, 4294901760
        %1573 = vmatprep.subr.mxu0 %v1572
        %v1574 = vand.u32 %v827, 4294901760
        %v1575 = vsub.f32 %v827, %v1574
        %v1576 = vand.u32 %v1575, 4294901760
        %v1577 = vsub.f32 %v1575, %v1576
        %v1578 = vand.u32 %v1577, 4294901760
        %1579 = vmatpush1.msra.mxu0 %v1578
        %v1580 = vand.u32 %v832, 4294901760
        %v1581 = vsub.f32 %v832, %v1580
        %v1582 = vand.u32 %v1581, 4294901760
        %v1583 = vsub.f32 %v1581, %v1582
        %v1584 = vand.u32 %v1583, 4294901760
        %1585 = vmatprep.subr.mxu0 %v1584
        %v1586 = vand.u32 %v831, 4294901760
        %v1587 = vsub.f32 %v831, %v1586
        %v1588 = vand.u32 %v1587, 4294901760
        %v1589 = vsub.f32 %v1587, %v1588
        %v1590 = vand.u32 %v1589, 4294901760
        %1591 = vmatpush1.msra.mxu0 %v1590
        %v1592 = vand.u32 %v836, 4294901760
        %v1593 = vsub.f32 %v836, %v1592
        %v1594 = vand.u32 %v1593, 4294901760
        %v1595 = vsub.f32 %v1593, %v1594
        %v1596 = vand.u32 %v1595, 4294901760
        %1597 = vmatprep.subr.mxu0 %v1596
        %v1598 = vand.u32 %v835, 4294901760
        %v1599 = vsub.f32 %v835, %v1598
        %v1600 = vand.u32 %v1599, 4294901760
        %v1601 = vsub.f32 %v1599, %v1600
        %v1602 = vand.u32 %v1601, 4294901760
        %1603 = vmatpush1.msra.mxu0 %v1602
        %1604 = vmatprep.subr.mxu0 0.0
        %1605 = vmatpush1.msra.mxu0 0.0
        %1606 = vmatprep.subr.mxu0 0.0
        %1607 = vmatpush1.msra.mxu0 0.0
        %1608 = vmatprep.subr.mxu0 0.0
        %1609 = vmatpush1.msra.mxu0 0.0
        %1610 = vmatprep.subr.mxu0 0.0
        %1611 = vmatpush1.msra.mxu0 0.0
        %1612 = vmatprep.subr.mxu0 0.0
        %1613 = vmatpush1.msra.mxu0 0.0
        %1614 = vmatprep.subr.mxu0 0.0
        %1615 = vmatpush1.msra.mxu0 0.0
        %1616 = vmatprep.subr.mxu0 0.0
        %1617 = vmatpush1.msra.mxu0 0.0
        %1618 = vmatprep.subr.mxu0 0.0
        %1619 = vmatpush1.msra.mxu0 0.0
        %1620 = vmatprep.subr.mxu0 0.0
        %1621 = vmatpush1.msra.mxu0 0.0
        %1622 = vmatprep.subr.mxu0 0.0
        %1623 = vmatpush1.msra.mxu0 0.0
        %1624 = vmatprep.subr.mxu0 0.0
        %1625 = vmatpush1.msra.mxu0 0.0
        %1626 = vmatprep.subr.mxu0 0.0
        %1627 = vmatpush1.msra.mxu0 0.0
        %1628 = vmatprep.subr.mxu0 0.0
        %1629 = vmatpush1.msra.mxu0 0.0
        %1630 = vmatprep.subr.mxu0 0.0
        %1631 = vmatpush1.msra.mxu0 0.0
        %1632 = vmatprep.subr.mxu0 0.0
        %1633 = vmatpush1.msra.mxu0 0.0
        %1634 = vmatprep.subr.mxu0 0.0
        %1635 = vmatpush1.msra.mxu0 0.0
        %1636 = vmatprep.subr.mxu0 0.0
        %1637 = vmatpush1.msra.mxu0 0.0
        %1638 = vmatprep.subr.mxu0 0.0
        %1639 = vmatpush1.msra.mxu0 0.0
        %1640 = vmatprep.subr.mxu0 0.0
        %1641 = vmatpush1.msra.mxu0 0.0
        %1642 = vmatprep.subr.mxu0 0.0
        %1643 = vmatpush1.msra.mxu0 0.0
        %1644 = vmatprep.subr.mxu0 0.0
        %1645 = vmatpush1.msra.mxu0 0.0
        %1646 = vmatprep.subr.mxu0 0.0
        %1647 = vmatpush1.msra.mxu0 0.0
        %1648 = vmatprep.subr.mxu0 0.0
        %1649 = vmatpush1.msra.mxu0 0.0
        %1650 = vmatprep.subr.mxu0 0.0
        %1651 = vmatpush1.msra.mxu0 0.0
        %1652 = vmatprep.subr.mxu0 0.0
        %1653 = vmatpush1.msra.mxu0 0.0
        %1654 = vmatprep.subr.mxu0 0.0
        %1655 = vmatpush1.msra.mxu0 0.0
        %1656 = vmatprep.subr.mxu0 0.0
        %1657 = vmatpush1.msra.mxu0 0.0
        %1658 = vmatprep.subr.mxu0 0.0
        %1659 = vmatpush1.msra.mxu0 0.0
        %1660 = vmatprep.subr.mxu0 0.0
        %1661 = vmatpush1.msra.mxu0 0.0
        %1662 = vmatprep.mubr.f32.mxu0 0.0
        %v1663 = vand.u32 %v841, 4294901760
        %1664 = vmatmul.mubr.f32.gmra.mrb[0].mxu0 %v1663
        %v1665 = vpop.f32.mrb[0].mxu0
        %v1666 = vadd.f32 %v1542, %v1665
        %v1667 = vpop.f32.mrb[0].mxu0
        %v1668 = vadd.f32 %v1544, %v1667
        %1669 = vmatprep.mubr.f32.mxu0 0.0
        %v1670 = vand.u32 %v844, 4294901760
        %1671 = vmatmul.mubr.f32.gmra.mrb[0].mxu0 %v1670
        %v1672 = vpop.f32.mrb[0].mxu0
        %v1673 = vadd.f32 %v1553, %v1672
        %v1674 = vpop.f32.mrb[0].mxu0
        %v1675 = vadd.f32 %v1555, %v1674
        %1676 = vmatprep.mubr.f32.mxu0 0.0
        %v1677 = vand.u32 %v847, 4294901760
        %1678 = vmatmul.mubr.f32.gmra.mrb[0].mxu0 %v1677
        %v1679 = vpop.f32.mrb[0].mxu0
        %v1680 = vadd.f32 %v1564, %v1679
        %v1681 = vpop.f32.mrb[0].mxu0
        %v1682 = vadd.f32 %v1566, %v1681
        %1683 = vdwg.mxu0
        %v1684 = vand.u32 %v828, 4294901760
        %v1685 = vsub.f32 %v828, %v1684
        %1686 = vmatprep.subr.mxu0 %v1685
        %v1687 = vand.u32 %v827, 4294901760
        %v1688 = vsub.f32 %v827, %v1687
        %1689 = vmatpush1.msra.mxu0 %v1688
        %v1690 = vand.u32 %v832, 4294901760
        %v1691 = vsub.f32 %v832, %v1690
        %1692 = vmatprep.subr.mxu0 %v1691
        %v1693 = vand.u32 %v831, 4294901760
        %v1694 = vsub.f32 %v831, %v1693
        %1695 = vmatpush1.msra.mxu0 %v1694
        %v1696 = vand.u32 %v836, 4294901760
        %v1697 = vsub.f32 %v836, %v1696
        %1698 = vmatprep.subr.mxu0 %v1697
        %v1699 = vand.u32 %v835, 4294901760
        %v1700 = vsub.f32 %v835, %v1699
        %1701 = vmatpush1.msra.mxu0 %v1700
        %1702 = vmatprep.subr.mxu0 0.0
        %1703 = vmatpush1.msra.mxu0 0.0
        %1704 = vmatprep.subr.mxu0 0.0
        %1705 = vmatpush1.msra.mxu0 0.0
        %1706 = vmatprep.subr.mxu0 0.0
        %1707 = vmatpush1.msra.mxu0 0.0
        %1708 = vmatprep.subr.mxu0 0.0
        %1709 = vmatpush1.msra.mxu0 0.0
        %1710 = vmatprep.subr.mxu0 0.0
        %1711 = vmatpush1.msra.mxu0 0.0
        %1712 = vmatprep.subr.mxu0 0.0
        %1713 = vmatpush1.msra.mxu0 0.0
        %1714 = vmatprep.subr.mxu0 0.0
        %1715 = vmatpush1.msra.mxu0 0.0
        %1716 = vmatprep.subr.mxu0 0.0
        %1717 = vmatpush1.msra.mxu0 0.0
        %1718 = vmatprep.subr.mxu0 0.0
        %1719 = vmatpush1.msra.mxu0 0.0
        %1720 = vmatprep.subr.mxu0 0.0
        %1721 = vmatpush1.msra.mxu0 0.0
        %1722 = vmatprep.subr.mxu0 0.0
        %1723 = vmatpush1.msra.mxu0 0.0
        %1724 = vmatprep.subr.mxu0 0.0
        %1725 = vmatpush1.msra.mxu0 0.0
        %1726 = vmatprep.subr.mxu0 0.0
        %1727 = vmatpush1.msra.mxu0 0.0
        %1728 = vmatprep.subr.mxu0 0.0
        %1729 = vmatpush1.msra.mxu0 0.0
        %1730 = vmatprep.subr.mxu0 0.0
        %1731 = vmatpush1.msra.mxu0 0.0
        %1732 = vmatprep.subr.mxu0 0.0
        %1733 = vmatpush1.msra.mxu0 0.0
        %1734 = vmatprep.subr.mxu0 0.0
        %1735 = vmatpush1.msra.mxu0 0.0
        %1736 = vmatprep.subr.mxu0 0.0
        %1737 = vmatpush1.msra.mxu0 0.0
        %1738 = vmatprep.subr.mxu0 0.0
        %1739 = vmatpush1.msra.mxu0 0.0
        %1740 = vmatprep.subr.mxu0 0.0
        %1741 = vmatpush1.msra.mxu0 0.0
        %1742 = vmatprep.subr.mxu0 0.0
        %1743 = vmatpush1.msra.mxu0 0.0
        %1744 = vmatprep.subr.mxu0 0.0
        %1745 = vmatpush1.msra.mxu0 0.0
        %1746 = vmatprep.subr.mxu0 0.0
        %1747 = vmatpush1.msra.mxu0 0.0
        %1748 = vmatprep.subr.mxu0 0.0
        %1749 = vmatpush1.msra.mxu0 0.0
        %1750 = vmatprep.subr.mxu0 0.0
        %1751 = vmatpush1.msra.mxu0 0.0
        %1752 = vmatprep.subr.mxu0 0.0
        %1753 = vmatpush1.msra.mxu0 0.0
        %1754 = vmatprep.subr.mxu0 0.0
        %1755 = vmatpush1.msra.mxu0 0.0
        %1756 = vmatprep.subr.mxu0 0.0
        %1757 = vmatpush1.msra.mxu0 0.0
        %1758 = vmatprep.subr.mxu0 0.0
        %1759 = vmatpush1.msra.mxu0 0.0
        %1760 = vmatprep.mubr.f32.mxu0 0.0
        %v1761 = vand.u32 %v841, 4294901760
        %v1762 = vsub.f32 %v841, %v1761
        %1763 = vmatmul.mubr.f32.gmra.mrb[0].mxu0 %v1762
        %v1764 = vpop.f32.mrb[0].mxu0
        %v1765 = vadd.f32 %v1666, %v1764
        %v1766 = vpop.f32.mrb[0].mxu0
        %v1767 = vadd.f32 %v1668, %v1766
        %1768 = vmatprep.mubr.f32.mxu0 0.0
        %v1769 = vand.u32 %v844, 4294901760
        %v1770 = vsub.f32 %v844, %v1769
        %1771 = vmatmul.mubr.f32.gmra.mrb[0].mxu0 %v1770
        %v1772 = vpop.f32.mrb[0].mxu0
        %v1773 = vadd.f32 %v1673, %v1772
        %v1774 = vpop.f32.mrb[0].mxu0
        %v1775 = vadd.f32 %v1675, %v1774
        %1776 = vmatprep.mubr.f32.mxu0 0.0
        %v1777 = vand.u32 %v847, 4294901760
        %v1778 = vsub.f32 %v847, %v1777
        %1779 = vmatmul.mubr.f32.gmra.mrb[0].mxu0 %v1778
        %v1780 = vpop.f32.mrb[0].mxu0
        %v1781 = vadd.f32 %v1680, %v1780
        %v1782 = vpop.f32.mrb[0].mxu0
        %v1783 = vadd.f32 %v1682, %v1782
        %1784 = vdwg.mxu0
        %v1785 = vand.u32 %v828, 4294901760
        %1786 = vmatprep.subr.mxu0 %v1785
        %v1787 = vand.u32 %v827, 4294901760
        %1788 = vmatpush1.msra.mxu0 %v1787
        %v1789 = vand.u32 %v832, 4294901760
        %1790 = vmatprep.subr.mxu0 %v1789
        %v1791 = vand.u32 %v831, 4294901760
        %1792 = vmatpush1.msra.mxu0 %v1791
        %v1793 = vand.u32 %v836, 4294901760
        %1794 = vmatprep.subr.mxu0 %v1793
        %v1795 = vand.u32 %v835, 4294901760
        %1796 = vmatpush1.msra.mxu0 %v1795
        %1797 = vmatprep.subr.mxu0 0.0
        %1798 = vmatpush1.msra.mxu0 0.0
        %1799 = vmatprep.subr.mxu0 0.0
        %1800 = vmatpush1.msra.mxu0 0.0
        %1801 = vmatprep.subr.mxu0 0.0
        %1802 = vmatpush1.msra.mxu0 0.0
        %1803 = vmatprep.subr.mxu0 0.0
        %1804 = vmatpush1.msra.mxu0 0.0
        %1805 = vmatprep.subr.mxu0 0.0
        %1806 = vmatpush1.msra.mxu0 0.0
        %1807 = vmatprep.subr.mxu0 0.0
        %1808 = vmatpush1.msra.mxu0 0.0
        %1809 = vmatprep.subr.mxu0 0.0
        %1810 = vmatpush1.msra.mxu0 0.0
        %1811 = vmatprep.subr.mxu0 0.0
        %1812 = vmatpush1.msra.mxu0 0.0
        %1813 = vmatprep.subr.mxu0 0.0
        %1814 = vmatpush1.msra.mxu0 0.0
        %1815 = vmatprep.subr.mxu0 0.0
        %1816 = vmatpush1.msra.mxu0 0.0
        %1817 = vmatprep.subr.mxu0 0.0
        %1818 = vmatpush1.msra.mxu0 0.0
        %1819 = vmatprep.subr.mxu0 0.0
        %1820 = vmatpush1.msra.mxu0 0.0
        %1821 = vmatprep.subr.mxu0 0.0
        %1822 = vmatpush1.msra.mxu0 0.0
        %1823 = vmatprep.subr.mxu0 0.0
        %1824 = vmatpush1.msra.mxu0 0.0
        %1825 = vmatprep.subr.mxu0 0.0
        %1826 = vmatpush1.msra.mxu0 0.0
        %1827 = vmatprep.subr.mxu0 0.0
        %1828 = vmatpush1.msra.mxu0 0.0
        %1829 = vmatprep.subr.mxu0 0.0
        %1830 = vmatpush1.msra.mxu0 0.0
        %1831 = vmatprep.subr.mxu0 0.0
        %1832 = vmatpush1.msra.mxu0 0.0
        %1833 = vmatprep.subr.mxu0 0.0
        %1834 = vmatpush1.msra.mxu0 0.0
        %1835 = vmatprep.subr.mxu0 0.0
        %1836 = vmatpush1.msra.mxu0 0.0
        %1837 = vmatprep.subr.mxu0 0.0
        %1838 = vmatpush1.msra.mxu0 0.0
        %1839 = vmatprep.subr.mxu0 0.0
        %1840 = vmatpush1.msra.mxu0 0.0
        %1841 = vmatprep.subr.mxu0 0.0
        %1842 = vmatpush1.msra.mxu0 0.0
        %1843 = vmatprep.subr.mxu0 0.0
        %1844 = vmatpush1.msra.mxu0 0.0
        %1845 = vmatprep.subr.mxu0 0.0
        %1846 = vmatpush1.msra.mxu0 0.0
        %1847 = vmatprep.subr.mxu0 0.0
        %1848 = vmatpush1.msra.mxu0 0.0
        %1849 = vmatprep.subr.mxu0 0.0
        %1850 = vmatpush1.msra.mxu0 0.0
        %1851 = vmatprep.subr.mxu0 0.0
        %1852 = vmatpush1.msra.mxu0 0.0
        %1853 = vmatprep.subr.mxu0 0.0
        %1854 = vmatpush1.msra.mxu0 0.0
        %1855 = vmatprep.mubr.f32.mxu0 0.0
        %v1856 = vand.u32 %v841, 4294901760
        %v1857 = vsub.f32 %v841, %v1856
        %v1858 = vand.u32 %v1857, 4294901760
        %1859 = vmatmul.mubr.f32.gmra.mrb[0].mxu0 %v1858
        %v1860 = vpop.f32.mrb[0].mxu0
        %v1861 = vadd.f32 %v1765, %v1860
        %v1862 = vpop.f32.mrb[0].mxu0
        %v1863 = vadd.f32 %v1767, %v1862
        %1864 = vmatprep.mubr.f32.mxu0 0.0
        %v1865 = vand.u32 %v844, 4294901760
        %v1866 = vsub.f32 %v844, %v1865
        %v1867 = vand.u32 %v1866, 4294901760
        %1868 = vmatmul.mubr.f32.gmra.mrb[0].mxu0 %v1867
        %v1869 = vpop.f32.mrb[0].mxu0
        %v1870 = vadd.f32 %v1773, %v1869
        %v1871 = vpop.f32.mrb[0].mxu0
        %v1872 = vadd.f32 %v1775, %v1871
        %1873 = vmatprep.mubr.f32.mxu0 0.0
        %v1874 = vand.u32 %v847, 4294901760
        %v1875 = vsub.f32 %v847, %v1874
        %v1876 = vand.u32 %v1875, 4294901760
        %1877 = vmatmul.mubr.f32.gmra.mrb[0].mxu0 %v1876
        %v1878 = vpop.f32.mrb[0].mxu0
        %v1879 = vadd.f32 %v1781, %v1878
        %v1880 = vpop.f32.mrb[0].mxu0
        %v1881 = vadd.f32 %v1783, %v1880
        %1882 = vdwg.mxu0
        %v1883 = vand.u32 %v828, 4294901760
        %v1884 = vsub.f32 %v828, %v1883
        %v1885 = vand.u32 %v1884, 4294901760
        %1886 = vmatprep.subr.mxu0 %v1885
        %v1887 = vand.u32 %v827, 4294901760
        %v1888 = vsub.f32 %v827, %v1887
        %v1889 = vand.u32 %v1888, 4294901760
        %1890 = vmatpush1.msra.mxu0 %v1889
        %v1891 = vand.u32 %v832, 4294901760
        %v1892 = vsub.f32 %v832, %v1891
        %v1893 = vand.u32 %v1892, 4294901760
        %1894 = vmatprep.subr.mxu0 %v1893
        %v1895 = vand.u32 %v831, 4294901760
        %v1896 = vsub.f32 %v831, %v1895
        %v1897 = vand.u32 %v1896, 4294901760
        %1898 = vmatpush1.msra.mxu0 %v1897
        %v1899 = vand.u32 %v836, 4294901760
        %v1900 = vsub.f32 %v836, %v1899
        %v1901 = vand.u32 %v1900, 4294901760
        %1902 = vmatprep.subr.mxu0 %v1901
        %v1903 = vand.u32 %v835, 4294901760
        %v1904 = vsub.f32 %v835, %v1903
        %v1905 = vand.u32 %v1904, 4294901760
        %1906 = vmatpush1.msra.mxu0 %v1905
        %1907 = vmatprep.subr.mxu0 0.0
        %1908 = vmatpush1.msra.mxu0 0.0
        %1909 = vmatprep.subr.mxu0 0.0
        %1910 = vmatpush1.msra.mxu0 0.0
        %1911 = vmatprep.subr.mxu0 0.0
        %1912 = vmatpush1.msra.mxu0 0.0
        %1913 = vmatprep.subr.mxu0 0.0
        %1914 = vmatpush1.msra.mxu0 0.0
        %1915 = vmatprep.subr.mxu0 0.0
        %1916 = vmatpush1.msra.mxu0 0.0
        %1917 = vmatprep.subr.mxu0 0.0
        %1918 = vmatpush1.msra.mxu0 0.0
        %1919 = vmatprep.subr.mxu0 0.0
        %1920 = vmatpush1.msra.mxu0 0.0
        %1921 = vmatprep.subr.mxu0 0.0
        %1922 = vmatpush1.msra.mxu0 0.0
        %1923 = vmatprep.subr.mxu0 0.0
        %1924 = vmatpush1.msra.mxu0 0.0
        %1925 = vmatprep.subr.mxu0 0.0
        %1926 = vmatpush1.msra.mxu0 0.0
        %1927 = vmatprep.subr.mxu0 0.0
        %1928 = vmatpush1.msra.mxu0 0.0
        %1929 = vmatprep.subr.mxu0 0.0
        %1930 = vmatpush1.msra.mxu0 0.0
        %1931 = vmatprep.subr.mxu0 0.0
        %1932 = vmatpush1.msra.mxu0 0.0
        %1933 = vmatprep.subr.mxu0 0.0
        %1934 = vmatpush1.msra.mxu0 0.0
        %1935 = vmatprep.subr.mxu0 0.0
        %1936 = vmatpush1.msra.mxu0 0.0
        %1937 = vmatprep.subr.mxu0 0.0
        %1938 = vmatpush1.msra.mxu0 0.0
        %1939 = vmatprep.subr.mxu0 0.0
        %1940 = vmatpush1.msra.mxu0 0.0
        %1941 = vmatprep.subr.mxu0 0.0
        %1942 = vmatpush1.msra.mxu0 0.0
        %1943 = vmatprep.subr.mxu0 0.0
        %1944 = vmatpush1.msra.mxu0 0.0
        %1945 = vmatprep.subr.mxu0 0.0
        %1946 = vmatpush1.msra.mxu0 0.0
        %1947 = vmatprep.subr.mxu0 0.0
        %1948 = vmatpush1.msra.mxu0 0.0
        %1949 = vmatprep.subr.mxu0 0.0
        %1950 = vmatpush1.msra.mxu0 0.0
        %1951 = vmatprep.subr.mxu0 0.0
        %1952 = vmatpush1.msra.mxu0 0.0
        %1953 = vmatprep.subr.mxu0 0.0
        %1954 = vmatpush1.msra.mxu0 0.0
        %1955 = vmatprep.subr.mxu0 0.0
        %1956 = vmatpush1.msra.mxu0 0.0
        %1957 = vmatprep.subr.mxu0 0.0
        %1958 = vmatpush1.msra.mxu0 0.0
        %1959 = vmatprep.subr.mxu0 0.0
        %1960 = vmatpush1.msra.mxu0 0.0
        %1961 = vmatprep.subr.mxu0 0.0
        %1962 = vmatpush1.msra.mxu0 0.0
        %1963 = vmatprep.subr.mxu0 0.0
        %1964 = vmatpush1.msra.mxu0 0.0
        %1965 = vmatprep.mubr.f32.mxu0 0.0
        %v1966 = vand.u32 %v841, 4294901760
        %1967 = vmatmul.mubr.f32.gmra.mrb[0].mxu0 %v1966
        %v1968 = vpop.f32.mrb[0].mxu0
        %v1969 = vadd.f32 %v1861, %v1968
        %v1970 = vpop.f32.mrb[0].mxu0
        %v1971 = vadd.f32 %v1863, %v1970
        %1972 = vmatprep.mubr.f32.mxu0 0.0
        %v1973 = vand.u32 %v844, 4294901760
        %1974 = vmatmul.mubr.f32.gmra.mrb[0].mxu0 %v1973
        %v1975 = vpop.f32.mrb[0].mxu0
        %v1976 = vadd.f32 %v1870, %v1975
        %v1977 = vpop.f32.mrb[0].mxu0
        %v1978 = vadd.f32 %v1872, %v1977
        %1979 = vmatprep.mubr.f32.mxu0 0.0
        %v1980 = vand.u32 %v847, 4294901760
        %1981 = vmatmul.mubr.f32.gmra.mrb[0].mxu0 %v1980
        %v1982 = vpop.f32.mrb[0].mxu0
        %v1983 = vadd.f32 %v1879, %v1982
        %v1984 = vpop.f32.mrb[0].mxu0
        %v1985 = vadd.f32 %v1881, %v1984
        %1986 = vdwg.mxu0
        %v1987 = vand.u32 %v828, 4294901760
        %1988 = vmatprep.subr.mxu0 %v1987
        %v1989 = vand.u32 %v827, 4294901760
        %1990 = vmatpush1.msra.mxu0 %v1989
        %v1991 = vand.u32 %v832, 4294901760
        %1992 = vmatprep.subr.mxu0 %v1991
        %v1993 = vand.u32 %v831, 4294901760
        %1994 = vmatpush1.msra.mxu0 %v1993
        %v1995 = vand.u32 %v836, 4294901760
        %1996 = vmatprep.subr.mxu0 %v1995
        %v1997 = vand.u32 %v835, 4294901760
        %1998 = vmatpush1.msra.mxu0 %v1997
        %1999 = vmatprep.subr.mxu0 0.0
        %2000 = vmatpush1.msra.mxu0 0.0
        %2001 = vmatprep.subr.mxu0 0.0
        %2002 = vmatpush1.msra.mxu0 0.0
        %2003 = vmatprep.subr.mxu0 0.0
        %2004 = vmatpush1.msra.mxu0 0.0
        %2005 = vmatprep.subr.mxu0 0.0
        %2006 = vmatpush1.msra.mxu0 0.0
        %2007 = vmatprep.subr.mxu0 0.0
        %2008 = vmatpush1.msra.mxu0 0.0
        %2009 = vmatprep.subr.mxu0 0.0
        %2010 = vmatpush1.msra.mxu0 0.0
        %2011 = vmatprep.subr.mxu0 0.0
        %2012 = vmatpush1.msra.mxu0 0.0
        %2013 = vmatprep.subr.mxu0 0.0
        %2014 = vmatpush1.msra.mxu0 0.0
        %2015 = vmatprep.subr.mxu0 0.0
        %2016 = vmatpush1.msra.mxu0 0.0
        %2017 = vmatprep.subr.mxu0 0.0
        %2018 = vmatpush1.msra.mxu0 0.0
        %2019 = vmatprep.subr.mxu0 0.0
        %2020 = vmatpush1.msra.mxu0 0.0
        %2021 = vmatprep.subr.mxu0 0.0
        %2022 = vmatpush1.msra.mxu0 0.0
        %2023 = vmatprep.subr.mxu0 0.0
        %2024 = vmatpush1.msra.mxu0 0.0
        %2025 = vmatprep.subr.mxu0 0.0
        %2026 = vmatpush1.msra.mxu0 0.0
        %2027 = vmatprep.subr.mxu0 0.0
        %2028 = vmatpush1.msra.mxu0 0.0
        %2029 = vmatprep.subr.mxu0 0.0
        %2030 = vmatpush1.msra.mxu0 0.0
        %2031 = vmatprep.subr.mxu0 0.0
        %2032 = vmatpush1.msra.mxu0 0.0
        %2033 = vmatprep.subr.mxu0 0.0
        %2034 = vmatpush1.msra.mxu0 0.0
        %2035 = vmatprep.subr.mxu0 0.0
        %2036 = vmatpush1.msra.mxu0 0.0
        %2037 = vmatprep.subr.mxu0 0.0
        %2038 = vmatpush1.msra.mxu0 0.0
        %2039 = vmatprep.subr.mxu0 0.0
        %2040 = vmatpush1.msra.mxu0 0.0
        %2041 = vmatprep.subr.mxu0 0.0
        %2042 = vmatpush1.msra.mxu0 0.0
        %2043 = vmatprep.subr.mxu0 0.0
        %2044 = vmatpush1.msra.mxu0 0.0
        %2045 = vmatprep.subr.mxu0 0.0
        %2046 = vmatpush1.msra.mxu0 0.0
        %2047 = vmatprep.subr.mxu0 0.0
        %2048 = vmatpush1.msra.mxu0 0.0
        %2049 = vmatprep.subr.mxu0 0.0
        %2050 = vmatpush1.msra.mxu0 0.0
        %2051 = vmatprep.subr.mxu0 0.0
        %2052 = vmatpush1.msra.mxu0 0.0
        %2053 = vmatprep.subr.mxu0 0.0
        %2054 = vmatpush1.msra.mxu0 0.0
        %2055 = vmatprep.subr.mxu0 0.0
        %2056 = vmatpush1.msra.mxu0 0.0
        %2057 = vmatprep.mubr.f32.mxu0 0.0
        %v2058 = vand.u32 %v841, 4294901760
        %2059 = vmatmul.mubr.f32.gmra.mrb[0].mxu0 %v2058
        %v2060 = vpop.f32.mrb[0].mxu0
        %v2061 = vadd.f32 %v1969, %v2060
        %v2062 = vpop.f32.mrb[0].mxu0
        %v2063 = vadd.f32 %v1971, %v2062
        %2064 = vmatprep.mubr.f32.mxu0 0.0
        %v2065 = vand.u32 %v844, 4294901760
        %2066 = vmatmul.mubr.f32.gmra.mrb[0].mxu0 %v2065
        %v2067 = vpop.f32.mrb[0].mxu0
        %v2068 = vadd.f32 %v1976, %v2067
        %v2069 = vpop.f32.mrb[0].mxu0
        %v2070 = vadd.f32 %v1978, %v2069
        %2071 = vmatprep.mubr.f32.mxu0 0.0
        %v2072 = vand.u32 %v847, 4294901760
        %2073 = vmatmul.mubr.f32.gmra.mrb[0].mxu0 %v2072
        %v2074 = vpop.f32.mrb[0].mxu0
        %v2075 = vadd.f32 %v1983, %v2074
        %v2076 = vpop.f32.mrb[0].mxu0
        %v2077 = vadd.f32 %v1985, %v2076
        %2078 = vdwg.mxu0
        %v2079 = vld [vmem:[%s743] sm:$0xff]
        %v2080 = vld [vmem:[%s743 + $0x8] sm:$0xff]
        %v2081 = vld [vmem:[%s743 + $0x10] sm:$0xff]
        %v2082 = vld [vmem:[%s743 + $0x18] sm:$0xff]
        %v2083 = vld [vmem:[%s743 + $0x20] sm:$0xff]
        %v2084 = vld [vmem:[%s743 + $0x28] sm:$0xff]
        %v2085 = vld [vmem:[%s743 + $0x30] sm:$0xff]
        %v2086 = vld [vmem:[%s743 + $0x38] sm:$0xff]
        %v2087 = vld [vmem:[%s743 + $0x40] sm:$0xff]
        %v2088 = vld [vmem:[%s743 + $0x48] sm:$0xff]
        %v2089 = vld [vmem:[%s743 + $0x50] sm:$0xff]
        %v2090 = vld [vmem:[%s743 + $0x58] sm:$0xff]
        %v2091 = vld [vmem:[%s743 + $0x60] sm:$0xff]
        %v2092 = vld [vmem:[%s743 + $0x68] sm:$0xff]
        %v2093 = vld [vmem:[%s743 + $0x70] sm:$0xff]
        %v2094 = vld [vmem:[%s743 + $0x78] sm:$0xff]
        %v2095 = vld [vmem:[%s743 + $0x80] sm:$0xff]
        %v2096 = vld [vmem:[%s743 + $0x88] sm:$0xff]
        %v2097 = vld [vmem:[%s743 + $0x90] sm:$0xff]
        %v2098 = vld [vmem:[%s743 + $0x98] sm:$0xff]
        %v2099 = vld [vmem:[%s743 + $0xa0] sm:$0xff]
        %v2100 = vld [vmem:[%s743 + $0xa8] sm:$0xff]
        %v2101 = vld [vmem:[%s743 + $0xb0] sm:$0xff]
        %v2102 = vld [vmem:[%s743 + $0xb8] sm:$0xff]
        %v2103 = vld [vmem:[%s743 + $0xc0] sm:$0xff]
        %v2104 = vld [vmem:[%s743 + $0xc8] sm:$0xff]
        %v2105 = vld [vmem:[%s743 + $0xd0] sm:$0xff]
        %v2106 = vld [vmem:[%s743 + $0xd8] sm:$0xff]
        %v2107 = vld [vmem:[%s743 + $0xe0] sm:$0xff]
        %v2108 = vld [vmem:[%s743 + $0xe8] sm:$0xff]
        %v2109 = vld [vmem:[%s743 + $0xf0] sm:$0xff]
        %v2110 = vld [vmem:[%s743 + $0xf8] sm:$0xff]
        %v2111 = vld [vmem:[%s743 + $0x100] sm:$0xff]
        %v2112 = vld [vmem:[%s743 + $0x108] sm:$0xff]
        %v2113 = vld [vmem:[%s743 + $0x110] sm:$0xff]
        %v2114 = vld [vmem:[%s743 + $0x118] sm:$0xff]
        %v2115 = vld [vmem:[%s743 + $0x120] sm:$0xff]
        %v2116 = vld [vmem:[%s743 + $0x128] sm:$0xff]
        %v2117 = vld [vmem:[%s743 + $0x130] sm:$0xff]
        %v2118 = vld [vmem:[%s743 + $0x138] sm:$0xff]
        %v2119 = vld [vmem:[%s743 + $0x140] sm:$0xff]
        %v2120 = vld [vmem:[%s743 + $0x148] sm:$0xff]
        %v2121 = vld [vmem:[%s743 + $0x150] sm:$0xff]
        %v2122 = vld [vmem:[%s743 + $0x158] sm:$0xff]
        %v2123 = vld [vmem:[%s743 + $0x160] sm:$0xff]
        %v2124 = vld [vmem:[%s743 + $0x168] sm:$0xff]
        %v2125 = vld [vmem:[%s743 + $0x170] sm:$0xff]
        %v2126 = vld [vmem:[%s743 + $0x178] sm:$0xff]
        %v2127 = vld [vmem:[%s743 + $0x180] sm:$0xff]
        %v2128 = vld [vmem:[%s743 + $0x188] sm:$0xff]
        %v2129 = vld [vmem:[%s743 + $0x190] sm:$0xff]
        %v2130 = vld [vmem:[%s743 + $0x198] sm:$0xff]
        %v2131 = vld [vmem:[%s743 + $0x1a0] sm:$0xff]
        %v2132 = vld [vmem:[%s743 + $0x1a8] sm:$0xff]
        %v2133 = vld [vmem:[%s743 + $0x1b0] sm:$0xff]
        %v2134 = vld [vmem:[%s743 + $0x1b8] sm:$0xff]
        %v2137 = vunpack.c.l.s4 1983009808
        %v2138 = vunpack.c.0.s8 %v2137
        %v2139 = vlaneseq
        %v2140 = vshrl.u32 %v2139, 7
        %v2141 = vsub.s32 %v2138, %v2140
        %v2142 = vrot.slane %v821, %v2141
        %v2143 = vcombine.high %v2142, %v2142
        %v2201 = vunpack.c.l.b16 %v2079
        %v2202 = vunpack.c.h.b16 %v2079
        %v2203 = vunpack.c.l.b16 %v2080
        %v2204 = vunpack.c.h.b16 %v2080
        %v2205 = vunpack.c.l.b16 %v2081
        %v2206 = vunpack.c.h.b16 %v2081
        %v2207 = vunpack.c.l.b16 %v2082
        %v2208 = vunpack.c.h.b16 %v2082
        %v2209 = vunpack.c.l.b16 %v2083
        %v2210 = vunpack.c.h.b16 %v2083
        %v2211 = vunpack.c.l.b16 %v2084
        %v2212 = vunpack.c.h.b16 %v2084
        %v2213 = vunpack.c.l.b16 %v2085
        %v2214 = vunpack.c.h.b16 %v2085
        %v2215 = vunpack.c.l.b16 %v2086
        %v2216 = vunpack.c.h.b16 %v2086
        %v2217 = vunpack.c.l.b16 %v2087
        %v2218 = vunpack.c.h.b16 %v2087
        %v2219 = vunpack.c.l.b16 %v2088
        %v2220 = vunpack.c.h.b16 %v2088
        %v2221 = vunpack.c.l.b16 %v2089
        %v2222 = vunpack.c.h.b16 %v2089
        %v2223 = vunpack.c.l.b16 %v2090
        %v2224 = vunpack.c.h.b16 %v2090
        %v2225 = vunpack.c.l.b16 %v2091
        %v2226 = vunpack.c.h.b16 %v2091
        %v2227 = vunpack.c.l.b16 %v2092
        %v2228 = vunpack.c.h.b16 %v2092
        %v2229 = vunpack.c.l.b16 %v2093
        %v2230 = vunpack.c.h.b16 %v2093
        %v2231 = vunpack.c.l.b16 %v2094
        %v2232 = vunpack.c.h.b16 %v2094
        %v2233 = vunpack.c.l.b16 %v2095
        %v2234 = vunpack.c.h.b16 %v2095
        %v2235 = vunpack.c.l.b16 %v2096
        %v2236 = vunpack.c.h.b16 %v2096
        %v2237 = vunpack.c.l.b16 %v2097
        %v2238 = vunpack.c.h.b16 %v2097
        %v2239 = vunpack.c.l.b16 %v2098
        %v2240 = vunpack.c.h.b16 %v2098
        %v2241 = vunpack.c.l.b16 %v2099
        %v2242 = vunpack.c.h.b16 %v2099
        %v2243 = vunpack.c.l.b16 %v2100
        %v2244 = vunpack.c.h.b16 %v2100
        %v2245 = vunpack.c.l.b16 %v2101
        %v2246 = vunpack.c.h.b16 %v2101
        %v2247 = vunpack.c.l.b16 %v2102
        %v2248 = vunpack.c.h.b16 %v2102
        %v2249 = vunpack.c.l.b16 %v2103
        %v2250 = vunpack.c.h.b16 %v2103
        %v2251 = vunpack.c.l.b16 %v2104
        %v2252 = vunpack.c.h.b16 %v2104
        %v2253 = vunpack.c.l.b16 %v2105
        %v2254 = vunpack.c.h.b16 %v2105
        %v2255 = vunpack.c.l.b16 %v2106
        %v2256 = vunpack.c.h.b16 %v2106
        %v2257 = vunpack.c.l.b16 %v2107
        %v2258 = vunpack.c.h.b16 %v2107
        %v2259 = vunpack.c.l.b16 %v2108
        %v2260 = vunpack.c.h.b16 %v2108
        %v2261 = vunpack.c.l.b16 %v2109
        %v2262 = vunpack.c.h.b16 %v2109
        %v2263 = vunpack.c.l.b16 %v2110
        %v2264 = vunpack.c.h.b16 %v2110
        %v2265 = vunpack.c.l.b16 %v2111
        %v2266 = vunpack.c.h.b16 %v2111
        %v2267 = vunpack.c.l.b16 %v2112
        %v2268 = vunpack.c.h.b16 %v2112
        %v2269 = vunpack.c.l.b16 %v2113
        %v2270 = vunpack.c.h.b16 %v2113
        %v2271 = vunpack.c.l.b16 %v2114
        %v2272 = vunpack.c.h.b16 %v2114
        %v2273 = vunpack.c.l.b16 %v2115
        %v2274 = vunpack.c.h.b16 %v2115
        %v2275 = vunpack.c.l.b16 %v2116
        %v2276 = vunpack.c.h.b16 %v2116
        %v2277 = vunpack.c.l.b16 %v2117
        %v2278 = vunpack.c.h.b16 %v2117
        %v2279 = vunpack.c.l.b16 %v2118
        %v2280 = vunpack.c.h.b16 %v2118
        %v2281 = vunpack.c.l.b16 %v2119
        %v2282 = vunpack.c.h.b16 %v2119
        %v2283 = vunpack.c.l.b16 %v2120
        %v2284 = vunpack.c.h.b16 %v2120
        %v2285 = vunpack.c.l.b16 %v2121
        %v2286 = vunpack.c.h.b16 %v2121
        %v2287 = vunpack.c.l.b16 %v2122
        %v2288 = vunpack.c.h.b16 %v2122
        %v2289 = vunpack.c.l.b16 %v2123
        %v2290 = vunpack.c.h.b16 %v2123
        %v2291 = vunpack.c.l.b16 %v2124
        %v2292 = vunpack.c.h.b16 %v2124
        %v2293 = vunpack.c.l.b16 %v2125
        %v2294 = vunpack.c.h.b16 %v2125
        %v2295 = vunpack.c.l.b16 %v2126
        %v2296 = vunpack.c.h.b16 %v2126
        %v2297 = vunpack.c.l.b16 %v2127
        %v2298 = vunpack.c.h.b16 %v2127
        %v2299 = vunpack.c.l.b16 %v2128
        %v2300 = vunpack.c.h.b16 %v2128
        %v2301 = vunpack.c.l.b16 %v2129
        %v2302 = vunpack.c.h.b16 %v2129
        %v2303 = vunpack.c.l.b16 %v2130
        %v2304 = vunpack.c.h.b16 %v2130
        %v2305 = vunpack.c.l.b16 %v2131
        %v2306 = vunpack.c.h.b16 %v2131
        %v2307 = vunpack.c.l.b16 %v2132
        %v2308 = vunpack.c.h.b16 %v2132
        %v2309 = vunpack.c.l.b16 %v2133
        %v2310 = vunpack.c.h.b16 %v2133
        %v2311 = vunpack.c.l.b16 %v2134
        %v2312 = vunpack.c.h.b16 %v2134
        %v2313 = vpack.c.b16 %v2205, %v2201
        %v2314 = vpack.c.b16 %v2206, %v2202
        %v2315 = vpack.c.b16 %v2207, %v2203
        %v2316 = vpack.c.b16 %v2208, %v2204
        %v2317 = vpack.c.b16 %v2213, %v2209
        %v2318 = vpack.c.b16 %v2214, %v2210
        %v2319 = vpack.c.b16 %v2215, %v2211
        %v2320 = vpack.c.b16 %v2216, %v2212
        %v2321 = vpack.c.b16 %v2221, %v2217
        %v2322 = vpack.c.b16 %v2222, %v2218
        %v2323 = vpack.c.b16 %v2223, %v2219
        %v2324 = vpack.c.b16 %v2224, %v2220
        %v2325 = vpack.c.b16 %v2229, %v2225
        %v2326 = vpack.c.b16 %v2230, %v2226
        %v2327 = vpack.c.b16 %v2231, %v2227
        %v2328 = vpack.c.b16 %v2232, %v2228
        %v2329 = vpack.c.b16 %v2237, %v2233
        %v2330 = vpack.c.b16 %v2238, %v2234
        %v2331 = vpack.c.b16 %v2239, %v2235
        %v2332 = vpack.c.b16 %v2240, %v2236
        %v2333 = vpack.c.b16 %v2245, %v2241
        %v2334 = vpack.c.b16 %v2246, %v2242
        %v2335 = vpack.c.b16 %v2247, %v2243
        %v2336 = vpack.c.b16 %v2248, %v2244
        %v2337 = vpack.c.b16 %v2253, %v2249
        %v2338 = vpack.c.b16 %v2254, %v2250
        %v2339 = vpack.c.b16 %v2255, %v2251
        %v2340 = vpack.c.b16 %v2256, %v2252
        %v2341 = vpack.c.b16 %v2261, %v2257
        %v2342 = vpack.c.b16 %v2262, %v2258
        %v2343 = vpack.c.b16 %v2263, %v2259
        %v2344 = vpack.c.b16 %v2264, %v2260
        %v2345 = vpack.c.b16 %v2269, %v2265
        %v2346 = vpack.c.b16 %v2270, %v2266
        %v2347 = vpack.c.b16 %v2271, %v2267
        %v2348 = vpack.c.b16 %v2272, %v2268
        %v2349 = vpack.c.b16 %v2277, %v2273
        %v2350 = vpack.c.b16 %v2278, %v2274
        %v2351 = vpack.c.b16 %v2279, %v2275
        %v2352 = vpack.c.b16 %v2280, %v2276
        %v2353 = vpack.c.b16 %v2285, %v2281
        %v2354 = vpack.c.b16 %v2286, %v2282
        %v2355 = vpack.c.b16 %v2287, %v2283
        %v2356 = vpack.c.b16 %v2288, %v2284
        %v2357 = vpack.c.b16 %v2293, %v2289
        %v2358 = vpack.c.b16 %v2294, %v2290
        %v2359 = vpack.c.b16 %v2295, %v2291
        %v2360 = vpack.c.b16 %v2296, %v2292
        %v2361 = vpack.c.b16 %v2301, %v2297
        %v2362 = vpack.c.b16 %v2302, %v2298
        %v2363 = vpack.c.b16 %v2303, %v2299
        %v2364 = vpack.c.b16 %v2304, %v2300
        %v2365 = vpack.c.b16 %v2309, %v2305
        %v2366 = vpack.c.b16 %v2310, %v2306
        %v2367 = vpack.c.b16 %v2311, %v2307
        %v2368 = vpack.c.b16 %v2312, %v2308
        %vm2425 = vcmask 785408
        %v2427 = vsel %vm2425, %v2143, 0
        %2429 = vmatprep.subr.bf16.mxu0 %v2314
        %2430 = vmatpush1.bf16.msra.mxu0 %v2313
        %2431 = vmatprep.subr.bf16.mxu0 %v2318
        %2432 = vmatpush1.bf16.msra.mxu0 %v2317
        %2433 = vmatprep.subr.bf16.mxu0 %v2322
        %2434 = vmatpush1.bf16.msra.mxu0 %v2321
        %2435 = vmatprep.subr.bf16.mxu0 %v2326
        %2436 = vmatpush1.bf16.msra.mxu0 %v2325
        %2437 = vmatprep.subr.bf16.mxu0 %v2330
        %2438 = vmatpush1.bf16.msra.mxu0 %v2329
        %2439 = vmatprep.subr.bf16.mxu0 %v2334
        %2440 = vmatpush1.bf16.msra.mxu0 %v2333
        %2441 = vmatprep.subr.bf16.mxu0 %v2338
        %2442 = vmatpush1.bf16.msra.mxu0 %v2337
        %2443 = vmatprep.subr.bf16.mxu0 %v2342
        %2444 = vmatpush1.bf16.msra.mxu0 %v2341
        %2445 = vmatprep.subr.bf16.mxu0 %v2346
        %2446 = vmatpush1.bf16.msra.mxu0 %v2345
        %2447 = vmatprep.subr.bf16.mxu0 %v2350
        %2448 = vmatpush1.bf16.msra.mxu0 %v2349
        %2449 = vmatprep.subr.bf16.mxu0 %v2354
        %2450 = vmatpush1.bf16.msra.mxu0 %v2353
        %2451 = vmatprep.subr.bf16.mxu0 %v2358
        %2452 = vmatpush1.bf16.msra.mxu0 %v2357
        %2453 = vmatprep.subr.bf16.mxu0 %v2362
        %2454 = vmatpush1.bf16.msra.mxu0 %v2361
        %2455 = vmatprep.subr.bf16.mxu0 %v2366
        %2456 = vmatpush1.bf16.msra.mxu0 %v2365
        %2457 = vmatprep.subr.bf16.mxu0 0
        %2458 = vmatpush1.bf16.msra.mxu0 0
        %2459 = vmatprep.subr.bf16.mxu0 0
        %2460 = vmatpush1.bf16.msra.mxu0 0
        %2461 = vmatprep.mubr.bf16.mxu0 %v2427
        %2462 = vmatmul.mubr.bf16.gmra.mrb[0].mxu0 %v2142
        %v2463 = vpop.f32.mrb[0].mxu0
        %v2464 = vadd.f32 0.0, %v2463
        %v2465 = vpop.f32.mrb[0].mxu0
        %v2466 = vadd.f32 0.0, %v2465
        %v2467 = vpop.f32.mrb[0].mxu0
        %v2468 = vpop.f32.mrb[0].mxu0
        %2469 = vdwg.mxu0
        %2470 = vmatprep.subr.bf16.mxu0 %v2316
        %2471 = vmatpush1.bf16.msra.mxu0 %v2315
        %2472 = vmatprep.subr.bf16.mxu0 %v2320
        %2473 = vmatpush1.bf16.msra.mxu0 %v2319
        %2474 = vmatprep.subr.bf16.mxu0 %v2324
        %2475 = vmatpush1.bf16.msra.mxu0 %v2323
        %2476 = vmatprep.subr.bf16.mxu0 %v2328
        %2477 = vmatpush1.bf16.msra.mxu0 %v2327
        %2478 = vmatprep.subr.bf16.mxu0 %v2332
        %2479 = vmatpush1.bf16.msra.mxu0 %v2331
        %2480 = vmatprep.subr.bf16.mxu0 %v2336
        %2481 = vmatpush1.bf16.msra.mxu0 %v2335
        %2482 = vmatprep.subr.bf16.mxu0 %v2340
        %2483 = vmatpush1.bf16.msra.mxu0 %v2339
        %2484 = vmatprep.subr.bf16.mxu0 %v2344
        %2485 = vmatpush1.bf16.msra.mxu0 %v2343
        %2486 = vmatprep.subr.bf16.mxu0 %v2348
        %2487 = vmatpush1.bf16.msra.mxu0 %v2347
        %2488 = vmatprep.subr.bf16.mxu0 %v2352
        %2489 = vmatpush1.bf16.msra.mxu0 %v2351
        %2490 = vmatprep.subr.bf16.mxu0 %v2356
        %2491 = vmatpush1.bf16.msra.mxu0 %v2355
        %2492 = vmatprep.subr.bf16.mxu0 %v2360
        %2493 = vmatpush1.bf16.msra.mxu0 %v2359
        %2494 = vmatprep.subr.bf16.mxu0 %v2364
        %2495 = vmatpush1.bf16.msra.mxu0 %v2363
        %2496 = vmatprep.subr.bf16.mxu0 %v2368
        %2497 = vmatpush1.bf16.msra.mxu0 %v2367
        %2498 = vmatprep.subr.bf16.mxu0 0
        %2499 = vmatpush1.bf16.msra.mxu0 0
        %2500 = vmatprep.subr.bf16.mxu0 0
        %2501 = vmatpush1.bf16.msra.mxu0 0
        %2502 = vmatprep.mubr.bf16.mxu0 %v2427
        %2503 = vmatmul.mubr.bf16.gmra.mrb[0].mxu0 %v2142
        %v2504 = vpop.f32.mrb[0].mxu0
        %v2505 = vadd.f32 0.0, %v2504
        %v2506 = vpop.f32.mrb[0].mxu0
        %v2507 = vadd.f32 0.0, %v2506
        %v2508 = vpop.f32.mrb[0].mxu0
        %v2509 = vpop.f32.mrb[0].mxu0
        %2510 = vdwg.mxu0
        %v2511 = vld [vmem:[%s757] sm:$0xff]
        %v2514 = vlaneseq
        %v2515 = vshrl.u32 %v2514, 7
        %v2516 = vsub.s32 0, %v2515
        %v2517 = vrot.slane %v837, %v2516
        %v2518 = vlaneseq
        %v2519 = vshrl.u32 %v2518, 7
        %v2520 = vsub.s32 4, %v2519
        %v2521 = vrot.slane %v837, %v2520
        %v2522 = vlaneseq
        %v2523 = vshrl.u32 %v2522, 7
        %v2524 = vsub.s32 0, %v2523
        %v2525 = vrot.slane %v838, %v2524
        %v2526 = vlaneseq
        %v2527 = vshrl.u32 %v2526, 7
        %v2528 = vsub.s32 4, %v2527
        %v2529 = vrot.slane %v838, %v2528
        %v2534 = vlaneseq
        %v2535 = vshrl.u32 %v2534, 7
        %v2536 = vsub.s32 0, %v2535
        %v2537 = vrot.slane %v2517, %v2536
        %v2538 = vlaneseq
        %v2539 = vshrl.u32 %v2538, 7
        %v2540 = vsub.s32 0, %v2539
        %v2541 = vrot.slane %v2521, %v2540
        %v2542 = vlaneseq
        %v2543 = vshrl.u32 %v2542, 7
        %v2544 = vsub.s32 0, %v2543
        %v2545 = vrot.slane %v2525, %v2544
        %v2546 = vlaneseq
        %v2547 = vshrl.u32 %v2546, 7
        %v2548 = vsub.s32 0, %v2547
        %v2549 = vrot.slane %v2529, %v2548
        %v2550 = vadd.f32 %v2464, %v2537
        %v2551 = vadd.f32 %v2466, %v2541
        %v2552 = vadd.f32 %v2505, %v2545
        %v2553 = vadd.f32 %v2507, %v2549
        %v2558 = vcombine.low %v2550, %v2551
        %v2559 = vcombine.low %v2552, %v2553
        %v2561 = vunpack.c.l.s4 1983009808
        %v2562 = vunpack.c.0.s8 %v2561
        %v2563 = vlaneseq
        %v2564 = vshrl.u32 %v2563, 7
        %v2565 = vsub.s32 %v2562, %v2564
        %v2566 = vrot.slane %v2558, %v2565
        %v2568 = vunpack.c.l.s4 1983009808
        %v2569 = vunpack.c.0.s8 %v2568
        %v2570 = vlaneseq
        %v2571 = vshrl.u32 %v2570, 7
        %v2572 = vsub.s32 %v2569, %v2571
        %v2573 = vrot.slane %v2559, %v2572
        %v2574 = vcombine.high %v2566, %v2573
        %2576 = vst [vmem:[%s801] sm:$0xff] %v2574
        %v2578 = vcombine.low %v2511, %v2511
        %v2580 = vunpack.c.l.s4 1983009808
        %v2581 = vunpack.c.0.s8 %v2580
        %v2582 = vlaneseq
        %v2583 = vshrl.u32 %v2582, 7
        %v2584 = vsub.s32 %v2581, %v2583
        %v2585 = vrot.slane %v2578, %v2584
        %v2587 = vunpack.c.l.s4 1983009808
        %v2588 = vunpack.c.0.s8 %v2587
        %v2589 = vlaneseq
        %v2590 = vshrl.u32 %v2589, 7
        %v2591 = vsub.s32 %v2588, %v2590
        %v2592 = vrot.slane %v2511, %v2591
        %v2593 = vcombine.high %v2585, %v2585
        %v2594 = vcombine.high %v2592, %v2592
        %v2599 = vadd.f32 %v2550, %v2585
        %v2600 = vadd.f32 %v2551, %v2593
        %v2601 = vadd.f32 %v2552, %v2592
        %v2602 = vadd.f32 %v2553, %v2594
        %v2607 = vcombine.low %v2599, %v2600
        %v2608 = vcombine.low %v2601, %v2602
        %v2610 = vunpack.c.l.s4 1983009808
        %v2611 = vunpack.c.0.s8 %v2610
        %v2612 = vlaneseq
        %v2613 = vshrl.u32 %v2612, 7
        %v2614 = vsub.s32 %v2611, %v2613
        %v2615 = vrot.slane %v2607, %v2614
        %v2617 = vunpack.c.l.s4 1983009808
        %v2618 = vunpack.c.0.s8 %v2617
        %v2619 = vlaneseq
        %v2620 = vshrl.u32 %v2619, 7
        %v2621 = vsub.s32 %v2618, %v2620
        %v2622 = vrot.slane %v2608, %v2621
        %v2623 = vcombine.high %v2615, %v2622
        %2625 = vst [vmem:[%s807] sm:$0xff] %v2623
        %v2626 = vcombine.high %v2511, %v2511
        %v2628 = vunpack.c.l.s4 1983009808
        %v2629 = vunpack.c.0.s8 %v2628
        %v2630 = vlaneseq
        %v2631 = vshrl.u32 %v2630, 7
        %v2632 = vsub.s32 %v2629, %v2631
        %v2633 = vrot.slane %v2626, %v2632
        %v2634 = vcombine.high %v2633, %v2633
        %v2637 = vadd.f32 %v2550, %v2592
        %v2638 = vadd.f32 %v2551, %v2594
        %v2639 = vadd.f32 %v2552, %v2633
        %v2640 = vadd.f32 %v2553, %v2634
        %s2641 = scalar_lea.vmem %s743, 448 [#allocation2]
        %v2642 = vld [vmem:[%s2641] sm:$0xff]
        %v2643 = vld [vmem:[%s2641 + $0x8] sm:$0xff]
        %v2644 = vld [vmem:[%s2641 + $0x10] sm:$0xff]
        %v2645 = vld [vmem:[%s2641 + $0x18] sm:$0xff]
        %v2646 = vld [vmem:[%s2641 + $0x20] sm:$0xff]
        %v2647 = vld [vmem:[%s2641 + $0x28] sm:$0xff]
        %v2648 = vld [vmem:[%s2641 + $0x30] sm:$0xff]
        %v2649 = vld [vmem:[%s2641 + $0x38] sm:$0xff]
        %v2650 = vld [vmem:[%s2641 + $0x40] sm:$0xff]
        %v2651 = vld [vmem:[%s2641 + $0x48] sm:$0xff]
        %v2652 = vld [vmem:[%s2641 + $0x50] sm:$0xff]
        %v2653 = vld [vmem:[%s2641 + $0x58] sm:$0xff]
        %v2654 = vld [vmem:[%s2641 + $0x60] sm:$0xff]
        %v2655 = vld [vmem:[%s2641 + $0x68] sm:$0xff]
        %v2656 = vld [vmem:[%s2641 + $0x70] sm:$0xff]
        %v2657 = vld [vmem:[%s2641 + $0x78] sm:$0xff]
        %v2658 = vld [vmem:[%s2641 + $0x80] sm:$0xff]
        %v2659 = vld [vmem:[%s2641 + $0x88] sm:$0xff]
        %v2660 = vld [vmem:[%s2641 + $0x90] sm:$0xff]
        %v2661 = vld [vmem:[%s2641 + $0x98] sm:$0xff]
        %v2662 = vld [vmem:[%s2641 + $0xa0] sm:$0xff]
        %v2663 = vld [vmem:[%s2641 + $0xa8] sm:$0xff]
        %v2664 = vld [vmem:[%s2641 + $0xb0] sm:$0xff]
        %v2665 = vld [vmem:[%s2641 + $0xb8] sm:$0xff]
        %v2666 = vld [vmem:[%s2641 + $0xc0] sm:$0xff]
        %v2667 = vld [vmem:[%s2641 + $0xc8] sm:$0xff]
        %v2668 = vld [vmem:[%s2641 + $0xd0] sm:$0xff]
        %v2669 = vld [vmem:[%s2641 + $0xd8] sm:$0xff]
        %v2670 = vld [vmem:[%s2641 + $0xe0] sm:$0xff]
        %v2671 = vld [vmem:[%s2641 + $0xe8] sm:$0xff]
        %v2672 = vld [vmem:[%s2641 + $0xf0] sm:$0xff]
        %v2673 = vld [vmem:[%s2641 + $0xf8] sm:$0xff]
        %v2674 = vld [vmem:[%s2641 + $0x100] sm:$0xff]
        %v2675 = vld [vmem:[%s2641 + $0x108] sm:$0xff]
        %v2676 = vld [vmem:[%s2641 + $0x110] sm:$0xff]
        %v2677 = vld [vmem:[%s2641 + $0x118] sm:$0xff]
        %v2678 = vld [vmem:[%s2641 + $0x120] sm:$0xff]
        %v2679 = vld [vmem:[%s2641 + $0x128] sm:$0xff]
        %v2680 = vld [vmem:[%s2641 + $0x130] sm:$0xff]
        %v2681 = vld [vmem:[%s2641 + $0x138] sm:$0xff]
        %v2682 = vld [vmem:[%s2641 + $0x140] sm:$0xff]
        %v2683 = vld [vmem:[%s2641 + $0x148] sm:$0xff]
        %v2684 = vld [vmem:[%s2641 + $0x150] sm:$0xff]
        %v2685 = vld [vmem:[%s2641 + $0x158] sm:$0xff]
        %v2686 = vld [vmem:[%s2641 + $0x160] sm:$0xff]
        %v2687 = vld [vmem:[%s2641 + $0x168] sm:$0xff]
        %v2688 = vld [vmem:[%s2641 + $0x170] sm:$0xff]
        %v2689 = vld [vmem:[%s2641 + $0x178] sm:$0xff]
        %v2690 = vld [vmem:[%s2641 + $0x180] sm:$0xff]
        %v2691 = vld [vmem:[%s2641 + $0x188] sm:$0xff]
        %v2692 = vld [vmem:[%s2641 + $0x190] sm:$0xff]
        %v2693 = vld [vmem:[%s2641 + $0x198] sm:$0xff]
        %v2694 = vld [vmem:[%s2641 + $0x1a0] sm:$0xff]
        %v2695 = vld [vmem:[%s2641 + $0x1a8] sm:$0xff]
        %v2696 = vld [vmem:[%s2641 + $0x1b0] sm:$0xff]
        %v2697 = vld [vmem:[%s2641 + $0x1b8] sm:$0xff]
        %v2754 = vunpack.c.l.b16 %v2642
        %v2755 = vunpack.c.h.b16 %v2642
        %v2756 = vunpack.c.l.b16 %v2643
        %v2757 = vunpack.c.h.b16 %v2643
        %v2758 = vunpack.c.l.b16 %v2644
        %v2759 = vunpack.c.h.b16 %v2644
        %v2760 = vunpack.c.l.b16 %v2645
        %v2761 = vunpack.c.h.b16 %v2645
        %v2762 = vunpack.c.l.b16 %v2646
        %v2763 = vunpack.c.h.b16 %v2646
        %v2764 = vunpack.c.l.b16 %v2647
        %v2765 = vunpack.c.h.b16 %v2647
        %v2766 = vunpack.c.l.b16 %v2648
        %v2767 = vunpack.c.h.b16 %v2648
        %v2768 = vunpack.c.l.b16 %v2649
        %v2769 = vunpack.c.h.b16 %v2649
        %v2770 = vunpack.c.l.b16 %v2650
        %v2771 = vunpack.c.h.b16 %v2650
        %v2772 = vunpack.c.l.b16 %v2651
        %v2773 = vunpack.c.h.b16 %v2651
        %v2774 = vunpack.c.l.b16 %v2652
        %v2775 = vunpack.c.h.b16 %v2652
        %v2776 = vunpack.c.l.b16 %v2653
        %v2777 = vunpack.c.h.b16 %v2653
        %v2778 = vunpack.c.l.b16 %v2654
        %v2779 = vunpack.c.h.b16 %v2654
        %v2780 = vunpack.c.l.b16 %v2655
        %v2781 = vunpack.c.h.b16 %v2655
        %v2782 = vunpack.c.l.b16 %v2656
        %v2783 = vunpack.c.h.b16 %v2656
        %v2784 = vunpack.c.l.b16 %v2657
        %v2785 = vunpack.c.h.b16 %v2657
        %v2786 = vunpack.c.l.b16 %v2658
        %v2787 = vunpack.c.h.b16 %v2658
        %v2788 = vunpack.c.l.b16 %v2659
        %v2789 = vunpack.c.h.b16 %v2659
        %v2790 = vunpack.c.l.b16 %v2660
        %v2791 = vunpack.c.h.b16 %v2660
        %v2792 = vunpack.c.l.b16 %v2661
        %v2793 = vunpack.c.h.b16 %v2661
        %v2794 = vunpack.c.l.b16 %v2662
        %v2795 = vunpack.c.h.b16 %v2662
        %v2796 = vunpack.c.l.b16 %v2663
        %v2797 = vunpack.c.h.b16 %v2663
        %v2798 = vunpack.c.l.b16 %v2664
        %v2799 = vunpack.c.h.b16 %v2664
        %v2800 = vunpack.c.l.b16 %v2665
        %v2801 = vunpack.c.h.b16 %v2665
        %v2802 = vunpack.c.l.b16 %v2666
        %v2803 = vunpack.c.h.b16 %v2666
        %v2804 = vunpack.c.l.b16 %v2667
        %v2805 = vunpack.c.h.b16 %v2667
        %v2806 = vunpack.c.l.b16 %v2668
        %v2807 = vunpack.c.h.b16 %v2668
        %v2808 = vunpack.c.l.b16 %v2669
        %v2809 = vunpack.c.h.b16 %v2669
        %v2810 = vunpack.c.l.b16 %v2670
        %v2811 = vunpack.c.h.b16 %v2670
        %v2812 = vunpack.c.l.b16 %v2671
        %v2813 = vunpack.c.h.b16 %v2671
        %v2814 = vunpack.c.l.b16 %v2672
        %v2815 = vunpack.c.h.b16 %v2672
        %v2816 = vunpack.c.l.b16 %v2673
        %v2817 = vunpack.c.h.b16 %v2673
        %v2818 = vunpack.c.l.b16 %v2674
        %v2819 = vunpack.c.h.b16 %v2674
        %v2820 = vunpack.c.l.b16 %v2675
        %v2821 = vunpack.c.h.b16 %v2675
        %v2822 = vunpack.c.l.b16 %v2676
        %v2823 = vunpack.c.h.b16 %v2676
        %v2824 = vunpack.c.l.b16 %v2677
        %v2825 = vunpack.c.h.b16 %v2677
        %v2826 = vunpack.c.l.b16 %v2678
        %v2827 = vunpack.c.h.b16 %v2678
        %v2828 = vunpack.c.l.b16 %v2679
        %v2829 = vunpack.c.h.b16 %v2679
        %v2830 = vunpack.c.l.b16 %v2680
        %v2831 = vunpack.c.h.b16 %v2680
        %v2832 = vunpack.c.l.b16 %v2681
        %v2833 = vunpack.c.h.b16 %v2681
        %v2834 = vunpack.c.l.b16 %v2682
        %v2835 = vunpack.c.h.b16 %v2682
        %v2836 = vunpack.c.l.b16 %v2683
        %v2837 = vunpack.c.h.b16 %v2683
        %v2838 = vunpack.c.l.b16 %v2684
        %v2839 = vunpack.c.h.b16 %v2684
        %v2840 = vunpack.c.l.b16 %v2685
        %v2841 = vunpack.c.h.b16 %v2685
        %v2842 = vunpack.c.l.b16 %v2686
        %v2843 = vunpack.c.h.b16 %v2686
        %v2844 = vunpack.c.l.b16 %v2687
        %v2845 = vunpack.c.h.b16 %v2687
        %v2846 = vunpack.c.l.b16 %v2688
        %v2847 = vunpack.c.h.b16 %v2688
        %v2848 = vunpack.c.l.b16 %v2689
        %v2849 = vunpack.c.h.b16 %v2689
        %v2850 = vunpack.c.l.b16 %v2690
        %v2851 = vunpack.c.h.b16 %v2690
        %v2852 = vunpack.c.l.b16 %v2691
        %v2853 = vunpack.c.h.b16 %v2691
        %v2854 = vunpack.c.l.b16 %v2692
        %v2855 = vunpack.c.h.b16 %v2692
        %v2856 = vunpack.c.l.b16 %v2693
        %v2857 = vunpack.c.h.b16 %v2693
        %v2858 = vunpack.c.l.b16 %v2694
        %v2859 = vunpack.c.h.b16 %v2694
        %v2860 = vunpack.c.l.b16 %v2695
        %v2861 = vunpack.c.h.b16 %v2695
        %v2862 = vunpack.c.l.b16 %v2696
        %v2863 = vunpack.c.h.b16 %v2696
        %v2864 = vunpack.c.l.b16 %v2697
        %v2865 = vunpack.c.h.b16 %v2697
        %v2866 = vpack.c.b16 %v2758, %v2754
        %v2867 = vpack.c.b16 %v2759, %v2755
        %v2868 = vpack.c.b16 %v2760, %v2756
        %v2869 = vpack.c.b16 %v2761, %v2757
        %v2870 = vpack.c.b16 %v2766, %v2762
        %v2871 = vpack.c.b16 %v2767, %v2763
        %v2872 = vpack.c.b16 %v2768, %v2764
        %v2873 = vpack.c.b16 %v2769, %v2765
        %v2874 = vpack.c.b16 %v2774, %v2770
        %v2875 = vpack.c.b16 %v2775, %v2771
        %v2876 = vpack.c.b16 %v2776, %v2772
        %v2877 = vpack.c.b16 %v2777, %v2773
        %v2878 = vpack.c.b16 %v2782, %v2778
        %v2879 = vpack.c.b16 %v2783, %v2779
        %v2880 = vpack.c.b16 %v2784, %v2780
        %v2881 = vpack.c.b16 %v2785, %v2781
        %v2882 = vpack.c.b16 %v2790, %v2786
        %v2883 = vpack.c.b16 %v2791, %v2787
        %v2884 = vpack.c.b16 %v2792, %v2788
        %v2885 = vpack.c.b16 %v2793, %v2789
        %v2886 = vpack.c.b16 %v2798, %v2794
        %v2887 = vpack.c.b16 %v2799, %v2795
        %v2888 = vpack.c.b16 %v2800, %v2796
        %v2889 = vpack.c.b16 %v2801, %v2797
        %v2890 = vpack.c.b16 %v2806, %v2802
        %v2891 = vpack.c.b16 %v2807, %v2803
        %v2892 = vpack.c.b16 %v2808, %v2804
        %v2893 = vpack.c.b16 %v2809, %v2805
        %v2894 = vpack.c.b16 %v2814, %v2810
        %v2895 = vpack.c.b16 %v2815, %v2811
        %v2896 = vpack.c.b16 %v2816, %v2812
        %v2897 = vpack.c.b16 %v2817, %v2813
        %v2898 = vpack.c.b16 %v2822, %v2818
        %v2899 = vpack.c.b16 %v2823, %v2819
        %v2900 = vpack.c.b16 %v2824, %v2820
        %v2901 = vpack.c.b16 %v2825, %v2821
        %v2902 = vpack.c.b16 %v2830, %v2826
        %v2903 = vpack.c.b16 %v2831, %v2827
        %v2904 = vpack.c.b16 %v2832, %v2828
        %v2905 = vpack.c.b16 %v2833, %v2829
        %v2906 = vpack.c.b16 %v2838, %v2834
        %v2907 = vpack.c.b16 %v2839, %v2835
        %v2908 = vpack.c.b16 %v2840, %v2836
        %v2909 = vpack.c.b16 %v2841, %v2837
        %v2910 = vpack.c.b16 %v2846, %v2842
        %v2911 = vpack.c.b16 %v2847, %v2843
        %v2912 = vpack.c.b16 %v2848, %v2844
        %v2913 = vpack.c.b16 %v2849, %v2845
        %v2914 = vpack.c.b16 %v2854, %v2850
        %v2915 = vpack.c.b16 %v2855, %v2851
        %v2916 = vpack.c.b16 %v2856, %v2852
        %v2917 = vpack.c.b16 %v2857, %v2853
        %v2918 = vpack.c.b16 %v2862, %v2858
        %v2919 = vpack.c.b16 %v2863, %v2859
        %v2920 = vpack.c.b16 %v2864, %v2860
        %v2921 = vpack.c.b16 %v2865, %v2861
        %2978 = vmatprep.subr.bf16.mxu0 %v2867
        %2979 = vmatpush1.bf16.msra.mxu0 %v2866
        %2980 = vmatprep.subr.bf16.mxu0 %v2871
        %2981 = vmatpush1.bf16.msra.mxu0 %v2870
        %2982 = vmatprep.subr.bf16.mxu0 %v2875
        %2983 = vmatpush1.bf16.msra.mxu0 %v2874
        %2984 = vmatprep.subr.bf16.mxu0 %v2879
        %2985 = vmatpush1.bf16.msra.mxu0 %v2878
        %2986 = vmatprep.subr.bf16.mxu0 %v2883
        %2987 = vmatpush1.bf16.msra.mxu0 %v2882
        %2988 = vmatprep.subr.bf16.mxu0 %v2887
        %2989 = vmatpush1.bf16.msra.mxu0 %v2886
        %2990 = vmatprep.subr.bf16.mxu0 %v2891
        %2991 = vmatpush1.bf16.msra.mxu0 %v2890
        %2992 = vmatprep.subr.bf16.mxu0 %v2895
        %2993 = vmatpush1.bf16.msra.mxu0 %v2894
        %2994 = vmatprep.subr.bf16.mxu0 %v2899
        %2995 = vmatpush1.bf16.msra.mxu0 %v2898
        %2996 = vmatprep.subr.bf16.mxu0 %v2903
        %2997 = vmatpush1.bf16.msra.mxu0 %v2902
        %2998 = vmatprep.subr.bf16.mxu0 %v2907
        %2999 = vmatpush1.bf16.msra.mxu0 %v2906
        %3000 = vmatprep.subr.bf16.mxu0 %v2911
        %3001 = vmatpush1.bf16.msra.mxu0 %v2910
        %3002 = vmatprep.subr.bf16.mxu0 %v2915
        %3003 = vmatpush1.bf16.msra.mxu0 %v2914
        %3004 = vmatprep.subr.bf16.mxu0 %v2919
        %3005 = vmatpush1.bf16.msra.mxu0 %v2918
        %3006 = vmatprep.subr.bf16.mxu0 0
        %3007 = vmatpush1.bf16.msra.mxu0 0
        %3008 = vmatprep.subr.bf16.mxu0 0
        %3009 = vmatpush1.bf16.msra.mxu0 0
        %3010 = vmatprep.mubr.bf16.mxu0 %v2427
        %3011 = vmatmul.mubr.bf16.gmra.mrb[0].mxu0 %v2142
        %v3012 = vpop.f32.mrb[0].mxu0
        %v3013 = vadd.f32 0.0, %v3012
        %v3014 = vpop.f32.mrb[0].mxu0
        %v3015 = vadd.f32 0.0, %v3014
        %v3016 = vpop.f32.mrb[0].mxu0
        %v3017 = vpop.f32.mrb[0].mxu0
        %3018 = vdwg.mxu0
        %3019 = vmatprep.subr.bf16.mxu0 %v2869
        %3020 = vmatpush1.bf16.msra.mxu0 %v2868
        %3021 = vmatprep.subr.bf16.mxu0 %v2873
        %3022 = vmatpush1.bf16.msra.mxu0 %v2872
        %3023 = vmatprep.subr.bf16.mxu0 %v2877
        %3024 = vmatpush1.bf16.msra.mxu0 %v2876
        %3025 = vmatprep.subr.bf16.mxu0 %v2881
        %3026 = vmatpush1.bf16.msra.mxu0 %v2880
        %3027 = vmatprep.subr.bf16.mxu0 %v2885
        %3028 = vmatpush1.bf16.msra.mxu0 %v2884
        %3029 = vmatprep.subr.bf16.mxu0 %v2889
        %3030 = vmatpush1.bf16.msra.mxu0 %v2888
        %3031 = vmatprep.subr.bf16.mxu0 %v2893
        %3032 = vmatpush1.bf16.msra.mxu0 %v2892
        %3033 = vmatprep.subr.bf16.mxu0 %v2897
        %3034 = vmatpush1.bf16.msra.mxu0 %v2896
        %3035 = vmatprep.subr.bf16.mxu0 %v2901
        %3036 = vmatpush1.bf16.msra.mxu0 %v2900
        %3037 = vmatprep.subr.bf16.mxu0 %v2905
        %3038 = vmatpush1.bf16.msra.mxu0 %v2904
        %3039 = vmatprep.subr.bf16.mxu0 %v2909
        %3040 = vmatpush1.bf16.msra.mxu0 %v2908
        %3041 = vmatprep.subr.bf16.mxu0 %v2913
        %3042 = vmatpush1.bf16.msra.mxu0 %v2912
        %3043 = vmatprep.subr.bf16.mxu0 %v2917
        %3044 = vmatpush1.bf16.msra.mxu0 %v2916
        %3045 = vmatprep.subr.bf16.mxu0 %v2921
        %3046 = vmatpush1.bf16.msra.mxu0 %v2920
        %3047 = vmatprep.subr.bf16.mxu0 0
        %3048 = vmatpush1.bf16.msra.mxu0 0
        %3049 = vmatprep.subr.bf16.mxu0 0
        %3050 = vmatpush1.bf16.msra.mxu0 0
        %3051 = vmatprep.mubr.bf16.mxu0 %v2427
        %3052 = vmatmul.mubr.bf16.gmra.mrb[0].mxu0 %v2142
        %v3053 = vpop.f32.mrb[0].mxu0
        %v3054 = vadd.f32 0.0, %v3053
        %v3055 = vpop.f32.mrb[0].mxu0
        %v3056 = vadd.f32 0.0, %v3055
        %v3057 = vpop.f32.mrb[0].mxu0
        %v3058 = vpop.f32.mrb[0].mxu0
        %3059 = vdwg.mxu0
        %s3060 = scalar_lea.vmem %s757, 8 [#allocation4]
        %v3061 = vld [vmem:[%s3060] sm:$0xff]
        %v3062 = vlaneseq
        %v3063 = vshrl.u32 %v3062, 7
        %v3064 = vsub.s32 1, %v3063
        %v3065 = vrot.slane %v837, %v3064
        %v3066 = vlaneseq
        %v3067 = vshrl.u32 %v3066, 7
        %v3068 = vsub.s32 5, %v3067
        %v3069 = vrot.slane %v837, %v3068
        %v3070 = vlaneseq
        %v3071 = vshrl.u32 %v3070, 7
        %v3072 = vsub.s32 1, %v3071
        %v3073 = vrot.slane %v838, %v3072
        %v3074 = vlaneseq
        %v3075 = vshrl.u32 %v3074, 7
        %v3076 = vsub.s32 5, %v3075
        %v3077 = vrot.slane %v838, %v3076
        %v3082 = vlaneseq
        %v3083 = vshrl.u32 %v3082, 7
        %v3084 = vsub.s32 1, %v3083
        %v3085 = vrot.slane %v3065, %v3084
        %v3086 = vlaneseq
        %v3087 = vshrl.u32 %v3086, 7
        %v3088 = vsub.s32 1, %v3087
        %v3089 = vrot.slane %v3069, %v3088
        %v3090 = vlaneseq
        %v3091 = vshrl.u32 %v3090, 7
        %v3092 = vsub.s32 1, %v3091
        %v3093 = vrot.slane %v3073, %v3092
        %v3094 = vlaneseq
        %v3095 = vshrl.u32 %v3094, 7
        %v3096 = vsub.s32 1, %v3095
        %v3097 = vrot.slane %v3077, %v3096
        %v3098 = vadd.f32 %v3013, %v3085
        %v3099 = vadd.f32 %v3015, %v3089
        %v3100 = vadd.f32 %v3054, %v3093
        %v3101 = vadd.f32 %v3056, %v3097
        %v3106 = vcombine.low %v3098, %v3099
        %v3107 = vcombine.low %v3100, %v3101
        %v3109 = vunpack.c.l.s4 1983009808
        %v3110 = vunpack.c.0.s8 %v3109
        %v3111 = vlaneseq
        %v3112 = vshrl.u32 %v3111, 7
        %v3113 = vsub.s32 %v3110, %v3112
        %v3114 = vrot.slane %v3106, %v3113
        %v3116 = vunpack.c.l.s4 1983009808
        %v3117 = vunpack.c.0.s8 %v3116
        %v3118 = vlaneseq
        %v3119 = vshrl.u32 %v3118, 7
        %v3120 = vsub.s32 %v3117, %v3119
        %v3121 = vrot.slane %v3107, %v3120
        %v3122 = vcombine.high %v3114, %v3121
        %s3124 = scalar_lea.vmem %s801, 8 [#allocation6]
        %3125 = vst [vmem:[%s3124] sm:$0xff] %v3122
        %v3127 = vcombine.low %v3061, %v3061
        %v3129 = vunpack.c.l.s4 1983009808
        %v3130 = vunpack.c.0.s8 %v3129
        %v3131 = vlaneseq
        %v3132 = vshrl.u32 %v3131, 7
        %v3133 = vsub.s32 %v3130, %v3132
        %v3134 = vrot.slane %v3127, %v3133
        %v3136 = vunpack.c.l.s4 1983009808
        %v3137 = vunpack.c.0.s8 %v3136
        %v3138 = vlaneseq
        %v3139 = vshrl.u32 %v3138, 7
        %v3140 = vsub.s32 %v3137, %v3139
        %v3141 = vrot.slane %v3061, %v3140
        %v3142 = vcombine.high %v3134, %v3134
        %v3143 = vcombine.high %v3141, %v3141
        %v3148 = vadd.f32 %v3098, %v3134
        %v3149 = vadd.f32 %v3099, %v3142
        %v3150 = vadd.f32 %v3100, %v3141
        %v3151 = vadd.f32 %v3101, %v3143
        %v3156 = vcombine.low %v3148, %v3149
        %v3157 = vcombine.low %v3150, %v3151
        %v3159 = vunpack.c.l.s4 1983009808
        %v3160 = vunpack.c.0.s8 %v3159
        %v3161 = vlaneseq
        %v3162 = vshrl.u32 %v3161, 7
        %v3163 = vsub.s32 %v3160, %v3162
        %v3164 = vrot.slane %v3156, %v3163
        %v3166 = vunpack.c.l.s4 1983009808
        %v3167 = vunpack.c.0.s8 %v3166
        %v3168 = vlaneseq
        %v3169 = vshrl.u32 %v3168, 7
        %v3170 = vsub.s32 %v3167, %v3169
        %v3171 = vrot.slane %v3157, %v3170
        %v3172 = vcombine.high %v3164, %v3171
        %s3174 = scalar_lea.vmem %s807, 8 [#allocation7]
        %3175 = vst [vmem:[%s3174] sm:$0xff] %v3172
        %v3176 = vcombine.high %v3061, %v3061
        %v3178 = vunpack.c.l.s4 1983009808
        %v3179 = vunpack.c.0.s8 %v3178
        %v3180 = vlaneseq
        %v3181 = vshrl.u32 %v3180, 7
        %v3182 = vsub.s32 %v3179, %v3181
        %v3183 = vrot.slane %v3176, %v3182
        %v3184 = vcombine.high %v3183, %v3183
        %v3187 = vadd.f32 %v3098, %v3141
        %v3188 = vadd.f32 %v3099, %v3143
        %v3189 = vadd.f32 %v3100, %v3183
        %v3190 = vadd.f32 %v3101, %v3184
        %s3191 = scalar_lea.vmem %s743, 896 [#allocation2]
        %v3192 = vld [vmem:[%s3191] sm:$0xff]
        %v3193 = vld [vmem:[%s3191 + $0x8] sm:$0xff]
        %v3194 = vld [vmem:[%s3191 + $0x10] sm:$0xff]
        %v3195 = vld [vmem:[%s3191 + $0x18] sm:$0xff]
        %v3196 = vld [vmem:[%s3191 + $0x20] sm:$0xff]
        %v3197 = vld [vmem:[%s3191 + $0x28] sm:$0xff]
        %v3198 = vld [vmem:[%s3191 + $0x30] sm:$0xff]
        %v3199 = vld [vmem:[%s3191 + $0x38] sm:$0xff]
        %v3200 = vld [vmem:[%s3191 + $0x40] sm:$0xff]
        %v3201 = vld [vmem:[%s3191 + $0x48] sm:$0xff]
        %v3202 = vld [vmem:[%s3191 + $0x50] sm:$0xff]
        %v3203 = vld [vmem:[%s3191 + $0x58] sm:$0xff]
        %v3204 = vld [vmem:[%s3191 + $0x60] sm:$0xff]
        %v3205 = vld [vmem:[%s3191 + $0x68] sm:$0xff]
        %v3206 = vld [vmem:[%s3191 + $0x70] sm:$0xff]
        %v3207 = vld [vmem:[%s3191 + $0x78] sm:$0xff]
        %v3208 = vld [vmem:[%s3191 + $0x80] sm:$0xff]
        %v3209 = vld [vmem:[%s3191 + $0x88] sm:$0xff]
        %v3210 = vld [vmem:[%s3191 + $0x90] sm:$0xff]
        %v3211 = vld [vmem:[%s3191 + $0x98] sm:$0xff]
        %v3212 = vld [vmem:[%s3191 + $0xa0] sm:$0xff]
        %v3213 = vld [vmem:[%s3191 + $0xa8] sm:$0xff]
        %v3214 = vld [vmem:[%s3191 + $0xb0] sm:$0xff]
        %v3215 = vld [vmem:[%s3191 + $0xb8] sm:$0xff]
        %v3216 = vld [vmem:[%s3191 + $0xc0] sm:$0xff]
        %v3217 = vld [vmem:[%s3191 + $0xc8] sm:$0xff]
        %v3218 = vld [vmem:[%s3191 + $0xd0] sm:$0xff]
        %v3219 = vld [vmem:[%s3191 + $0xd8] sm:$0xff]
        %v3220 = vld [vmem:[%s3191 + $0xe0] sm:$0xff]
        %v3221 = vld [vmem:[%s3191 + $0xe8] sm:$0xff]
        %v3222 = vld [vmem:[%s3191 + $0xf0] sm:$0xff]
        %v3223 = vld [vmem:[%s3191 + $0xf8] sm:$0xff]
        %v3224 = vld [vmem:[%s3191 + $0x100] sm:$0xff]
        %v3225 = vld [vmem:[%s3191 + $0x108] sm:$0xff]
        %v3226 = vld [vmem:[%s3191 + $0x110] sm:$0xff]
        %v3227 = vld [vmem:[%s3191 + $0x118] sm:$0xff]
        %v3228 = vld [vmem:[%s3191 + $0x120] sm:$0xff]
        %v3229 = vld [vmem:[%s3191 + $0x128] sm:$0xff]
        %v3230 = vld [vmem:[%s3191 + $0x130] sm:$0xff]
        %v3231 = vld [vmem:[%s3191 + $0x138] sm:$0xff]
        %v3232 = vld [vmem:[%s3191 + $0x140] sm:$0xff]
        %v3233 = vld [vmem:[%s3191 + $0x148] sm:$0xff]
        %v3234 = vld [vmem:[%s3191 + $0x150] sm:$0xff]
        %v3235 = vld [vmem:[%s3191 + $0x158] sm:$0xff]
        %v3236 = vld [vmem:[%s3191 + $0x160] sm:$0xff]
        %v3237 = vld [vmem:[%s3191 + $0x168] sm:$0xff]
        %v3238 = vld [vmem:[%s3191 + $0x170] sm:$0xff]
        %v3239 = vld [vmem:[%s3191 + $0x178] sm:$0xff]
        %v3240 = vld [vmem:[%s3191 + $0x180] sm:$0xff]
        %v3241 = vld [vmem:[%s3191 + $0x188] sm:$0xff]
        %v3242 = vld [vmem:[%s3191 + $0x190] sm:$0xff]
        %v3243 = vld [vmem:[%s3191 + $0x198] sm:$0xff]
        %v3244 = vld [vmem:[%s3191 + $0x1a0] sm:$0xff]
        %v3245 = vld [vmem:[%s3191 + $0x1a8] sm:$0xff]
        %v3246 = vld [vmem:[%s3191 + $0x1b0] sm:$0xff]
        %v3247 = vld [vmem:[%s3191 + $0x1b8] sm:$0xff]
        %v3304 = vunpack.c.l.b16 %v3192
        %v3305 = vunpack.c.h.b16 %v3192
        %v3306 = vunpack.c.l.b16 %v3193
        %v3307 = vunpack.c.h.b16 %v3193
        %v3308 = vunpack.c.l.b16 %v3194
        %v3309 = vunpack.c.h.b16 %v3194
        %v3310 = vunpack.c.l.b16 %v3195
        %v3311 = vunpack.c.h.b16 %v3195
        %v3312 = vunpack.c.l.b16 %v3196
        %v3313 = vunpack.c.h.b16 %v3196
        %v3314 = vunpack.c.l.b16 %v3197
        %v3315 = vunpack.c.h.b16 %v3197
        %v3316 = vunpack.c.l.b16 %v3198
        %v3317 = vunpack.c.h.b16 %v3198
        %v3318 = vunpack.c.l.b16 %v3199
        %v3319 = vunpack.c.h.b16 %v3199
        %v3320 = vunpack.c.l.b16 %v3200
        %v3321 = vunpack.c.h.b16 %v3200
        %v3322 = vunpack.c.l.b16 %v3201
        %v3323 = vunpack.c.h.b16 %v3201
        %v3324 = vunpack.c.l.b16 %v3202
        %v3325 = vunpack.c.h.b16 %v3202
        %v3326 = vunpack.c.l.b16 %v3203
        %v3327 = vunpack.c.h.b16 %v3203
        %v3328 = vunpack.c.l.b16 %v3204
        %v3329 = vunpack.c.h.b16 %v3204
        %v3330 = vunpack.c.l.b16 %v3205
        %v3331 = vunpack.c.h.b16 %v3205
        %v3332 = vunpack.c.l.b16 %v3206
        %v3333 = vunpack.c.h.b16 %v3206
        %v3334 = vunpack.c.l.b16 %v3207
        %v3335 = vunpack.c.h.b16 %v3207
        %v3336 = vunpack.c.l.b16 %v3208
        %v3337 = vunpack.c.h.b16 %v3208
        %v3338 = vunpack.c.l.b16 %v3209
        %v3339 = vunpack.c.h.b16 %v3209
        %v3340 = vunpack.c.l.b16 %v3210
        %v3341 = vunpack.c.h.b16 %v3210
        %v3342 = vunpack.c.l.b16 %v3211
        %v3343 = vunpack.c.h.b16 %v3211
        %v3344 = vunpack.c.l.b16 %v3212
        %v3345 = vunpack.c.h.b16 %v3212
        %v3346 = vunpack.c.l.b16 %v3213
        %v3347 = vunpack.c.h.b16 %v3213
        %v3348 = vunpack.c.l.b16 %v3214
        %v3349 = vunpack.c.h.b16 %v3214
        %v3350 = vunpack.c.l.b16 %v3215
        %v3351 = vunpack.c.h.b16 %v3215
        %v3352 = vunpack.c.l.b16 %v3216
        %v3353 = vunpack.c.h.b16 %v3216
        %v3354 = vunpack.c.l.b16 %v3217
        %v3355 = vunpack.c.h.b16 %v3217
        %v3356 = vunpack.c.l.b16 %v3218
        %v3357 = vunpack.c.h.b16 %v3218
        %v3358 = vunpack.c.l.b16 %v3219
        %v3359 = vunpack.c.h.b16 %v3219
        %v3360 = vunpack.c.l.b16 %v3220
        %v3361 = vunpack.c.h.b16 %v3220
        %v3362 = vunpack.c.l.b16 %v3221
        %v3363 = vunpack.c.h.b16 %v3221
        %v3364 = vunpack.c.l.b16 %v3222
        %v3365 = vunpack.c.h.b16 %v3222
        %v3366 = vunpack.c.l.b16 %v3223
        %v3367 = vunpack.c.h.b16 %v3223
        %v3368 = vunpack.c.l.b16 %v3224
        %v3369 = vunpack.c.h.b16 %v3224
        %v3370 = vunpack.c.l.b16 %v3225
        %v3371 = vunpack.c.h.b16 %v3225
        %v3372 = vunpack.c.l.b16 %v3226
        %v3373 = vunpack.c.h.b16 %v3226
        %v3374 = vunpack.c.l.b16 %v3227
        %v3375 = vunpack.c.h.b16 %v3227
        %v3376 = vunpack.c.l.b16 %v3228
        %v3377 = vunpack.c.h.b16 %v3228
        %v3378 = vunpack.c.l.b16 %v3229
        %v3379 = vunpack.c.h.b16 %v3229
        %v3380 = vunpack.c.l.b16 %v3230
        %v3381 = vunpack.c.h.b16 %v3230
        %v3382 = vunpack.c.l.b16 %v3231
        %v3383 = vunpack.c.h.b16 %v3231
        %v3384 = vunpack.c.l.b16 %v3232
        %v3385 = vunpack.c.h.b16 %v3232
        %v3386 = vunpack.c.l.b16 %v3233
        %v3387 = vunpack.c.h.b16 %v3233
        %v3388 = vunpack.c.l.b16 %v3234
        %v3389 = vunpack.c.h.b16 %v3234
        %v3390 = vunpack.c.l.b16 %v3235
        %v3391 = vunpack.c.h.b16 %v3235
        %v3392 = vunpack.c.l.b16 %v3236
        %v3393 = vunpack.c.h.b16 %v3236
        %v3394 = vunpack.c.l.b16 %v3237
        %v3395 = vunpack.c.h.b16 %v3237
        %v3396 = vunpack.c.l.b16 %v3238
        %v3397 = vunpack.c.h.b16 %v3238
        %v3398 = vunpack.c.l.b16 %v3239
        %v3399 = vunpack.c.h.b16 %v3239
        %v3400 = vunpack.c.l.b16 %v3240
        %v3401 = vunpack.c.h.b16 %v3240
        %v3402 = vunpack.c.l.b16 %v3241
        %v3403 = vunpack.c.h.b16 %v3241
        %v3404 = vunpack.c.l.b16 %v3242
        %v3405 = vunpack.c.h.b16 %v3242
        %v3406 = vunpack.c.l.b16 %v3243
        %v3407 = vunpack.c.h.b16 %v3243
        %v3408 = vunpack.c.l.b16 %v3244
        %v3409 = vunpack.c.h.b16 %v3244
        %v3410 = vunpack.c.l.b16 %v3245
        %v3411 = vunpack.c.h.b16 %v3245
        %v3412 = vunpack.c.l.b16 %v3246
        %v3413 = vunpack.c.h.b16 %v3246
        %v3414 = vunpack.c.l.b16 %v3247
        %v3415 = vunpack.c.h.b16 %v3247
        %v3416 = vpack.c.b16 %v3308, %v3304
        %v3417 = vpack.c.b16 %v3309, %v3305
        %v3418 = vpack.c.b16 %v3310, %v3306
        %v3419 = vpack.c.b16 %v3311, %v3307
        %v3420 = vpack.c.b16 %v3316, %v3312
        %v3421 = vpack.c.b16 %v3317, %v3313
        %v3422 = vpack.c.b16 %v3318, %v3314
        %v3423 = vpack.c.b16 %v3319, %v3315
        %v3424 = vpack.c.b16 %v3324, %v3320
        %v3425 = vpack.c.b16 %v3325, %v3321
        %v3426 = vpack.c.b16 %v3326, %v3322
        %v3427 = vpack.c.b16 %v3327, %v3323
        %v3428 = vpack.c.b16 %v3332, %v3328
        %v3429 = vpack.c.b16 %v3333, %v3329
        %v3430 = vpack.c.b16 %v3334, %v3330
        %v3431 = vpack.c.b16 %v3335, %v3331
        %v3432 = vpack.c.b16 %v3340, %v3336
        %v3433 = vpack.c.b16 %v3341, %v3337
        %v3434 = vpack.c.b16 %v3342, %v3338
        %v3435 = vpack.c.b16 %v3343, %v3339
        %v3436 = vpack.c.b16 %v3348, %v3344
        %v3437 = vpack.c.b16 %v3349, %v3345
        %v3438 = vpack.c.b16 %v3350, %v3346
        %v3439 = vpack.c.b16 %v3351, %v3347
        %v3440 = vpack.c.b16 %v3356, %v3352
        %v3441 = vpack.c.b16 %v3357, %v3353
        %v3442 = vpack.c.b16 %v3358, %v3354
        %v3443 = vpack.c.b16 %v3359, %v3355
        %v3444 = vpack.c.b16 %v3364, %v3360
        %v3445 = vpack.c.b16 %v3365, %v3361
        %v3446 = vpack.c.b16 %v3366, %v3362
        %v3447 = vpack.c.b16 %v3367, %v3363
        %v3448 = vpack.c.b16 %v3372, %v3368
        %v3449 = vpack.c.b16 %v3373, %v3369
        %v3450 = vpack.c.b16 %v3374, %v3370
        %v3451 = vpack.c.b16 %v3375, %v3371
        %v3452 = vpack.c.b16 %v3380, %v3376
        %v3453 = vpack.c.b16 %v3381, %v3377
        %v3454 = vpack.c.b16 %v3382, %v3378
        %v3455 = vpack.c.b16 %v3383, %v3379
        %v3456 = vpack.c.b16 %v3388, %v3384
        %v3457 = vpack.c.b16 %v3389, %v3385
        %v3458 = vpack.c.b16 %v3390, %v3386
        %v3459 = vpack.c.b16 %v3391, %v3387
        %v3460 = vpack.c.b16 %v3396, %v3392
        %v3461 = vpack.c.b16 %v3397, %v3393
        %v3462 = vpack.c.b16 %v3398, %v3394
        %v3463 = vpack.c.b16 %v3399, %v3395
        %v3464 = vpack.c.b16 %v3404, %v3400
        %v3465 = vpack.c.b16 %v3405, %v3401
        %v3466 = vpack.c.b16 %v3406, %v3402
        %v3467 = vpack.c.b16 %v3407, %v3403
        %v3468 = vpack.c.b16 %v3412, %v3408
        %v3469 = vpack.c.b16 %v3413, %v3409
        %v3470 = vpack.c.b16 %v3414, %v3410
        %v3471 = vpack.c.b16 %v3415, %v3411
        %3528 = vmatprep.subr.bf16.mxu0 %v3417
        %3529 = vmatpush1.bf16.msra.mxu0 %v3416
        %3530 = vmatprep.subr.bf16.mxu0 %v3421
        %3531 = vmatpush1.bf16.msra.mxu0 %v3420
        %3532 = vmatprep.subr.bf16.mxu0 %v3425
        %3533 = vmatpush1.bf16.msra.mxu0 %v3424
        %3534 = vmatprep.subr.bf16.mxu0 %v3429
        %3535 = vmatpush1.bf16.msra.mxu0 %v3428
        %3536 = vmatprep.subr.bf16.mxu0 %v3433
        %3537 = vmatpush1.bf16.msra.mxu0 %v3432
        %3538 = vmatprep.subr.bf16.mxu0 %v3437
        %3539 = vmatpush1.bf16.msra.mxu0 %v3436
        %3540 = vmatprep.subr.bf16.mxu0 %v3441
        %3541 = vmatpush1.bf16.msra.mxu0 %v3440
        %3542 = vmatprep.subr.bf16.mxu0 %v3445
        %3543 = vmatpush1.bf16.msra.mxu0 %v3444
        %3544 = vmatprep.subr.bf16.mxu0 %v3449
        %3545 = vmatpush1.bf16.msra.mxu0 %v3448
        %3546 = vmatprep.subr.bf16.mxu0 %v3453
        %3547 = vmatpush1.bf16.msra.mxu0 %v3452
        %3548 = vmatprep.subr.bf16.mxu0 %v3457
        %3549 = vmatpush1.bf16.msra.mxu0 %v3456
        %3550 = vmatprep.subr.bf16.mxu0 %v3461
        %3551 = vmatpush1.bf16.msra.mxu0 %v3460
        %3552 = vmatprep.subr.bf16.mxu0 %v3465
        %3553 = vmatpush1.bf16.msra.mxu0 %v3464
        %3554 = vmatprep.subr.bf16.mxu0 %v3469
        %3555 = vmatpush1.bf16.msra.mxu0 %v3468
        %3556 = vmatprep.subr.bf16.mxu0 0
        %3557 = vmatpush1.bf16.msra.mxu0 0
        %3558 = vmatprep.subr.bf16.mxu0 0
        %3559 = vmatpush1.bf16.msra.mxu0 0
        %3560 = vmatprep.mubr.bf16.mxu0 %v2427
        %3561 = vmatmul.mubr.bf16.gmra.mrb[0].mxu0 %v2142
        %v3562 = vpop.f32.mrb[0].mxu0
        %v3563 = vadd.f32 0.0, %v3562
        %v3564 = vpop.f32.mrb[0].mxu0
        %v3565 = vadd.f32 0.0, %v3564
        %v3566 = vpop.f32.mrb[0].mxu0
        %v3567 = vpop.f32.mrb[0].mxu0
        %3568 = vdwg.mxu0
        %3569 = vmatprep.subr.bf16.mxu0 %v3419
        %3570 = vmatpush1.bf16.msra.mxu0 %v3418
        %3571 = vmatprep.subr.bf16.mxu0 %v3423
        %3572 = vmatpush1.bf16.msra.mxu0 %v3422
        %3573 = vmatprep.subr.bf16.mxu0 %v3427
        %3574 = vmatpush1.bf16.msra.mxu0 %v3426
        %3575 = vmatprep.subr.bf16.mxu0 %v3431
        %3576 = vmatpush1.bf16.msra.mxu0 %v3430
        %3577 = vmatprep.subr.bf16.mxu0 %v3435
        %3578 = vmatpush1.bf16.msra.mxu0 %v3434
        %3579 = vmatprep.subr.bf16.mxu0 %v3439
        %3580 = vmatpush1.bf16.msra.mxu0 %v3438
        %3581 = vmatprep.subr.bf16.mxu0 %v3443
        %3582 = vmatpush1.bf16.msra.mxu0 %v3442
        %3583 = vmatprep.subr.bf16.mxu0 %v3447
        %3584 = vmatpush1.bf16.msra.mxu0 %v3446
        %3585 = vmatprep.subr.bf16.mxu0 %v3451
        %3586 = vmatpush1.bf16.msra.mxu0 %v3450
        %3587 = vmatprep.subr.bf16.mxu0 %v3455
        %3588 = vmatpush1.bf16.msra.mxu0 %v3454
        %3589 = vmatprep.subr.bf16.mxu0 %v3459
        %3590 = vmatpush1.bf16.msra.mxu0 %v3458
        %3591 = vmatprep.subr.bf16.mxu0 %v3463
        %3592 = vmatpush1.bf16.msra.mxu0 %v3462
        %3593 = vmatprep.subr.bf16.mxu0 %v3467
        %3594 = vmatpush1.bf16.msra.mxu0 %v3466
        %3595 = vmatprep.subr.bf16.mxu0 %v3471
        %3596 = vmatpush1.bf16.msra.mxu0 %v3470
        %3597 = vmatprep.subr.bf16.mxu0 0
        %3598 = vmatpush1.bf16.msra.mxu0 0
        %3599 = vmatprep.subr.bf16.mxu0 0
        %3600 = vmatpush1.bf16.msra.mxu0 0
        %3601 = vmatprep.mubr.bf16.mxu0 %v2427
        %3602 = vmatmul.mubr.bf16.gmra.mrb[0].mxu0 %v2142
        %v3603 = vpop.f32.mrb[0].mxu0
        %v3604 = vadd.f32 0.0, %v3603
        %v3605 = vpop.f32.mrb[0].mxu0
        %v3606 = vadd.f32 0.0, %v3605
        %v3607 = vpop.f32.mrb[0].mxu0
        %v3608 = vpop.f32.mrb[0].mxu0
        %3609 = vdwg.mxu0
        %s3610 = scalar_lea.vmem %s757, 16 [#allocation4]
        %v3611 = vld [vmem:[%s3610] sm:$0xff]
        %v3612 = vlaneseq
        %v3613 = vshrl.u32 %v3612, 7
        %v3614 = vsub.s32 2, %v3613
        %v3615 = vrot.slane %v837, %v3614
        %v3616 = vlaneseq
        %v3617 = vshrl.u32 %v3616, 7
        %v3618 = vsub.s32 6, %v3617
        %v3619 = vrot.slane %v837, %v3618
        %v3620 = vlaneseq
        %v3621 = vshrl.u32 %v3620, 7
        %v3622 = vsub.s32 2, %v3621
        %v3623 = vrot.slane %v838, %v3622
        %v3624 = vlaneseq
        %v3625 = vshrl.u32 %v3624, 7
        %v3626 = vsub.s32 6, %v3625
        %v3627 = vrot.slane %v838, %v3626
        %v3632 = vlaneseq
        %v3633 = vshrl.u32 %v3632, 7
        %v3634 = vsub.s32 2, %v3633
        %v3635 = vrot.slane %v3615, %v3634
        %v3636 = vlaneseq
        %v3637 = vshrl.u32 %v3636, 7
        %v3638 = vsub.s32 2, %v3637
        %v3639 = vrot.slane %v3619, %v3638
        %v3640 = vlaneseq
        %v3641 = vshrl.u32 %v3640, 7
        %v3642 = vsub.s32 2, %v3641
        %v3643 = vrot.slane %v3623, %v3642
        %v3644 = vlaneseq
        %v3645 = vshrl.u32 %v3644, 7
        %v3646 = vsub.s32 2, %v3645
        %v3647 = vrot.slane %v3627, %v3646
        %v3648 = vadd.f32 %v3563, %v3635
        %v3649 = vadd.f32 %v3565, %v3639
        %v3650 = vadd.f32 %v3604, %v3643
        %v3651 = vadd.f32 %v3606, %v3647
        %v3656 = vcombine.low %v3648, %v3649
        %v3657 = vcombine.low %v3650, %v3651
        %v3659 = vunpack.c.l.s4 1983009808
        %v3660 = vunpack.c.0.s8 %v3659
        %v3661 = vlaneseq
        %v3662 = vshrl.u32 %v3661, 7
        %v3663 = vsub.s32 %v3660, %v3662
        %v3664 = vrot.slane %v3656, %v3663
        %v3666 = vunpack.c.l.s4 1983009808
        %v3667 = vunpack.c.0.s8 %v3666
        %v3668 = vlaneseq
        %v3669 = vshrl.u32 %v3668, 7
        %v3670 = vsub.s32 %v3667, %v3669
        %v3671 = vrot.slane %v3657, %v3670
        %v3672 = vcombine.high %v3664, %v3671
        %s3674 = scalar_lea.vmem %s801, 16 [#allocation6]
        %3675 = vst [vmem:[%s3674] sm:$0xff] %v3672
        %v3677 = vcombine.low %v3611, %v3611
        %v3679 = vunpack.c.l.s4 1983009808
        %v3680 = vunpack.c.0.s8 %v3679
        %v3681 = vlaneseq
        %v3682 = vshrl.u32 %v3681, 7
        %v3683 = vsub.s32 %v3680, %v3682
        %v3684 = vrot.slane %v3677, %v3683
        %v3686 = vunpack.c.l.s4 1983009808
        %v3687 = vunpack.c.0.s8 %v3686
        %v3688 = vlaneseq
        %v3689 = vshrl.u32 %v3688, 7
        %v3690 = vsub.s32 %v3687, %v3689
        %v3691 = vrot.slane %v3611, %v3690
        %v3692 = vcombine.high %v3684, %v3684
        %v3693 = vcombine.high %v3691, %v3691
        %v3698 = vadd.f32 %v3648, %v3684
        %v3699 = vadd.f32 %v3649, %v3692
        %v3700 = vadd.f32 %v3650, %v3691
        %v3701 = vadd.f32 %v3651, %v3693
        %v3706 = vcombine.low %v3698, %v3699
        %v3707 = vcombine.low %v3700, %v3701
        %v3709 = vunpack.c.l.s4 1983009808
        %v3710 = vunpack.c.0.s8 %v3709
        %v3711 = vlaneseq
        %v3712 = vshrl.u32 %v3711, 7
        %v3713 = vsub.s32 %v3710, %v3712
        %v3714 = vrot.slane %v3706, %v3713
        %v3716 = vunpack.c.l.s4 1983009808
        %v3717 = vunpack.c.0.s8 %v3716
        %v3718 = vlaneseq
        %v3719 = vshrl.u32 %v3718, 7
        %v3720 = vsub.s32 %v3717, %v3719
        %v3721 = vrot.slane %v3707, %v3720
        %v3722 = vcombine.high %v3714, %v3721
        %s3724 = scalar_lea.vmem %s807, 16 [#allocation7]
        %3725 = vst [vmem:[%s3724] sm:$0xff] %v3722
        %v3726 = vcombine.high %v3611, %v3611
        %v3728 = vunpack.c.l.s4 1983009808
        %v3729 = vunpack.c.0.s8 %v3728
        %v3730 = vlaneseq
        %v3731 = vshrl.u32 %v3730, 7
        %v3732 = vsub.s32 %v3729, %v3731
        %v3733 = vrot.slane %v3726, %v3732
        %v3734 = vcombine.high %v3733, %v3733
        %v3737 = vadd.f32 %v3648, %v3691
        %v3738 = vadd.f32 %v3649, %v3693
        %v3739 = vadd.f32 %v3650, %v3733
        %v3740 = vadd.f32 %v3651, %v3734
        %v3741 = vmul.f32 %v1446, %v2637
        %v3742 = vmul.f32 %v1448, %v2638
        %v3743 = vmul.f32 %v2061, %v2639
        %v3744 = vmul.f32 %v2063, %v2640
        %v3749 = vrot.slane %v3187, 7
        %v3750 = vrot.slane %v3188, 7
        %v3751 = vrot.slane %v3189, 7
        %v3752 = vrot.slane %v3190, 7
        %v3757 = vmul.f32 %v1446, %v3749
        %v3758 = vmul.f32 %v1448, %v3750
        %v3759 = vmul.f32 %v2061, %v3751
        %v3760 = vmul.f32 %v2063, %v3752
        %v3765 = vrot.slane %v3757, 1
        %v3766 = vrot.slane %v3758, 1
        %v3767 = vrot.slane %v3759, 1
        %v3768 = vrot.slane %v3760, 1
        %v3773 = vadd.f32 %v3741, %v3765
        %v3774 = vadd.f32 %v3742, %v3766
        %v3775 = vadd.f32 %v3743, %v3767
        %v3776 = vadd.f32 %v3744, %v3768
        %v3781 = vrot.slane %v3737, 6
        %v3782 = vrot.slane %v3738, 6
        %v3783 = vrot.slane %v3739, 6
        %v3784 = vrot.slane %v3740, 6
        %v3789 = vmul.f32 %v1446, %v3781
        %v3790 = vmul.f32 %v1448, %v3782
        %v3791 = vmul.f32 %v2061, %v3783
        %v3792 = vmul.f32 %v2063, %v3784
        %v3797 = vrot.slane %v3789, 2
        %v3798 = vrot.slane %v3790, 2
        %v3799 = vrot.slane %v3791, 2
        %v3800 = vrot.slane %v3792, 2
        %v3805 = vadd.f32 %v3773, %v3797
        %v3806 = vadd.f32 %v3774, %v3798
        %v3807 = vadd.f32 %v3775, %v3799
        %v3808 = vadd.f32 %v3776, %v3800
        %v3813 = vrot.slane %v1446, 3
        %v3814 = vrot.slane %v1448, 3
        %v3815 = vrot.slane %v2061, 3
        %v3816 = vrot.slane %v2063, 3
        %v3821 = vadd.f32 %v3805, %v3813
        %v3822 = vadd.f32 %v3806, %v3814
        %v3823 = vadd.f32 %v3807, %v3815
        %v3824 = vadd.f32 %v3808, %v3816
        %v3829 = vrot.slane %v2637, 5
        %v3830 = vrot.slane %v2638, 5
        %v3831 = vrot.slane %v2639, 5
        %v3832 = vrot.slane %v2640, 5
        %v3837 = vmul.f32 %v1453, %v3829
        %v3838 = vmul.f32 %v1455, %v3830
        %v3839 = vmul.f32 %v2068, %v3831
        %v3840 = vmul.f32 %v2070, %v3832
        %v3841 = vrot.slane %v3187, 4
        %v3842 = vrot.slane %v3188, 4
        %v3843 = vrot.slane %v3189, 4
        %v3844 = vrot.slane %v3190, 4
        %v3849 = vmul.f32 %v1453, %v3841
        %v3850 = vmul.f32 %v1455, %v3842
        %v3851 = vmul.f32 %v2068, %v3843
        %v3852 = vmul.f32 %v2070, %v3844
        %v3857 = vrot.slane %v3849, 1
        %v3858 = vrot.slane %v3850, 1
        %v3859 = vrot.slane %v3851, 1
        %v3860 = vrot.slane %v3852, 1
        %v3865 = vadd.f32 %v3837, %v3857
        %v3866 = vadd.f32 %v3838, %v3858
        %v3867 = vadd.f32 %v3839, %v3859
        %v3868 = vadd.f32 %v3840, %v3860
        %v3869 = vrot.slane %v3737, 3
        %v3870 = vrot.slane %v3738, 3
        %v3871 = vrot.slane %v3739, 3
        %v3872 = vrot.slane %v3740, 3
        %v3877 = vmul.f32 %v1453, %v3869
        %v3878 = vmul.f32 %v1455, %v3870
        %v3879 = vmul.f32 %v2068, %v3871
        %v3880 = vmul.f32 %v2070, %v3872
        %v3885 = vrot.slane %v3877, 2
        %v3886 = vrot.slane %v3878, 2
        %v3887 = vrot.slane %v3879, 2
        %v3888 = vrot.slane %v3880, 2
        %v3893 = vadd.f32 %v3865, %v3885
        %v3894 = vadd.f32 %v3866, %v3886
        %v3895 = vadd.f32 %v3867, %v3887
        %v3896 = vadd.f32 %v3868, %v3888
        %v3901 = vrot.slane %v1453, 3
        %v3902 = vrot.slane %v1455, 3
        %v3903 = vrot.slane %v2068, 3
        %v3904 = vrot.slane %v2070, 3
        %v3909 = vadd.f32 %v3893, %v3901
        %v3910 = vadd.f32 %v3894, %v3902
        %v3911 = vadd.f32 %v3895, %v3903
        %v3912 = vadd.f32 %v3896, %v3904
        %v3917 = vrot.slane %v3909, 3
        %v3918 = vrot.slane %v3910, 3
        %v3919 = vrot.slane %v3911, 3
        %v3920 = vrot.slane %v3912, 3
        %vm3925 = vcmask 1040384
        %v3926 = vsel %vm3925, %v3821, %v3917
        %v3927 = vsel %vm3925, %v3822, %v3918
        %v3928 = vsel %vm3925, %v3823, %v3919
        %v3929 = vsel %vm3925, %v3824, %v3920
        %v3934 = vcombine.low %v3926, %v3927
        %v3935 = vcombine.low %v3928, %v3929
        %v3937 = vunpack.c.l.s4 1983009808
        %v3938 = vunpack.c.0.s8 %v3937
        %v3939 = vlaneseq
        %v3940 = vshrl.u32 %v3939, 7
        %v3941 = vsub.s32 %v3938, %v3940
        %v3942 = vrot.slane %v3934, %v3941
        %v3944 = vunpack.c.l.s4 1983009808
        %v3945 = vunpack.c.0.s8 %v3944
        %v3946 = vlaneseq
        %v3947 = vshrl.u32 %v3946, 7
        %v3948 = vsub.s32 %v3945, %v3947
        %v3949 = vrot.slane %v3935, %v3948
        %v3950 = vcombine.low %v3942, %v3949
        %3952 = vst [vmem:[%s795] sm:$0xff] %v3950
        %v3953 = vrot.slane %v2637, 4
        %v3954 = vrot.slane %v2638, 4
        %v3955 = vrot.slane %v2639, 4
        %v3956 = vrot.slane %v2640, 4
        %v3961 = vmul.f32 %v1446, %v3953
        %v3962 = vmul.f32 %v1448, %v3954
        %v3963 = vmul.f32 %v2061, %v3955
        %v3964 = vmul.f32 %v2063, %v3956
        %v3965 = vrot.slane %v3187, 3
        %v3966 = vrot.slane %v3188, 3
        %v3967 = vrot.slane %v3189, 3
        %v3968 = vrot.slane %v3190, 3
        %v3973 = vmul.f32 %v1446, %v3965
        %v3974 = vmul.f32 %v1448, %v3966
        %v3975 = vmul.f32 %v2061, %v3967
        %v3976 = vmul.f32 %v2063, %v3968
        %v3981 = vrot.slane %v3973, 1
        %v3982 = vrot.slane %v3974, 1
        %v3983 = vrot.slane %v3975, 1
        %v3984 = vrot.slane %v3976, 1
        %v3989 = vadd.f32 %v3961, %v3981
        %v3990 = vadd.f32 %v3962, %v3982
        %v3991 = vadd.f32 %v3963, %v3983
        %v3992 = vadd.f32 %v3964, %v3984
        %v3993 = vrot.slane %v3737, 2
        %v3994 = vrot.slane %v3738, 2
        %v3995 = vrot.slane %v3739, 2
        %v3996 = vrot.slane %v3740, 2
        %v4001 = vmul.f32 %v1446, %v3993
        %v4002 = vmul.f32 %v1448, %v3994
        %v4003 = vmul.f32 %v2061, %v3995
        %v4004 = vmul.f32 %v2063, %v3996
        %v4009 = vrot.slane %v4001, 2
        %v4010 = vrot.slane %v4002, 2
        %v4011 = vrot.slane %v4003, 2
        %v4012 = vrot.slane %v4004, 2
        %v4017 = vadd.f32 %v3989, %v4009
        %v4018 = vadd.f32 %v3990, %v4010
        %v4019 = vadd.f32 %v3991, %v4011
        %v4020 = vadd.f32 %v3992, %v4012
        %v4021 = vadd.f32 %v4017, %v3813
        %v4022 = vadd.f32 %v4018, %v3814
        %v4023 = vadd.f32 %v4019, %v3815
        %v4024 = vadd.f32 %v4020, %v3816
        %v4025 = vrot.slane %v2637, 1
        %v4026 = vrot.slane %v2638, 1
        %v4027 = vrot.slane %v2639, 1
        %v4028 = vrot.slane %v2640, 1
        %v4033 = vmul.f32 %v1460, %v4025
        %v4034 = vmul.f32 %v1462, %v4026
        %v4035 = vmul.f32 %v2075, %v4027
        %v4036 = vmul.f32 %v2077, %v4028
        %v4037 = vmul.f32 %v1460, %v3187
        %v4038 = vmul.f32 %v1462, %v3188
        %v4039 = vmul.f32 %v2075, %v3189
        %v4040 = vmul.f32 %v2077, %v3190
        %v4045 = vrot.slane %v4037, 1
        %v4046 = vrot.slane %v4038, 1
        %v4047 = vrot.slane %v4039, 1
        %v4048 = vrot.slane %v4040, 1
        %v4053 = vadd.f32 %v4033, %v4045
        %v4054 = vadd.f32 %v4034, %v4046
        %v4055 = vadd.f32 %v4035, %v4047
        %v4056 = vadd.f32 %v4036, %v4048
        %v4057 = vrot.slane %v3737, 7
        %v4058 = vrot.slane %v3738, 7
        %v4059 = vrot.slane %v3739, 7
        %v4060 = vrot.slane %v3740, 7
        %v4065 = vmul.f32 %v1460, %v4057
        %v4066 = vmul.f32 %v1462, %v4058
        %v4067 = vmul.f32 %v2075, %v4059
        %v4068 = vmul.f32 %v2077, %v4060
        %v4073 = vrot.slane %v4065, 2
        %v4074 = vrot.slane %v4066, 2
        %v4075 = vrot.slane %v4067, 2
        %v4076 = vrot.slane %v4068, 2
        %v4081 = vadd.f32 %v4053, %v4073
        %v4082 = vadd.f32 %v4054, %v4074
        %v4083 = vadd.f32 %v4055, %v4075
        %v4084 = vadd.f32 %v4056, %v4076
        %v4089 = vrot.slane %v1460, 3
        %v4090 = vrot.slane %v1462, 3
        %v4091 = vrot.slane %v2075, 3
        %v4092 = vrot.slane %v2077, 3
        %v4097 = vadd.f32 %v4081, %v4089
        %v4098 = vadd.f32 %v4082, %v4090
        %v4099 = vadd.f32 %v4083, %v4091
        %v4100 = vadd.f32 %v4084, %v4092
        %v4105 = vrot.slane %v4021, 4
        %v4106 = vrot.slane %v4022, 4
        %v4107 = vrot.slane %v4023, 4
        %v4108 = vrot.slane %v4024, 4
        %v4117 = vrot.slane %v4097, 7
        %v4118 = vrot.slane %v4098, 7
        %v4119 = vrot.slane %v4099, 7
        %v4120 = vrot.slane %v4100, 7
        %v4125 = vsel %vm3925, %v4105, %v4117
        %v4126 = vsel %vm3925, %v4106, %v4118
        %v4127 = vsel %vm3925, %v4107, %v4119
        %v4128 = vsel %vm3925, %v4108, %v4120
        %v4133 = vcombine.low %v4125, %v4126
        %v4134 = vcombine.low %v4127, %v4128
        %v4136 = vunpack.c.l.s4 1983009808
        %v4137 = vunpack.c.0.s8 %v4136
        %v4138 = vlaneseq
        %v4139 = vshrl.u32 %v4138, 7
        %v4140 = vsub.s32 %v4137, %v4139
        %v4141 = vrot.slane %v4133, %v4140
        %v4143 = vunpack.c.l.s4 1983009808
        %v4144 = vunpack.c.0.s8 %v4143
        %v4145 = vlaneseq
        %v4146 = vshrl.u32 %v4145, 7
        %v4147 = vsub.s32 %v4144, %v4146
        %v4148 = vrot.slane %v4134, %v4147
        %v4149 = vcombine.low %v4141, %v4148
        %s4151 = scalar_lea.vmem %s795, 8 [#allocation5]
        %4152 = vst [vmem:[%s4151] sm:$0xff] %v4149
        %v4153 = vmul.f32 %v1453, %v2637
        %v4154 = vmul.f32 %v1455, %v2638
        %v4155 = vmul.f32 %v2068, %v2639
        %v4156 = vmul.f32 %v2070, %v2640
        %v4157 = vmul.f32 %v1453, %v3749
        %v4158 = vmul.f32 %v1455, %v3750
        %v4159 = vmul.f32 %v2068, %v3751
        %v4160 = vmul.f32 %v2070, %v3752
        %v4165 = vrot.slane %v4157, 1
        %v4166 = vrot.slane %v4158, 1
        %v4167 = vrot.slane %v4159, 1
        %v4168 = vrot.slane %v4160, 1
        %v4173 = vadd.f32 %v4153, %v4165
        %v4174 = vadd.f32 %v4154, %v4166
        %v4175 = vadd.f32 %v4155, %v4167
        %v4176 = vadd.f32 %v4156, %v4168
        %v4177 = vmul.f32 %v1453, %v3781
        %v4178 = vmul.f32 %v1455, %v3782
        %v4179 = vmul.f32 %v2068, %v3783
        %v4180 = vmul.f32 %v2070, %v3784
        %v4185 = vrot.slane %v4177, 2
        %v4186 = vrot.slane %v4178, 2
        %v4187 = vrot.slane %v4179, 2
        %v4188 = vrot.slane %v4180, 2
        %v4193 = vadd.f32 %v4173, %v4185
        %v4194 = vadd.f32 %v4174, %v4186
        %v4195 = vadd.f32 %v4175, %v4187
        %v4196 = vadd.f32 %v4176, %v4188
        %v4197 = vadd.f32 %v4193, %v3901
        %v4198 = vadd.f32 %v4194, %v3902
        %v4199 = vadd.f32 %v4195, %v3903
        %v4200 = vadd.f32 %v4196, %v3904
        %v4201 = vmul.f32 %v1460, %v3829
        %v4202 = vmul.f32 %v1462, %v3830
        %v4203 = vmul.f32 %v2075, %v3831
        %v4204 = vmul.f32 %v2077, %v3832
        %v4205 = vmul.f32 %v1460, %v3841
        %v4206 = vmul.f32 %v1462, %v3842
        %v4207 = vmul.f32 %v2075, %v3843
        %v4208 = vmul.f32 %v2077, %v3844
        %v4213 = vrot.slane %v4205, 1
        %v4214 = vrot.slane %v4206, 1
        %v4215 = vrot.slane %v4207, 1
        %v4216 = vrot.slane %v4208, 1
        %v4221 = vadd.f32 %v4201, %v4213
        %v4222 = vadd.f32 %v4202, %v4214
        %v4223 = vadd.f32 %v4203, %v4215
        %v4224 = vadd.f32 %v4204, %v4216
        %v4225 = vmul.f32 %v1460, %v3869
        %v4226 = vmul.f32 %v1462, %v3870
        %v4227 = vmul.f32 %v2075, %v3871
        %v4228 = vmul.f32 %v2077, %v3872
        %v4233 = vrot.slane %v4225, 2
        %v4234 = vrot.slane %v4226, 2
        %v4235 = vrot.slane %v4227, 2
        %v4236 = vrot.slane %v4228, 2
        %v4241 = vadd.f32 %v4221, %v4233
        %v4242 = vadd.f32 %v4222, %v4234
        %v4243 = vadd.f32 %v4223, %v4235
        %v4244 = vadd.f32 %v4224, %v4236
        %v4245 = vadd.f32 %v4241, %v4089
        %v4246 = vadd.f32 %v4242, %v4090
        %v4247 = vadd.f32 %v4243, %v4091
        %v4248 = vadd.f32 %v4244, %v4092
        %v4253 = vrot.slane %v4245, 3
        %v4254 = vrot.slane %v4246, 3
        %v4255 = vrot.slane %v4247, 3
        %v4256 = vrot.slane %v4248, 3
        %v4261 = vsel %vm3925, %v4197, %v4253
        %v4262 = vsel %vm3925, %v4198, %v4254
        %v4263 = vsel %vm3925, %v4199, %v4255
        %v4264 = vsel %vm3925, %v4200, %v4256
        %v4269 = vcombine.low %v4261, %v4262
        %v4270 = vcombine.low %v4263, %v4264
        %v4272 = vunpack.c.l.s4 1983009808
        %v4273 = vunpack.c.0.s8 %v4272
        %v4274 = vlaneseq
        %v4275 = vshrl.u32 %v4274, 7
        %v4276 = vsub.s32 %v4273, %v4275
        %v4277 = vrot.slane %v4269, %v4276
        %v4279 = vunpack.c.l.s4 1983009808
        %v4280 = vunpack.c.0.s8 %v4279
        %v4281 = vlaneseq
        %v4282 = vshrl.u32 %v4281, 7
        %v4283 = vsub.s32 %v4280, %v4282
        %v4284 = vrot.slane %v4270, %v4283
        %v4285 = vcombine.low %v4277, %v4284
        %s4287 = scalar_lea.vmem %s795, 16 [#allocation5]
        %4288 = vst [vmem:[%s4287] sm:$0xff] %v4285
        %s4289 = sand.u32 %s174, 1
        %s4290 = sand.u32 %s174, 1
        %s4291 = smul.addr %s4290, 24
        %s4292 = scalar_lea.vmem [#allocation5], %s4291
        %s4293 = sand.u32 %s200, 1
        %s4294 = sand.u32 %s200, 1
        %s4295 = smul.addr %s4294, 24
        %s4296 = scalar_lea.vmem [#allocation6], %s4295
        %s4297 = sand.u32 %s226, 1
        %s4298 = sand.u32 %s226, 1
        %s4299 = smul.addr %s4298, 24
        %s4300 = scalar_lea.vmem [#allocation7], %s4299
        // Predicated region
        $region129: #{forward.1} parent=115 // pred_check
          %p4301 = pneg %p184
        $region130: #{forward.1} parent=115 // pred_check_branch
          %4303 = sbr.rel (%p4301) target = $region132
        $region131: #{forward.1} parent=115 // pred_region
          %s4304 = smul.u32 4, %s20
          %s4305 = smul.addr %s4304, 2
          %s4306 = scalar_lea.vmem %s6, %s4305
          // Predicated region
          $region133: #{forward.1} parent=131 // pred_check
            _
          $region134: #{forward.1} parent=131 // pred_check_branch
            %4308 = sbr.rel (0) target = $region136
          $region135: #{forward.1} parent=131 // pred_region
            // Predicated region
            $region137: #{forward.1} parent=135 // pred_check
              _
            $region138: #{forward.1} parent=135 // pred_check_branch
              %4310 = sbr.rel (0) target = $region140
            $region139: #{forward.1} parent=135 // pred_region
              // Predicated region
              $region152: #{forward.1} parent=139 // pred_check
                _
              $region153: #{forward.1} parent=139 // pred_check_branch
                %4329 = sbr.rel (0) target = $region155
              $region154: #{forward.1} parent=139 // pred_region
                loop: start=0, step=1, limit=1
                $region156: #{forward.1} parent=154 // loop_pre_header
                  _
                $region157: #{forward.1} parent=154 // loop_header
                  %s4331 = sphi 0, %s4335
                  %p4332 = scmp.ge.s32.totalorder %s4331, 1
                  %s4336 = sphi %s4292, %s4292
                  %s4337 = sphi %s4306, %s4306
                $region158: #{forward.1} parent=154 // loop_header_branch
                  %4334 = sbr.rel (%p4332) target = $region162
                $region159: #{forward.1} parent=154 // loop_body
                  %v4338 = vld [vmem:[%s4336] sm:$0xff]
                  %4339 = vst [vmem:[%s4337] sm:$0xff] %v4338
                  %v4340 = vld [vmem:[%s4336 + $0x8] sm:$0xff]
                  %4341 = vst [vmem:[%s4337 + $0x10] sm:$0xff] %v4340
                  %v4342 = vld [vmem:[%s4336 + $0x10] sm:$0xff]
                  %4343 = vst [vmem:[%s4337 + $0x20] sm:$0xff] %v4342
                $region160: #{forward.1} parent=154 // loop_footer
                  %s4335 = sadd.s32 1, %s4331
                $region161: #{forward.1} parent=154 // loop_footer_branch
                  %4330 = sbr.rel target = $region157
                $region162: #{forward.1} parent=154 // loop_exit
                  _
              $region155: #{forward.1} parent=139 // pred_fallthru
                _
              // Predicated region
              $region163: #{forward.1} parent=139 // pred_check
                _
              $region164: #{forward.1} parent=139 // pred_check_branch
                %4345 = sbr.rel target = $region166
              $region165: #{forward.1} parent=139 // pred_region
                _
              $region166: #{forward.1} parent=139 // pred_fallthru
                _
            $region140: #{forward.1} parent=135 // pred_fallthru
              _
            // Predicated region
            $region141: #{forward.1} parent=135 // pred_check
              _
            $region142: #{forward.1} parent=135 // pred_check_branch
              %4312 = sbr.rel target = $region144
            $region143: #{forward.1} parent=135 // pred_region
              loop: start=0, step=1, limit=1
              $region145: #{forward.1} parent=143 // loop_pre_header
                _
              $region146: #{forward.1} parent=143 // loop_header
                %s4315 = sphi 0, %s4319
                %p4316 = scmp.ge.s32.totalorder %s4315, 1
                %s4320 = sphi %s4292, %s4292
                %s4321 = sphi %s4306, %s4306
              $region147: #{forward.1} parent=143 // loop_header_branch
                %4318 = sbr.rel (%p4316) target = $region151
              $region148: #{forward.1} parent=143 // loop_body
                %v4322 = vld [vmem:[%s4320] sm:$0xff]
                %4323 = vst [vmem:[%s4321] sm:$0xff] %v4322
                %v4324 = vld [vmem:[%s4320 + $0x8] sm:$0xff]
                %4325 = vst [vmem:[%s4321 + $0x10] sm:$0xff] %v4324
                %v4326 = vld [vmem:[%s4320 + $0x10] sm:$0xff]
                %4327 = vst [vmem:[%s4321 + $0x20] sm:$0xff] %v4326
              $region149: #{forward.1} parent=143 // loop_footer
                %s4319 = sadd.s32 1, %s4315
              $region150: #{forward.1} parent=143 // loop_footer_branch
                %4314 = sbr.rel target = $region146
              $region151: #{forward.1} parent=143 // loop_exit
                _
            $region144: #{forward.1} parent=135 // pred_fallthru
              _
          $region136: #{forward.1} parent=131 // pred_fallthru
            _
          %4346 = vnop
        $region132: #{forward.1} parent=115 // pred_fallthru
          _
        // Predicated region
        $region167: #{forward.1} parent=115 // pred_check
          %p4347 = pneg %p210
        $region168: #{forward.1} parent=115 // pred_check_branch
          %4349 = sbr.rel (%p4347) target = $region170
        $region169: #{forward.1} parent=115 // pred_region
          %s4350 = smul.u32 4, %s20
          %s4351 = smul.addr %s4350, 2
          %s4352 = scalar_lea.vmem %s7, %s4351
          // Predicated region
          $region171: #{forward.1} parent=169 // pred_check
            _
          $region172: #{forward.1} parent=169 // pred_check_branch
            %4354 = sbr.rel (0) target = $region174
          $region173: #{forward.1} parent=169 // pred_region
            // Predicated region
            $region175: #{forward.1} parent=173 // pred_check
              _
            $region176: #{forward.1} parent=173 // pred_check_branch
              %4356 = sbr.rel (0) target = $region178
            $region177: #{forward.1} parent=173 // pred_region
              // Predicated region
              $region190: #{forward.1} parent=177 // pred_check
                _
              $region191: #{forward.1} parent=177 // pred_check_branch
                %4375 = sbr.rel (0) target = $region193
              $region192: #{forward.1} parent=177 // pred_region
                loop: start=0, step=1, limit=1
                $region194: #{forward.1} parent=192 // loop_pre_header
                  _
                $region195: #{forward.1} parent=192 // loop_header
                  %s4377 = sphi 0, %s4381
                  %p4378 = scmp.ge.s32.totalorder %s4377, 1
                  %s4382 = sphi %s4296, %s4296
                  %s4383 = sphi %s4352, %s4352
                $region196: #{forward.1} parent=192 // loop_header_branch
                  %4380 = sbr.rel (%p4378) target = $region200
                $region197: #{forward.1} parent=192 // loop_body
                  %v4384 = vld [vmem:[%s4382] sm:$0xff]
                  %4385 = vst [vmem:[%s4383] sm:$0xff] %v4384
                  %v4386 = vld [vmem:[%s4382 + $0x8] sm:$0xff]
                  %4387 = vst [vmem:[%s4383 + $0x10] sm:$0xff] %v4386
                  %v4388 = vld [vmem:[%s4382 + $0x10] sm:$0xff]
                  %4389 = vst [vmem:[%s4383 + $0x20] sm:$0xff] %v4388
                $region198: #{forward.1} parent=192 // loop_footer
                  %s4381 = sadd.s32 1, %s4377
                $region199: #{forward.1} parent=192 // loop_footer_branch
                  %4376 = sbr.rel target = $region195
                $region200: #{forward.1} parent=192 // loop_exit
                  _
              $region193: #{forward.1} parent=177 // pred_fallthru
                _
              // Predicated region
              $region201: #{forward.1} parent=177 // pred_check
                _
              $region202: #{forward.1} parent=177 // pred_check_branch
                %4391 = sbr.rel target = $region204
              $region203: #{forward.1} parent=177 // pred_region
                _
              $region204: #{forward.1} parent=177 // pred_fallthru
                _
            $region178: #{forward.1} parent=173 // pred_fallthru
              _
            // Predicated region
            $region179: #{forward.1} parent=173 // pred_check
              _
            $region180: #{forward.1} parent=173 // pred_check_branch
              %4358 = sbr.rel target = $region182
            $region181: #{forward.1} parent=173 // pred_region
              loop: start=0, step=1, limit=1
              $region183: #{forward.1} parent=181 // loop_pre_header
                _
              $region184: #{forward.1} parent=181 // loop_header
                %s4361 = sphi 0, %s4365
                %p4362 = scmp.ge.s32.totalorder %s4361, 1
                %s4366 = sphi %s4296, %s4296
                %s4367 = sphi %s4352, %s4352
              $region185: #{forward.1} parent=181 // loop_header_branch
                %4364 = sbr.rel (%p4362) target = $region189
              $region186: #{forward.1} parent=181 // loop_body
                %v4368 = vld [vmem:[%s4366] sm:$0xff]
                %4369 = vst [vmem:[%s4367] sm:$0xff] %v4368
                %v4370 = vld [vmem:[%s4366 + $0x8] sm:$0xff]
                %4371 = vst [vmem:[%s4367 + $0x10] sm:$0xff] %v4370
                %v4372 = vld [vmem:[%s4366 + $0x10] sm:$0xff]
                %4373 = vst [vmem:[%s4367 + $0x20] sm:$0xff] %v4372
              $region187: #{forward.1} parent=181 // loop_footer
                %s4365 = sadd.s32 1, %s4361
              $region188: #{forward.1} parent=181 // loop_footer_branch
                %4360 = sbr.rel target = $region184
              $region189: #{forward.1} parent=181 // loop_exit
                _
            $region182: #{forward.1} parent=173 // pred_fallthru
              _
          $region174: #{forward.1} parent=169 // pred_fallthru
            _
          %4392 = vnop
        $region170: #{forward.1} parent=115 // pred_fallthru
          _
        // Predicated region
        $region205: #{forward.1} parent=115 // pred_check
          %p4393 = pneg %p236
        $region206: #{forward.1} parent=115 // pred_check_branch
          %4395 = sbr.rel (%p4393) target = $region208
        $region207: #{forward.1} parent=115 // pred_region
          %s4396 = smul.u32 4, %s20
          %s4397 = smul.addr %s4396, 2
          %s4398 = scalar_lea.vmem %s8, %s4397
          // Predicated region
          $region209: #{forward.1} parent=207 // pred_check
            _
          $region210: #{forward.1} parent=207 // pred_check_branch
            %4400 = sbr.rel (0) target = $region212
          $region211: #{forward.1} parent=207 // pred_region
            // Predicated region
            $region213: #{forward.1} parent=211 // pred_check
              _
            $region214: #{forward.1} parent=211 // pred_check_branch
              %4402 = sbr.rel (0) target = $region216
            $region215: #{forward.1} parent=211 // pred_region
              // Predicated region
              $region228: #{forward.1} parent=215 // pred_check
                _
              $region229: #{forward.1} parent=215 // pred_check_branch
                %4421 = sbr.rel (0) target = $region231
              $region230: #{forward.1} parent=215 // pred_region
                loop: start=0, step=1, limit=1
                $region232: #{forward.1} parent=230 // loop_pre_header
                  _
                $region233: #{forward.1} parent=230 // loop_header
                  %s4423 = sphi 0, %s4427
                  %p4424 = scmp.ge.s32.totalorder %s4423, 1
                  %s4428 = sphi %s4300, %s4300
                  %s4429 = sphi %s4398, %s4398
                $region234: #{forward.1} parent=230 // loop_header_branch
                  %4426 = sbr.rel (%p4424) target = $region238
                $region235: #{forward.1} parent=230 // loop_body
                  %v4430 = vld [vmem:[%s4428] sm:$0xff]
                  %4431 = vst [vmem:[%s4429] sm:$0xff] %v4430
                  %v4432 = vld [vmem:[%s4428 + $0x8] sm:$0xff]
                  %4433 = vst [vmem:[%s4429 + $0x10] sm:$0xff] %v4432
                  %v4434 = vld [vmem:[%s4428 + $0x10] sm:$0xff]
                  %4435 = vst [vmem:[%s4429 + $0x20] sm:$0xff] %v4434
                $region236: #{forward.1} parent=230 // loop_footer
                  %s4427 = sadd.s32 1, %s4423
                $region237: #{forward.1} parent=230 // loop_footer_branch
                  %4422 = sbr.rel target = $region233
                $region238: #{forward.1} parent=230 // loop_exit
                  _
              $region231: #{forward.1} parent=215 // pred_fallthru
                _
              // Predicated region
              $region239: #{forward.1} parent=215 // pred_check
                _
              $region240: #{forward.1} parent=215 // pred_check_branch
                %4437 = sbr.rel target = $region242
              $region241: #{forward.1} parent=215 // pred_region
                _
              $region242: #{forward.1} parent=215 // pred_fallthru
                _
            $region216: #{forward.1} parent=211 // pred_fallthru
              _
            // Predicated region
            $region217: #{forward.1} parent=211 // pred_check
              _
            $region218: #{forward.1} parent=211 // pred_check_branch
              %4404 = sbr.rel target = $region220
            $region219: #{forward.1} parent=211 // pred_region
              loop: start=0, step=1, limit=1
              $region221: #{forward.1} parent=219 // loop_pre_header
                _
              $region222: #{forward.1} parent=219 // loop_header
                %s4407 = sphi 0, %s4411
                %p4408 = scmp.ge.s32.totalorder %s4407, 1
                %s4412 = sphi %s4300, %s4300
                %s4413 = sphi %s4398, %s4398
              $region223: #{forward.1} parent=219 // loop_header_branch
                %4410 = sbr.rel (%p4408) target = $region227
              $region224: #{forward.1} parent=219 // loop_body
                %v4414 = vld [vmem:[%s4412] sm:$0xff]
                %4415 = vst [vmem:[%s4413] sm:$0xff] %v4414
                %v4416 = vld [vmem:[%s4412 + $0x8] sm:$0xff]
                %4417 = vst [vmem:[%s4413 + $0x10] sm:$0xff] %v4416
                %v4418 = vld [vmem:[%s4412 + $0x10] sm:$0xff]
                %4419 = vst [vmem:[%s4413 + $0x20] sm:$0xff] %v4418
              $region225: #{forward.1} parent=219 // loop_footer
                %s4411 = sadd.s32 1, %s4407
              $region226: #{forward.1} parent=219 // loop_footer_branch
                %4406 = sbr.rel target = $region222
              $region227: #{forward.1} parent=219 // loop_exit
                _
            $region220: #{forward.1} parent=211 // pred_fallthru
              _
          $region212: #{forward.1} parent=207 // pred_fallthru
            _
          %4438 = vnop
        $region208: #{forward.1} parent=115 // pred_fallthru
          _
      $region116: #{forward.1} parent=5 // pred_fallthru
        _
      %p4439 = scmp.le.s32.totalorder 2, %s15
      // Predicated region
      $region243: #{forward.1} parent=5 // pred_check
        %p4440 = pneg %p4439
      $region244: #{forward.1} parent=5 // pred_check_branch
        %4442 = sbr.rel (%p4440) target = $region246
      $region245: #{forward.1} parent=5 // pred_region
        %s4443 = ssub.s32 %s15, 2
        // Predicated region
        $region247: #{forward.1} parent=245 // pred_check
          %p4444 = pneg %p190
        $region248: #{forward.1} parent=245 // pred_check_branch
          %4446 = sbr.rel (%p4444) target = $region250
        $region249: #{forward.1} parent=245 // pred_region
          %s4447 = sand.u32 %s175, 1
          %s4448 = sand.u32 %s175, 1
          %s4449 = smul.addr %s4448, 24
          %s4450 = scalar_lea.vmem [#allocation5], %s4449
        $region250: #{forward.1} parent=245 // pred_fallthru
          _
        // Predicated region
        $region251: #{forward.1} parent=245 // pred_check
          %p4451 = pneg %p216
        $region252: #{forward.1} parent=245 // pred_check_branch
          %4453 = sbr.rel (%p4451) target = $region254
        $region253: #{forward.1} parent=245 // pred_region
          %s4454 = sand.u32 %s201, 1
          %s4455 = sand.u32 %s201, 1
          %s4456 = smul.addr %s4455, 24
          %s4457 = scalar_lea.vmem [#allocation6], %s4456
        $region254: #{forward.1} parent=245 // pred_fallthru
          _
        // Predicated region
        $region255: #{forward.1} parent=245 // pred_check
          %p4458 = pneg %p242
        $region256: #{forward.1} parent=245 // pred_check_branch
          %4460 = sbr.rel (%p4458) target = $region258
        $region257: #{forward.1} parent=245 // pred_region
          %s4461 = sand.u32 %s227, 1
          %s4462 = sand.u32 %s227, 1
          %s4463 = smul.addr %s4462, 24
          %s4464 = scalar_lea.vmem [#allocation7], %s4463
        $region258: #{forward.1} parent=245 // pred_fallthru
          _
      $region246: #{forward.1} parent=5 // pred_fallthru
        _
    $region6: #{forward.1} parent=1 // loop_footer
      %s19 = sadd.s32 1, %s15
    $region7: #{forward.1} parent=1 // loop_footer_branch
      %14 = sbr.rel target = $region3
    $region8: #{forward.1} parent=1 // loop_exit
      _

</llo_original>
